<compile_context>
chip_gen: v7x
topology: tpu7x:2x2x1
jax: 0.10.0
libtpu: 0.0.40
codegen_flags: <defaults>
</compile_context>

<pallas_src>
import jax
import jax.numpy as jnp
from jax.experimental import pallas as pl
from jax.experimental.pallas import tpu as pltpu


def _make_kernel(*, seq, dim, n_heads, n_kv_heads, head_dim, eps):
    repeats = n_heads // n_kv_heads
    hd = head_dim
    hd2 = head_dim // 2

    def kernel(x_ref, cos_ref, sin_ref, attn_nw_ref, ffn_nw_ref,
               wq_ref, wk_ref, wv_ref, wo_ref, w1_ref, w2_ref, w3_ref,
               out_ref, attn_acc):
        x = x_ref[...].astype(jnp.float32)                       # (S, D)

        def rmsnorm(v, w):                                       # f32 math
            ms = jnp.mean(v * v, axis=-1, keepdims=True)
            return v * jax.lax.rsqrt(ms + eps) * w

        def mm(a_bf16, w_ref):                                   # a @ W, W=(in,out) bf16
            return jnp.dot(a_bf16, w_ref[...],
                           preferred_element_type=jnp.float32)

        # Causal mask built in-kernel (iota + compare; no HBM traffic), stacked
        # over the GQA-group rows so one add covers all `repeats` query heads.
        row = jax.lax.broadcasted_iota(jnp.int32, (seq, seq), 0)
        col = jax.lax.broadcasted_iota(jnp.int32, (seq, seq), 1)
        causal = jnp.where(row >= col, 0.0, -1e30).astype(jnp.float32)
        causal_grp = jnp.concatenate([causal] * repeats, axis=0)  # (r*S, S)

        cosf = cos_ref[...]                                       # (S, hd/2) f32
        sinf = sin_ref[...]

        def rope(t):  # t: (S, hd) in per-head half layout [re | im]
            re, im = t[:, :hd2], t[:, hd2:]
            return jnp.concatenate(
                [re * cosf - im * sinf, im * cosf + re * sinf], axis=-1)

        # ---- attention branch ----
        xn_b = rmsnorm(x, attn_nw_ref[...]).astype(jnp.bfloat16)  # cast once, reuse
        xq = mm(xn_b, wq_ref)   # (S, NH*HD)  f32; RoPE half layout; scale folded in
        xk = mm(xn_b, wk_ref)   # (S, NKV*HD) f32; RoPE half layout
        xv = mm(xn_b, wv_ref)   # (S, NKV*HD) f32; original layout

        # TODO(synk): at production n_heads this becomes a lax.fori_loop over kv
        # heads with pl.ds()-sliced VMEM-resident projections; n_kv_heads is tiny
        # here so a static loop is fine.
        for kv in range(n_kv_heads):
            k_h = rope(xk[:, kv * hd:(kv + 1) * hd]).astype(jnp.bfloat16)
            v_h = xv[:, kv * hd:(kv + 1) * hd].astype(jnp.bfloat16)
            # Batch all `repeats` query heads of this GQA group into one MXU call.
            q_grp = jnp.concatenate(
                [rope(xq[:, (kv * repeats + r) * hd:(kv * repeats + r + 1) * hd])
                 for r in range(repeats)], axis=0).astype(jnp.bfloat16)
            s = jax.lax.dot_general(
                q_grp, k_h, (((1,), (1,)), ((), ())),
                preferred_element_type=jnp.float32) + causal_grp   # (r*S, S)
            s = s - jnp.max(s, axis=-1, keepdims=True)
            p = jnp.exp(s)
            # approx reciprocal (EUP slot): rows sum to 1 only to ~1e-3 rel; fine
            # for this forward-pass tolerance, not for logit-sensitive training.
            p = p * pl.reciprocal(jnp.sum(p, axis=-1, keepdims=True), approx=True)
            o = jnp.dot(p.astype(jnp.bfloat16), v_h,
                        preferred_element_type=jnp.float32)        # (r*S, hd)
            for r in range(repeats):
                h = kv * repeats + r
                attn_acc[:, h * hd:(h + 1) * hd] = (
                    o[r * seq:(r + 1) * seq, :].astype(jnp.bfloat16))

        h1 = x + mm(attn_acc[...], wo_ref)                         # residual 1, f32

        # ---- feed-forward branch (SwiGLU) ----
        hn_b = rmsnorm(h1, ffn_nw_ref[...]).astype(jnp.bfloat16)   # cast once, reuse
        a = mm(hn_b, w1_ref)
        g = a * jax.nn.sigmoid(a)                                  # SiLU in f32 (EUP)
        u = mm(hn_b, w3_ref)
        out_ref[...] = (h1 + mm((g * u).astype(jnp.bfloat16), w2_ref)
                        ).astype(out_ref.dtype)                    # residual 2

    return kernel


def transformer_block_pallas(x, cos, sin, params, *,
                             n_heads, n_kv_heads, head_dim, eps):
    B, S, D = x.shape
    hd = head_dim
    scale = head_dim ** -0.5

    # One-time row permutation of wq/wk into per-head [even...|odd...] halves so
    # in-kernel RoPE needs no pair-swapped duplicate projections. Q and K are
    # permuted consistently -> scores unchanged -> wv/wo keep their layout.
    def half_perm(nh):
        idx = jnp.arange(nh * hd).reshape(nh, hd // 2, 2)
        return jnp.concatenate([idx[..., 0], idx[..., 1]], axis=-1).reshape(-1)

    # (in, out)-layout bf16 weights; wq also carries the 1/sqrt(head_dim) scale.
    wq = (params["wq"][half_perm(n_heads)] * scale).T.astype(jnp.bfloat16)
    wk = params["wk"][half_perm(n_kv_heads)].T.astype(jnp.bfloat16)
    wv = params["wv"].T.astype(jnp.bfloat16)
    wo = params["wo"].T.astype(jnp.bfloat16)
    w1 = params["w1"].T.astype(jnp.bfloat16)
    w2 = params["w2"].T.astype(jnp.bfloat16)
    w3 = params["w3"].T.astype(jnp.bfloat16)

    attn_nw = params["attn_norm"][None, :].astype(jnp.float32)
    ffn_nw = params["ffn_norm"][None, :].astype(jnp.float32)
    cos = cos.astype(jnp.float32)   # (S, head_dim//2)
    sin = sin.astype(jnp.float32)

    kernel = _make_kernel(seq=S, dim=D, n_heads=n_heads,
                          n_kv_heads=n_kv_heads, head_dim=head_dim, eps=eps)

    # Per-generation VMEM cap: 3/4 of physical per-core VMEM (~48 MiB on v7x,
    # ~96 MiB on v5e/v6e) so the compiler keeps scratch / pipelining headroom.
    try:
        vmem_limit = int(pltpu.get_tpu_info().vmem_capacity_bytes) * 3 // 4
    except Exception:
        vmem_limit = 48 * 1024 * 1024

    def const_spec(a, single_buffer):
        nd = a.ndim
        idx = lambda b, _nd=nd: (0,) * _nd
        if single_buffer:
            try:
                # Grid-invariant block: single-buffer it (no overlap to gain).
                return pl.BlockSpec(a.shape, idx, pipeline_mode=pl.Buffered(1))
            except TypeError:
                pass
        return pl.BlockSpec(a.shape, idx)

    operands = (x, cos, sin, attn_nw, ffn_nw, wq, wk, wv, wo, w1, w2, w3)

    def run(single_buffer):
        in_specs = [pl.BlockSpec((None, S, D), lambda b: (b, 0, 0))] + [
            const_spec(a, single_buffer) for a in operands[1:]]
        out_specs = pl.BlockSpec((None, S, D), lambda b: (b, 0, 0))
        return pl.pallas_call(
            kernel,
            out_shape=jax.ShapeDtypeStruct((B, S, D), x.dtype),
            grid_spec=pltpu.PrefetchScalarGridSpec(
                num_scalar_prefetch=0,
                grid=(B,),
                in_specs=in_specs,
                out_specs=out_specs,
                scratch_shapes=[
                    pltpu.VMEM((S, n_heads * head_dim), jnp.bfloat16)],
            ),
            compiler_params=pltpu.CompilerParams(
                dimension_semantics=("parallel",),
                vmem_limit_bytes=vmem_limit,
            ),
        )(*operands)

    try:
        return run(True)
    except Exception:
        # Fallback if this JAX version rejects pl.Buffered(1) pipeline_mode:
        # default double-buffered resident operands (still correct).
        return run(False)


def transformer_block_ref(x, cos, sin, mask, params, *,
                          n_heads, n_kv_heads, head_dim, eps):
    """Pure-JAX f32 reference mirroring the PyTorch module (prefill path)."""
    B, S, D = x.shape
    repeats = n_heads // n_kv_heads

    def rmsnorm(v, w):
        ms = jnp.mean(v * v, axis=-1, keepdims=True)
        return v * jax.lax.rsqrt(ms + eps) * w

    xn = rmsnorm(x, params["attn_norm"])
    xq = (xn @ params["wq"].T).reshape(B, S, n_heads, head_dim)
    xk = (xn @ params["wk"].T).reshape(B, S, n_kv_heads, head_dim)
    xv = (xn @ params["wv"].T).reshape(B, S, n_kv_heads, head_dim)

    def rot(t):
        tr = t.reshape(*t.shape[:-1], head_dim // 2, 2)
        re, im = tr[..., 0], tr[..., 1]
        c = cos[None, :, None, :]
        s = sin[None, :, None, :]
        return jnp.stack([re * c - im * s, re * s + im * c], axis=-1).reshape(t.shape)

    q, k = rot(xq), rot(xk)
    k = jnp.repeat(k, repeats, axis=2)
    v = jnp.repeat(xv, repeats, axis=2)
    q, k, v = (t.transpose(0, 2, 1, 3) for t in (q, k, v))
    scores = jnp.einsum("bhqd,bhkd->bhqk", q, k) * (head_dim ** -0.5)
    scores = scores + mask[None, None]
    p = jax.nn.softmax(scores, axis=-1)
    o = jnp.einsum("bhqk,bhkd->bhqd", p, v)
    o = o.transpose(0, 2, 1, 3).reshape(B, S, n_heads * head_dim)
    h1 = x + o @ params["wo"].T
    hn = rmsnorm(h1, params["ffn_norm"])
    a = hn @ params["w1"].T
    return h1 + ((a * jax.nn.sigmoid(a)) * (hn @ params["w3"].T)) @ params["w2"].T


if __name__ == "__main__":
    B, S = 2, 8
    dim, head_dim, n_heads, n_kv_heads, hidden = 32, 8, 4, 2, 64
    eps = 1e-5

    key = jax.random.PRNGKey(0)
    keys = jax.random.split(key, 9)
    x = jax.random.normal(keys[0], (B, S, dim), jnp.float32)

    def init(k, shp):
        return (jax.random.normal(k, shp, jnp.float32) * 0.05).astype(jnp.float32)

    params = dict(
        wq=init(keys[1], (n_heads * head_dim, dim)),
        wk=init(keys[2], (n_kv_heads * head_dim, dim)),
        wv=init(keys[3], (n_kv_heads * head_dim, dim)),
        wo=init(keys[4], (dim, n_heads * head_dim)),
        w1=init(keys[5], (hidden, dim)),
        w2=init(keys[6], (dim, hidden)),
        w3=init(keys[7], (hidden, dim)),
        attn_norm=jnp.ones((dim,), jnp.float32),
        ffn_norm=jnp.ones((dim,), jnp.float32),
    )

    positions = jnp.arange(S, dtype=jnp.int32)  # prefill: positions.shape[0] > 1
    theta = 1.0 / (10000.0 ** (jnp.arange(0, head_dim, 2, dtype=jnp.float32) / head_dim))
    angles = positions[:, None].astype(jnp.float32) * theta[None, :]
    cos, sin = jnp.cos(angles), jnp.sin(angles)   # (S, head_dim//2) = re/im of freqs_cis

    out = transformer_block_pallas(x, cos, sin, params,
                                   n_heads=n_heads, n_kv_heads=n_kv_heads,
                                   head_dim=head_dim, eps=eps)
    out = jax.block_until_ready(out)

    idx = jnp.arange(S)
    mask = jnp.where(idx[None, :] <= idx[:, None], 0.0, -1e9).astype(jnp.float32)
    ref = transformer_block_ref(x, cos, sin, mask, params,
                                n_heads=n_heads, n_kv_heads=n_kv_heads,
                                head_dim=head_dim, eps=eps)

    assert out.shape == (B, S, dim) and out.dtype == jnp.float32
    err = float(jnp.max(jnp.abs(out - ref)))
    # bf16 matmuls + approx-reciprocal softmax vs full-f32 reference.
    assert err < 2.5e-2, f"max abs error {err}"
    print("KERNEL_OK")
</pallas_src>

<mosaic_0001>
module attributes {stable_mosaic.version = 11 : i64} {
  func.func @kernel(%arg0: i32, %arg1: memref<1x8x32xf32, #tpu.memory_space<vmem>>, %arg2: memref<8x4xf32, #tpu.memory_space<vmem>>, %arg3: memref<8x4xf32, #tpu.memory_space<vmem>>, %arg4: memref<1x32xf32, #tpu.memory_space<vmem>>, %arg5: memref<1x32xf32, #tpu.memory_space<vmem>>, %arg6: memref<32x32xbf16, #tpu.memory_space<vmem>>, %arg7: memref<32x16xbf16, #tpu.memory_space<vmem>>, %arg8: memref<32x16xbf16, #tpu.memory_space<vmem>>, %arg9: memref<32x32xbf16, #tpu.memory_space<vmem>>, %arg10: memref<32x64xbf16, #tpu.memory_space<vmem>>, %arg11: memref<64x32xbf16, #tpu.memory_space<vmem>>, %arg12: memref<32x64xbf16, #tpu.memory_space<vmem>>, %arg13: memref<1x8x32xf32, #tpu.memory_space<vmem>>, %arg14: memref<8x32xbf16, #tpu.memory_space<vmem>>) attributes {dimension_semantics = [#tpu.dimension_semantics<parallel>], iteration_bounds = array<i64: 2>, scalar_prefetch = 0 : i64, scratch_operands = 1 : i64, tpu.core_type = #tpu.core_type<tc>, window_params = [{transform_indices = @transform_0, window_bounds = array<i64: 1, 8, 32>}, {pipeline_mode = #tpu.pipeline_mode<synchronous>, transform_indices = @transform_1, window_bounds = array<i64: 8, 4>}, {pipeline_mode = #tpu.pipeline_mode<synchronous>, transform_indices = @transform_2, window_bounds = array<i64: 8, 4>}, {pipeline_mode = #tpu.pipeline_mode<synchronous>, transform_indices = @transform_3, window_bounds = array<i64: 1, 32>}, {pipeline_mode = #tpu.pipeline_mode<synchronous>, transform_indices = @transform_4, window_bounds = array<i64: 1, 32>}, {pipeline_mode = #tpu.pipeline_mode<synchronous>, transform_indices = @transform_5, window_bounds = array<i64: 32, 32>}, {pipeline_mode = #tpu.pipeline_mode<synchronous>, transform_indices = @transform_6, window_bounds = array<i64: 32, 16>}, {pipeline_mode = #tpu.pipeline_mode<synchronous>, transform_indices = @transform_7, window_bounds = array<i64: 32, 16>}, {pipeline_mode = #tpu.pipeline_mode<synchronous>, transform_indices = @transform_8, window_bounds = array<i64: 32, 32>}, {pipeline_mode = #tpu.pipeline_mode<synchronous>, transform_indices = @transform_9, window_bounds = array<i64: 32, 64>}, {pipeline_mode = #tpu.pipeline_mode<synchronous>, transform_indices = @transform_10, window_bounds = array<i64: 64, 32>}, {pipeline_mode = #tpu.pipeline_mode<synchronous>, transform_indices = @transform_11, window_bounds = array<i64: 32, 64>}, {transform_indices = @transform_12, window_bounds = array<i64: 1, 8, 32>}]} {
    %c0 = arith.constant 0 : index
    %c0_0 = arith.constant 0 : index
    %c0_1 = arith.constant 0 : index
    %0 = vector.load %arg1[%c0, %c0_0, %c0_1] : memref<1x8x32xf32, #tpu.memory_space<vmem>>, vector<1x8x32xf32>
    %1 = vector.shape_cast %0 : vector<1x8x32xf32> to vector<8x32xf32>
    %2 = tpu.iota {dimensions = array<i32: 0>} : vector<8x8xi32>
    %3 = tpu.iota {dimensions = array<i32: 1>} : vector<8x8xi32>
    %4 = arith.cmpi sge, %2, %3 : vector<8x8xi32>
    %cst = arith.constant 0.000000e+00 : f32
    %cst_2 = arith.constant -1.000000e+30 : f32
    %5 = vector.broadcast %cst : f32 to vector<8x8xf32>
    %6 = vector.broadcast %cst_2 : f32 to vector<8x8xf32>
    %7 = arith.select %4, %5, %6 : vector<8x8xi1>, vector<8x8xf32>
    %8 = tpu.concatenate %7, %7 in 0 : vector<8x8xf32>, vector<8x8xf32> -> vector<16x8xf32>
    %c0_3 = arith.constant 0 : index
    %c0_4 = arith.constant 0 : index
    %9 = vector.load %arg2[%c0_3, %c0_4] : memref<8x4xf32, #tpu.memory_space<vmem>>, vector<8x4xf32>
    %c0_5 = arith.constant 0 : index
    %c0_6 = arith.constant 0 : index
    %10 = vector.load %arg3[%c0_5, %c0_6] : memref<8x4xf32, #tpu.memory_space<vmem>>, vector<8x4xf32>
    %c0_7 = arith.constant 0 : index
    %c0_8 = arith.constant 0 : index
    %11 = vector.load %arg4[%c0_7, %c0_8] : memref<1x32xf32, #tpu.memory_space<vmem>>, vector<1x32xf32>
    %12 = arith.mulf %1, %1 : vector<8x32xf32>
    %cst_9 = arith.constant dense<0.000000e+00> : vector<8xf32>
    %13 = vector.multi_reduction <add>, %12, %cst_9 [1] : vector<8x32xf32> to vector<8xf32>
    %14 = vector.shape_cast %13 : vector<8xf32> to vector<8x1xf32>
    %cst_10 = arith.constant 3.200000e+01 : f32
    %15 = vector.broadcast %cst_10 : f32 to vector<8x1xf32>
    %16 = arith.divf %14, %15 : vector<8x1xf32>
    %cst_11 = arith.constant 9.99999974E-6 : f32
    %17 = vector.broadcast %cst_11 : f32 to vector<8x1xf32>
    %18 = arith.addf %16, %17 : vector<8x1xf32>
    %19 = math.rsqrt %18 : vector<8x1xf32>
    %20 = vector.broadcast %19 : vector<8x1xf32> to vector<8x32xf32>
    %21 = arith.mulf %1, %20 : vector<8x32xf32>
    %22 = vector.broadcast %11 : vector<1x32xf32> to vector<8x32xf32>
    %23 = arith.mulf %21, %22 : vector<8x32xf32>
    %24 = arith.truncf %23 : vector<8x32xf32> to vector<8x32xbf16>
    %c0_12 = arith.constant 0 : index
    %c0_13 = arith.constant 0 : index
    %25 = vector.load %arg6[%c0_12, %c0_13] : memref<32x32xbf16, #tpu.memory_space<vmem>>, vector<32x32xbf16>
    %cst_14 = arith.constant dense<0.000000e+00> : vector<8x32xf32>
    %26 = tpu.matmul %24, %25, %cst_14 {dimension_numbers = #tpu.dot_dimension_numbers<[1], [0], [0], [1], [0, 0, 1, 1], [], []>} : vector<8x32xbf16>, vector<32x32xbf16>, vector<8x32xf32> -> vector<8x32xf32>
    %c0_15 = arith.constant 0 : index
    %c0_16 = arith.constant 0 : index
    %27 = vector.load %arg7[%c0_15, %c0_16] : memref<32x16xbf16, #tpu.memory_space<vmem>>, vector<32x16xbf16>
    %cst_17 = arith.constant dense<0.000000e+00> : vector<8x16xf32>
    %28 = tpu.matmul %24, %27, %cst_17 {dimension_numbers = #tpu.dot_dimension_numbers<[1], [0], [0], [1], [0, 0, 1, 1], [], []>} : vector<8x32xbf16>, vector<32x16xbf16>, vector<8x16xf32> -> vector<8x16xf32>
    %c0_18 = arith.constant 0 : index
    %c0_19 = arith.constant 0 : index
    %29 = vector.load %arg8[%c0_18, %c0_19] : memref<32x16xbf16, #tpu.memory_space<vmem>>, vector<32x16xbf16>
    %cst_20 = arith.constant dense<0.000000e+00> : vector<8x16xf32>
    %30 = tpu.matmul %24, %29, %cst_20 {dimension_numbers = #tpu.dot_dimension_numbers<[1], [0], [0], [1], [0, 0, 1, 1], [], []>} : vector<8x32xbf16>, vector<32x16xbf16>, vector<8x16xf32> -> vector<8x16xf32>
    %31 = vector.extract_strided_slice %28 {offsets = [0, 0], sizes = [8, 8], strides = [1, 1]} : vector<8x16xf32> to vector<8x8xf32>
    %32 = vector.extract_strided_slice %31 {offsets = [0, 0], sizes = [8, 4], strides = [1, 1]} : vector<8x8xf32> to vector<8x4xf32>
    %33 = vector.extract_strided_slice %31 {offsets = [0, 4], sizes = [8, 4], strides = [1, 1]} : vector<8x8xf32> to vector<8x4xf32>
    %34 = arith.mulf %32, %9 : vector<8x4xf32>
    %35 = arith.mulf %33, %10 : vector<8x4xf32>
    %36 = arith.subf %34, %35 : vector<8x4xf32>
    %37 = arith.mulf %33, %9 : vector<8x4xf32>
    %38 = arith.mulf %32, %10 : vector<8x4xf32>
    %39 = arith.addf %37, %38 : vector<8x4xf32>
    %40 = tpu.concatenate %36, %39 in 1 : vector<8x4xf32>, vector<8x4xf32> -> vector<8x8xf32>
    %41 = arith.truncf %40 : vector<8x8xf32> to vector<8x8xbf16>
    %42 = vector.extract_strided_slice %30 {offsets = [0, 0], sizes = [8, 8], strides = [1, 1]} : vector<8x16xf32> to vector<8x8xf32>
    %43 = arith.truncf %42 : vector<8x8xf32> to vector<8x8xbf16>
    %44 = vector.extract_strided_slice %26 {offsets = [0, 0], sizes = [8, 8], strides = [1, 1]} : vector<8x32xf32> to vector<8x8xf32>
    %45 = vector.extract_strided_slice %44 {offsets = [0, 0], sizes = [8, 4], strides = [1, 1]} : vector<8x8xf32> to vector<8x4xf32>
    %46 = vector.extract_strided_slice %44 {offsets = [0, 4], sizes = [8, 4], strides = [1, 1]} : vector<8x8xf32> to vector<8x4xf32>
    %47 = arith.mulf %45, %9 : vector<8x4xf32>
    %48 = arith.mulf %46, %10 : vector<8x4xf32>
    %49 = arith.subf %47, %48 : vector<8x4xf32>
    %50 = arith.mulf %46, %9 : vector<8x4xf32>
    %51 = arith.mulf %45, %10 : vector<8x4xf32>
    %52 = arith.addf %50, %51 : vector<8x4xf32>
    %53 = tpu.concatenate %49, %52 in 1 : vector<8x4xf32>, vector<8x4xf32> -> vector<8x8xf32>
    %54 = vector.extract_strided_slice %26 {offsets = [0, 8], sizes = [8, 8], strides = [1, 1]} : vector<8x32xf32> to vector<8x8xf32>
    %55 = vector.extract_strided_slice %54 {offsets = [0, 0], sizes = [8, 4], strides = [1, 1]} : vector<8x8xf32> to vector<8x4xf32>
    %56 = vector.extract_strided_slice %54 {offsets = [0, 4], sizes = [8, 4], strides = [1, 1]} : vector<8x8xf32> to vector<8x4xf32>
    %57 = arith.mulf %55, %9 : vector<8x4xf32>
    %58 = arith.mulf %56, %10 : vector<8x4xf32>
    %59 = arith.subf %57, %58 : vector<8x4xf32>
    %60 = arith.mulf %56, %9 : vector<8x4xf32>
    %61 = arith.mulf %55, %10 : vector<8x4xf32>
    %62 = arith.addf %60, %61 : vector<8x4xf32>
    %63 = tpu.concatenate %59, %62 in 1 : vector<8x4xf32>, vector<8x4xf32> -> vector<8x8xf32>
    %64 = tpu.concatenate %53, %63 in 0 : vector<8x8xf32>, vector<8x8xf32> -> vector<16x8xf32>
    %65 = arith.truncf %64 : vector<16x8xf32> to vector<16x8xbf16>
    %cst_21 = arith.constant dense<0.000000e+00> : vector<16x8xf32>
    %66 = tpu.matmul %65, %41, %cst_21 {dimension_numbers = #tpu.dot_dimension_numbers<[1], [1], [0], [0], [0, 0, 1, 0], [], []>} : vector<16x8xbf16>, vector<8x8xbf16>, vector<16x8xf32> -> vector<16x8xf32>
    %67 = arith.addf %66, %8 : vector<16x8xf32>
    %cst_22 = arith.constant dense<0xFF800000> : vector<16xf32>
    %68 = vector.multi_reduction <maximumf>, %67, %cst_22 [1] : vector<16x8xf32> to vector<16xf32>
    %69 = vector.shape_cast %68 : vector<16xf32> to vector<16x1xf32>
    %70 = vector.broadcast %69 : vector<16x1xf32> to vector<16x8xf32>
    %71 = arith.subf %67, %70 : vector<16x8xf32>
    %72 = math.exp %71 : vector<16x8xf32>
    %cst_23 = arith.constant dense<0.000000e+00> : vector<16xf32>
    %73 = vector.multi_reduction <add>, %72, %cst_23 [1] : vector<16x8xf32> to vector<16xf32>
    %74 = vector.shape_cast %73 : vector<16xf32> to vector<16x1xf32>
    %75 = tpu.reciprocal %74 {approx = true} : vector<16x1xf32> -> vector<16x1xf32>
    %76 = vector.broadcast %75 : vector<16x1xf32> to vector<16x8xf32>
    %77 = arith.mulf %72, %76 : vector<16x8xf32>
    %78 = arith.truncf %77 : vector<16x8xf32> to vector<16x8xbf16>
    %cst_24 = arith.constant dense<0.000000e+00> : vector<16x8xf32>
    %79 = tpu.matmul %78, %43, %cst_24 {dimension_numbers = #tpu.dot_dimension_numbers<[1], [0], [0], [1], [0, 0, 1, 1], [], []>} : vector<16x8xbf16>, vector<8x8xbf16>, vector<16x8xf32> -> vector<16x8xf32>
    %80 = vector.extract_strided_slice %79 {offsets = [0, 0], sizes = [8, 8], strides = [1, 1]} : vector<16x8xf32> to vector<8x8xf32>
    %81 = arith.truncf %80 : vector<8x8xf32> to vector<8x8xbf16>
    %c0_25 = arith.constant 0 : index
    %c0_26 = arith.constant 0 : index
    %82 = vector.load %arg14[%c0_25, %c0_26] : memref<8x32xbf16, #tpu.memory_space<vmem>>, vector<8x8xbf16>
    tpu.vector_store %arg14[%c0_25, %c0_26], %81 {strides = array<i32>} : memref<8x32xbf16, #tpu.memory_space<vmem>>, vector<8x8xbf16>,
    %83 = vector.extract_strided_slice %79 {offsets = [8, 0], sizes = [8, 8], strides = [1, 1]} : vector<16x8xf32> to vector<8x8xf32>
    %84 = arith.truncf %83 : vector<8x8xf32> to vector<8x8xbf16>
    %c0_27 = arith.constant 0 : index
    %c8 = arith.constant 8 : index
    %85 = vector.load %arg14[%c0_27, %c8] : memref<8x32xbf16, #tpu.memory_space<vmem>>, vector<8x8xbf16>
    tpu.vector_store %arg14[%c0_27, %c8], %84 {strides = array<i32>} : memref<8x32xbf16, #tpu.memory_space<vmem>>, vector<8x8xbf16>,
    %86 = vector.extract_strided_slice %28 {offsets = [0, 8], sizes = [8, 8], strides = [1, 1]} : vector<8x16xf32> to vector<8x8xf32>
    %87 = vector.extract_strided_slice %86 {offsets = [0, 0], sizes = [8, 4], strides = [1, 1]} : vector<8x8xf32> to vector<8x4xf32>
    %88 = vector.extract_strided_slice %86 {offsets = [0, 4], sizes = [8, 4], strides = [1, 1]} : vector<8x8xf32> to vector<8x4xf32>
    %89 = arith.mulf %87, %9 : vector<8x4xf32>
    %90 = arith.mulf %88, %10 : vector<8x4xf32>
    %91 = arith.subf %89, %90 : vector<8x4xf32>
    %92 = arith.mulf %88, %9 : vector<8x4xf32>
    %93 = arith.mulf %87, %10 : vector<8x4xf32>
    %94 = arith.addf %92, %93 : vector<8x4xf32>
    %95 = tpu.concatenate %91, %94 in 1 : vector<8x4xf32>, vector<8x4xf32> -> vector<8x8xf32>
    %96 = arith.truncf %95 : vector<8x8xf32> to vector<8x8xbf16>
    %97 = vector.extract_strided_slice %30 {offsets = [0, 8], sizes = [8, 8], strides = [1, 1]} : vector<8x16xf32> to vector<8x8xf32>
    %98 = arith.truncf %97 : vector<8x8xf32> to vector<8x8xbf16>
    %99 = vector.extract_strided_slice %26 {offsets = [0, 16], sizes = [8, 8], strides = [1, 1]} : vector<8x32xf32> to vector<8x8xf32>
    %100 = vector.extract_strided_slice %99 {offsets = [0, 0], sizes = [8, 4], strides = [1, 1]} : vector<8x8xf32> to vector<8x4xf32>
    %101 = vector.extract_strided_slice %99 {offsets = [0, 4], sizes = [8, 4], strides = [1, 1]} : vector<8x8xf32> to vector<8x4xf32>
    %102 = arith.mulf %100, %9 : vector<8x4xf32>
    %103 = arith.mulf %101, %10 : vector<8x4xf32>
    %104 = arith.subf %102, %103 : vector<8x4xf32>
    %105 = arith.mulf %101, %9 : vector<8x4xf32>
    %106 = arith.mulf %100, %10 : vector<8x4xf32>
    %107 = arith.addf %105, %106 : vector<8x4xf32>
    %108 = tpu.concatenate %104, %107 in 1 : vector<8x4xf32>, vector<8x4xf32> -> vector<8x8xf32>
    %109 = vector.extract_strided_slice %26 {offsets = [0, 24], sizes = [8, 8], strides = [1, 1]} : vector<8x32xf32> to vector<8x8xf32>
    %110 = vector.extract_strided_slice %109 {offsets = [0, 0], sizes = [8, 4], strides = [1, 1]} : vector<8x8xf32> to vector<8x4xf32>
    %111 = vector.extract_strided_slice %109 {offsets = [0, 4], sizes = [8, 4], strides = [1, 1]} : vector<8x8xf32> to vector<8x4xf32>
    %112 = arith.mulf %110, %9 : vector<8x4xf32>
    %113 = arith.mulf %111, %10 : vector<8x4xf32>
    %114 = arith.subf %112, %113 : vector<8x4xf32>
    %115 = arith.mulf %111, %9 : vector<8x4xf32>
    %116 = arith.mulf %110, %10 : vector<8x4xf32>
    %117 = arith.addf %115, %116 : vector<8x4xf32>
    %118 = tpu.concatenate %114, %117 in 1 : vector<8x4xf32>, vector<8x4xf32> -> vector<8x8xf32>
    %119 = tpu.concatenate %108, %118 in 0 : vector<8x8xf32>, vector<8x8xf32> -> vector<16x8xf32>
    %120 = arith.truncf %119 : vector<16x8xf32> to vector<16x8xbf16>
    %cst_28 = arith.constant dense<0.000000e+00> : vector<16x8xf32>
    %121 = tpu.matmul %120, %96, %cst_28 {dimension_numbers = #tpu.dot_dimension_numbers<[1], [1], [0], [0], [0, 0, 1, 0], [], []>} : vector<16x8xbf16>, vector<8x8xbf16>, vector<16x8xf32> -> vector<16x8xf32>
    %122 = arith.addf %121, %8 : vector<16x8xf32>
    %cst_29 = arith.constant dense<0xFF800000> : vector<16xf32>
    %123 = vector.multi_reduction <maximumf>, %122, %cst_29 [1] : vector<16x8xf32> to vector<16xf32>
    %124 = vector.shape_cast %123 : vector<16xf32> to vector<16x1xf32>
    %125 = vector.broadcast %124 : vector<16x1xf32> to vector<16x8xf32>
    %126 = arith.subf %122, %125 : vector<16x8xf32>
    %127 = math.exp %126 : vector<16x8xf32>
    %cst_30 = arith.constant dense<0.000000e+00> : vector<16xf32>
    %128 = vector.multi_reduction <add>, %127, %cst_30 [1] : vector<16x8xf32> to vector<16xf32>
    %129 = vector.shape_cast %128 : vector<16xf32> to vector<16x1xf32>
    %130 = tpu.reciprocal %129 {approx = true} : vector<16x1xf32> -> vector<16x1xf32>
    %131 = vector.broadcast %130 : vector<16x1xf32> to vector<16x8xf32>
    %132 = arith.mulf %127, %131 : vector<16x8xf32>
    %133 = arith.truncf %132 : vector<16x8xf32> to vector<16x8xbf16>
    %cst_31 = arith.constant dense<0.000000e+00> : vector<16x8xf32>
    %134 = tpu.matmul %133, %98, %cst_31 {dimension_numbers = #tpu.dot_dimension_numbers<[1], [0], [0], [1], [0, 0, 1, 1], [], []>} : vector<16x8xbf16>, vector<8x8xbf16>, vector<16x8xf32> -> vector<16x8xf32>
    %135 = vector.extract_strided_slice %134 {offsets = [0, 0], sizes = [8, 8], strides = [1, 1]} : vector<16x8xf32> to vector<8x8xf32>
    %136 = arith.truncf %135 : vector<8x8xf32> to vector<8x8xbf16>
    %c0_32 = arith.constant 0 : index
    %c16 = arith.constant 16 : index
    %137 = vector.load %arg14[%c0_32, %c16] : memref<8x32xbf16, #tpu.memory_space<vmem>>, vector<8x8xbf16>
    tpu.vector_store %arg14[%c0_32, %c16], %136 {strides = array<i32>} : memref<8x32xbf16, #tpu.memory_space<vmem>>, vector<8x8xbf16>,
    %138 = vector.extract_strided_slice %134 {offsets = [8, 0], sizes = [8, 8], strides = [1, 1]} : vector<16x8xf32> to vector<8x8xf32>
    %139 = arith.truncf %138 : vector<8x8xf32> to vector<8x8xbf16>
    %c0_33 = arith.constant 0 : index
    %c24 = arith.constant 24 : index
    %140 = vector.load %arg14[%c0_33, %c24] : memref<8x32xbf16, #tpu.memory_space<vmem>>, vector<8x8xbf16>
    tpu.vector_store %arg14[%c0_33, %c24], %139 {strides = array<i32>} : memref<8x32xbf16, #tpu.memory_space<vmem>>, vector<8x8xbf16>,
    %c0_34 = arith.constant 0 : index
    %c0_35 = arith.constant 0 : index
    %141 = vector.load %arg14[%c0_34, %c0_35] : memref<8x32xbf16, #tpu.memory_space<vmem>>, vector<8x32xbf16>
    %c0_36 = arith.constant 0 : index
    %c0_37 = arith.constant 0 : index
    %142 = vector.load %arg9[%c0_36, %c0_37] : memref<32x32xbf16, #tpu.memory_space<vmem>>, vector<32x32xbf16>
    %cst_38 = arith.constant dense<0.000000e+00> : vector<8x32xf32>
    %143 = tpu.matmul %141, %142, %cst_38 {dimension_numbers = #tpu.dot_dimension_numbers<[1], [0], [0], [1], [0, 0, 1, 1], [], []>} : vector<8x32xbf16>, vector<32x32xbf16>, vector<8x32xf32> -> vector<8x32xf32>
    %144 = arith.addf %1, %143 : vector<8x32xf32>
    %c0_39 = arith.constant 0 : index
    %c0_40 = arith.constant 0 : index
    %145 = vector.load %arg5[%c0_39, %c0_40] : memref<1x32xf32, #tpu.memory_space<vmem>>, vector<1x32xf32>
    %146 = arith.mulf %144, %144 : vector<8x32xf32>
    %cst_41 = arith.constant dense<0.000000e+00> : vector<8xf32>
    %147 = vector.multi_reduction <add>, %146, %cst_41 [1] : vector<8x32xf32> to vector<8xf32>
    %148 = vector.shape_cast %147 : vector<8xf32> to vector<8x1xf32>
    %cst_42 = arith.constant 3.200000e+01 : f32
    %149 = vector.broadcast %cst_42 : f32 to vector<8x1xf32>
    %150 = arith.divf %148, %149 : vector<8x1xf32>
    %cst_43 = arith.constant 9.99999974E-6 : f32
    %151 = vector.broadcast %cst_43 : f32 to vector<8x1xf32>
    %152 = arith.addf %150, %151 : vector<8x1xf32>
    %153 = math.rsqrt %152 : vector<8x1xf32>
    %154 = vector.broadcast %153 : vector<8x1xf32> to vector<8x32xf32>
    %155 = arith.mulf %144, %154 : vector<8x32xf32>
    %156 = vector.broadcast %145 : vector<1x32xf32> to vector<8x32xf32>
    %157 = arith.mulf %155, %156 : vector<8x32xf32>
    %158 = arith.truncf %157 : vector<8x32xf32> to vector<8x32xbf16>
    %c0_44 = arith.constant 0 : index
    %c0_45 = arith.constant 0 : index
    %159 = vector.load %arg10[%c0_44, %c0_45] : memref<32x64xbf16, #tpu.memory_space<vmem>>, vector<32x64xbf16>
    %cst_46 = arith.constant dense<0.000000e+00> : vector<8x64xf32>
    %160 = tpu.matmul %158, %159, %cst_46 {dimension_numbers = #tpu.dot_dimension_numbers<[1], [0], [0], [1], [0, 0, 1, 1], [], []>} : vector<8x32xbf16>, vector<32x64xbf16>, vector<8x64xf32> -> vector<8x64xf32>
    %161 = arith.negf %160 : vector<8x64xf32>
    %162 = math.exp %161 : vector<8x64xf32>
    %cst_47 = arith.constant 1.000000e+00 : f32
    %163 = vector.broadcast %cst_47 : f32 to vector<8x64xf32>
    %164 = arith.addf %163, %162 : vector<8x64xf32>
    %165 = arith.divf %163, %164 : vector<8x64xf32>
    %166 = arith.mulf %160, %165 : vector<8x64xf32>
    %c0_48 = arith.constant 0 : index
    %c0_49 = arith.constant 0 : index
    %167 = vector.load %arg12[%c0_48, %c0_49] : memref<32x64xbf16, #tpu.memory_space<vmem>>, vector<32x64xbf16>
    %cst_50 = arith.constant dense<0.000000e+00> : vector<8x64xf32>
    %168 = tpu.matmul %158, %167, %cst_50 {dimension_numbers = #tpu.dot_dimension_numbers<[1], [0], [0], [1], [0, 0, 1, 1], [], []>} : vector<8x32xbf16>, vector<32x64xbf16>, vector<8x64xf32> -> vector<8x64xf32>
    %169 = arith.mulf %166, %168 : vector<8x64xf32>
    %170 = arith.truncf %169 : vector<8x64xf32> to vector<8x64xbf16>
    %c0_51 = arith.constant 0 : index
    %c0_52 = arith.constant 0 : index
    %171 = vector.load %arg11[%c0_51, %c0_52] : memref<64x32xbf16, #tpu.memory_space<vmem>>, vector<64x32xbf16>
    %cst_53 = arith.constant dense<0.000000e+00> : vector<8x32xf32>
    %172 = tpu.matmul %170, %171, %cst_53 {dimension_numbers = #tpu.dot_dimension_numbers<[1], [0], [0], [1], [0, 0, 1, 1], [], []>} : vector<8x64xbf16>, vector<64x32xbf16>, vector<8x32xf32> -> vector<8x32xf32>
    %173 = arith.addf %144, %172 : vector<8x32xf32>
    %c0_54 = arith.constant 0 : index
    %c0_55 = arith.constant 0 : index
    %c0_56 = arith.constant 0 : index
    %174 = vector.load %arg13[%c0_54, %c0_55, %c0_56] : memref<1x8x32xf32, #tpu.memory_space<vmem>>, vector<1x8x32xf32>
    %175 = vector.shape_cast %174 : vector<1x8x32xf32> to vector<8x32xf32>
    %176 = vector.shape_cast %173 : vector<8x32xf32> to vector<1x8x32xf32>
    tpu.vector_store %arg13[%c0_54, %c0_55, %c0_56], %176 {strides = array<i32>} : memref<1x8x32xf32, #tpu.memory_space<vmem>>, vector<1x8x32xf32>,
    return
  }
  func.func @transform_0(%arg0: i32) -> (i32, i32, i32) {
    %c0_i32 = arith.constant 0 : i32
    %c0_i32_0 = arith.constant 0 : i32
    %c0_i32_1 = arith.constant 0 : i32
    return %arg0, %c0_i32, %c0_i32_0 : i32, i32, i32
  }
  func.func @transform_1(%arg0: i32) -> (i32, i32) {
    %c0_i32 = arith.constant 0 : i32
    %c0_i32_0 = arith.constant 0 : i32
    %c0_i32_1 = arith.constant 0 : i32
    return %c0_i32, %c0_i32_0 : i32, i32
  }
  func.func @transform_2(%arg0: i32) -> (i32, i32) {
    %c0_i32 = arith.constant 0 : i32
    %c0_i32_0 = arith.constant 0 : i32
    %c0_i32_1 = arith.constant 0 : i32
    return %c0_i32, %c0_i32_0 : i32, i32
  }
  func.func @transform_3(%arg0: i32) -> (i32, i32) {
    %c0_i32 = arith.constant 0 : i32
    %c0_i32_0 = arith.constant 0 : i32
    %c0_i32_1 = arith.constant 0 : i32
    return %c0_i32, %c0_i32_0 : i32, i32
  }
  func.func @transform_4(%arg0: i32) -> (i32, i32) {
    %c0_i32 = arith.constant 0 : i32
    %c0_i32_0 = arith.constant 0 : i32
    %c0_i32_1 = arith.constant 0 : i32
    return %c0_i32, %c0_i32_0 : i32, i32
  }
  func.func @transform_5(%arg0: i32) -> (i32, i32) {
    %c0_i32 = arith.constant 0 : i32
    %c0_i32_0 = arith.constant 0 : i32
    %c0_i32_1 = arith.constant 0 : i32
    return %c0_i32, %c0_i32_0 : i32, i32
  }
  func.func @transform_6(%arg0: i32) -> (i32, i32) {
    %c0_i32 = arith.constant 0 : i32
    %c0_i32_0 = arith.constant 0 : i32
    %c0_i32_1 = arith.constant 0 : i32
    return %c0_i32, %c0_i32_0 : i32, i32
  }
  func.func @transform_7(%arg0: i32) -> (i32, i32) {
    %c0_i32 = arith.constant 0 : i32
    %c0_i32_0 = arith.constant 0 : i32
    %c0_i32_1 = arith.constant 0 : i32
    return %c0_i32, %c0_i32_0 : i32, i32
  }
  func.func @transform_8(%arg0: i32) -> (i32, i32) {
    %c0_i32 = arith.constant 0 : i32
    %c0_i32_0 = arith.constant 0 : i32
    %c0_i32_1 = arith.constant 0 : i32
    return %c0_i32, %c0_i32_0 : i32, i32
  }
  func.func @transform_9(%arg0: i32) -> (i32, i32) {
    %c0_i32 = arith.constant 0 : i32
    %c0_i32_0 = arith.constant 0 : i32
    %c0_i32_1 = arith.constant 0 : i32
    return %c0_i32, %c0_i32_0 : i32, i32
  }
  func.func @transform_10(%arg0: i32) -> (i32, i32) {
    %c0_i32 = arith.constant 0 : i32
    %c0_i32_0 = arith.constant 0 : i32
    %c0_i32_1 = arith.constant 0 : i32
    return %c0_i32, %c0_i32_0 : i32, i32
  }
  func.func @transform_11(%arg0: i32) -> (i32, i32) {
    %c0_i32 = arith.constant 0 : i32
    %c0_i32_0 = arith.constant 0 : i32
    %c0_i32_1 = arith.constant 0 : i32
    return %c0_i32, %c0_i32_0 : i32, i32
  }
  func.func @transform_12(%arg0: i32) -> (i32, i32, i32) {
    %c0_i32 = arith.constant 0 : i32
    %c0_i32_0 = arith.constant 0 : i32
    %c0_i32_1 = arith.constant 0 : i32
    return %arg0, %c0_i32, %c0_i32_0 : i32, i32, i32
  }
}

module attributes {stable_mosaic.version = 11 : i64} {
  func.func @kernel(%arg0: i32, %arg1: memref<1x8x32xf32, #tpu.memory_space<vmem>>, %arg2: memref<8x4xf32, #tpu.memory_space<vmem>>, %arg3: memref<8x4xf32, #tpu.memory_space<vmem>>, %arg4: memref<1x32xf32, #tpu.memory_space<vmem>>, %arg5: memref<1x32xf32, #tpu.memory_space<vmem>>, %arg6: memref<32x32xbf16, #tpu.memory_space<vmem>>, %arg7: memref<32x16xbf16, #tpu.memory_space<vmem>>, %arg8: memref<32x16xbf16, #tpu.memory_space<vmem>>, %arg9: memref<32x32xbf16, #tpu.memory_space<vmem>>, %arg10: memref<32x64xbf16, #tpu.memory_space<vmem>>, %arg11: memref<64x32xbf16, #tpu.memory_space<vmem>>, %arg12: memref<32x64xbf16, #tpu.memory_space<vmem>>, %arg13: memref<1x8x32xf32, #tpu.memory_space<vmem>>, %arg14: memref<8x32xbf16, #tpu.memory_space<vmem>>) attributes {dimension_semantics = [#tpu.dimension_semantics<parallel>], iteration_bounds = array<i64: 2>, scalar_prefetch = 0 : i64, scratch_operands = 1 : i64, tpu.core_type = #tpu.core_type<tc>, window_params = [{transform_indices = @transform_0, window_bounds = array<i64: 1, 8, 32>}, {pipeline_mode = #tpu.pipeline_mode<synchronous>, transform_indices = @transform_1, window_bounds = array<i64: 8, 4>}, {pipeline_mode = #tpu.pipeline_mode<synchronous>, transform_indices = @transform_2, window_bounds = array<i64: 8, 4>}, {pipeline_mode = #tpu.pipeline_mode<synchronous>, transform_indices = @transform_3, window_bounds = array<i64: 1, 32>}, {pipeline_mode = #tpu.pipeline_mode<synchronous>, transform_indices = @transform_4, window_bounds = array<i64: 1, 32>}, {pipeline_mode = #tpu.pipeline_mode<synchronous>, transform_indices = @transform_5, window_bounds = array<i64: 32, 32>}, {pipeline_mode = #tpu.pipeline_mode<synchronous>, transform_indices = @transform_6, window_bounds = array<i64: 32, 16>}, {pipeline_mode = #tpu.pipeline_mode<synchronous>, transform_indices = @transform_7, window_bounds = array<i64: 32, 16>}, {pipeline_mode = #tpu.pipeline_mode<synchronous>, transform_indices = @transform_8, window_bounds = array<i64: 32, 32>}, {pipeline_mode = #tpu.pipeline_mode<synchronous>, transform_indices = @transform_9, window_bounds = array<i64: 32, 64>}, {pipeline_mode = #tpu.pipeline_mode<synchronous>, transform_indices = @transform_10, window_bounds = array<i64: 64, 32>}, {pipeline_mode = #tpu.pipeline_mode<synchronous>, transform_indices = @transform_11, window_bounds = array<i64: 32, 64>}, {transform_indices = @transform_12, window_bounds = array<i64: 1, 8, 32>}]} {
    %c0 = arith.constant 0 : index
    %c0_0 = arith.constant 0 : index
    %c0_1 = arith.constant 0 : index
    %0 = vector.load %arg1[%c0, %c0_0, %c0_1] : memref<1x8x32xf32, #tpu.memory_space<vmem>>, vector<1x8x32xf32>
    %1 = vector.shape_cast %0 : vector<1x8x32xf32> to vector<8x32xf32>
    %2 = tpu.iota {dimensions = array<i32: 0>} : vector<8x8xi32>
    %3 = tpu.iota {dimensions = array<i32: 1>} : vector<8x8xi32>
    %4 = arith.cmpi sge, %2, %3 : vector<8x8xi32>
    %cst = arith.constant 0.000000e+00 : f32
    %cst_2 = arith.constant -1.000000e+30 : f32
    %5 = vector.broadcast %cst : f32 to vector<8x8xf32>
    %6 = vector.broadcast %cst_2 : f32 to vector<8x8xf32>
    %7 = arith.select %4, %5, %6 : vector<8x8xi1>, vector<8x8xf32>
    %8 = tpu.concatenate %7, %7 in 0 : vector<8x8xf32>, vector<8x8xf32> -> vector<16x8xf32>
    %c0_3 = arith.constant 0 : index
    %c0_4 = arith.constant 0 : index
    %9 = vector.load %arg2[%c0_3, %c0_4] : memref<8x4xf32, #tpu.memory_space<vmem>>, vector<8x4xf32>
    %c0_5 = arith.constant 0 : index
    %c0_6 = arith.constant 0 : index
    %10 = vector.load %arg3[%c0_5, %c0_6] : memref<8x4xf32, #tpu.memory_space<vmem>>, vector<8x4xf32>
    %c0_7 = arith.constant 0 : index
    %c0_8 = arith.constant 0 : index
    %11 = vector.load %arg4[%c0_7, %c0_8] : memref<1x32xf32, #tpu.memory_space<vmem>>, vector<1x32xf32>
    %12 = arith.mulf %1, %1 : vector<8x32xf32>
    %cst_9 = arith.constant dense<0.000000e+00> : vector<8xf32>
    %13 = vector.multi_reduction <add>, %12, %cst_9 [1] : vector<8x32xf32> to vector<8xf32>
    %14 = vector.shape_cast %13 : vector<8xf32> to vector<8x1xf32>
    %cst_10 = arith.constant 3.200000e+01 : f32
    %15 = vector.broadcast %cst_10 : f32 to vector<8x1xf32>
    %16 = arith.divf %14, %15 : vector<8x1xf32>
    %cst_11 = arith.constant 9.99999974E-6 : f32
    %17 = vector.broadcast %cst_11 : f32 to vector<8x1xf32>
    %18 = arith.addf %16, %17 : vector<8x1xf32>
    %19 = math.rsqrt %18 : vector<8x1xf32>
    %20 = vector.broadcast %19 : vector<8x1xf32> to vector<8x32xf32>
    %21 = arith.mulf %1, %20 : vector<8x32xf32>
    %22 = vector.broadcast %11 : vector<1x32xf32> to vector<8x32xf32>
    %23 = arith.mulf %21, %22 : vector<8x32xf32>
    %24 = arith.truncf %23 : vector<8x32xf32> to vector<8x32xbf16>
    %c0_12 = arith.constant 0 : index
    %c0_13 = arith.constant 0 : index
    %25 = vector.load %arg6[%c0_12, %c0_13] : memref<32x32xbf16, #tpu.memory_space<vmem>>, vector<32x32xbf16>
    %cst_14 = arith.constant dense<0.000000e+00> : vector<8x32xf32>
    %26 = tpu.matmul %24, %25, %cst_14 {dimension_numbers = #tpu.dot_dimension_numbers<[1], [0], [0], [1], [0, 0, 1, 1], [], []>} : vector<8x32xbf16>, vector<32x32xbf16>, vector<8x32xf32> -> vector<8x32xf32>
    %c0_15 = arith.constant 0 : index
    %c0_16 = arith.constant 0 : index
    %27 = vector.load %arg7[%c0_15, %c0_16] : memref<32x16xbf16, #tpu.memory_space<vmem>>, vector<32x16xbf16>
    %cst_17 = arith.constant dense<0.000000e+00> : vector<8x16xf32>
    %28 = tpu.matmul %24, %27, %cst_17 {dimension_numbers = #tpu.dot_dimension_numbers<[1], [0], [0], [1], [0, 0, 1, 1], [], []>} : vector<8x32xbf16>, vector<32x16xbf16>, vector<8x16xf32> -> vector<8x16xf32>
    %c0_18 = arith.constant 0 : index
    %c0_19 = arith.constant 0 : index
    %29 = vector.load %arg8[%c0_18, %c0_19] : memref<32x16xbf16, #tpu.memory_space<vmem>>, vector<32x16xbf16>
    %cst_20 = arith.constant dense<0.000000e+00> : vector<8x16xf32>
    %30 = tpu.matmul %24, %29, %cst_20 {dimension_numbers = #tpu.dot_dimension_numbers<[1], [0], [0], [1], [0, 0, 1, 1], [], []>} : vector<8x32xbf16>, vector<32x16xbf16>, vector<8x16xf32> -> vector<8x16xf32>
    %31 = vector.extract_strided_slice %28 {offsets = [0, 0], sizes = [8, 8], strides = [1, 1]} : vector<8x16xf32> to vector<8x8xf32>
    %32 = vector.extract_strided_slice %31 {offsets = [0, 0], sizes = [8, 4], strides = [1, 1]} : vector<8x8xf32> to vector<8x4xf32>
    %33 = vector.extract_strided_slice %31 {offsets = [0, 4], sizes = [8, 4], strides = [1, 1]} : vector<8x8xf32> to vector<8x4xf32>
    %34 = arith.mulf %32, %9 : vector<8x4xf32>
    %35 = arith.mulf %33, %10 : vector<8x4xf32>
    %36 = arith.subf %34, %35 : vector<8x4xf32>
    %37 = arith.mulf %33, %9 : vector<8x4xf32>
    %38 = arith.mulf %32, %10 : vector<8x4xf32>
    %39 = arith.addf %37, %38 : vector<8x4xf32>
    %40 = tpu.concatenate %36, %39 in 1 : vector<8x4xf32>, vector<8x4xf32> -> vector<8x8xf32>
    %41 = arith.truncf %40 : vector<8x8xf32> to vector<8x8xbf16>
    %42 = vector.extract_strided_slice %30 {offsets = [0, 0], sizes = [8, 8], strides = [1, 1]} : vector<8x16xf32> to vector<8x8xf32>
    %43 = arith.truncf %42 : vector<8x8xf32> to vector<8x8xbf16>
    %44 = vector.extract_strided_slice %26 {offsets = [0, 0], sizes = [8, 8], strides = [1, 1]} : vector<8x32xf32> to vector<8x8xf32>
    %45 = vector.extract_strided_slice %44 {offsets = [0, 0], sizes = [8, 4], strides = [1, 1]} : vector<8x8xf32> to vector<8x4xf32>
    %46 = vector.extract_strided_slice %44 {offsets = [0, 4], sizes = [8, 4], strides = [1, 1]} : vector<8x8xf32> to vector<8x4xf32>
    %47 = arith.mulf %45, %9 : vector<8x4xf32>
    %48 = arith.mulf %46, %10 : vector<8x4xf32>
    %49 = arith.subf %47, %48 : vector<8x4xf32>
    %50 = arith.mulf %46, %9 : vector<8x4xf32>
    %51 = arith.mulf %45, %10 : vector<8x4xf32>
    %52 = arith.addf %50, %51 : vector<8x4xf32>
    %53 = tpu.concatenate %49, %52 in 1 : vector<8x4xf32>, vector<8x4xf32> -> vector<8x8xf32>
    %54 = vector.extract_strided_slice %26 {offsets = [0, 8], sizes = [8, 8], strides = [1, 1]} : vector<8x32xf32> to vector<8x8xf32>
    %55 = vector.extract_strided_slice %54 {offsets = [0, 0], sizes = [8, 4], strides = [1, 1]} : vector<8x8xf32> to vector<8x4xf32>
    %56 = vector.extract_strided_slice %54 {offsets = [0, 4], sizes = [8, 4], strides = [1, 1]} : vector<8x8xf32> to vector<8x4xf32>
    %57 = arith.mulf %55, %9 : vector<8x4xf32>
    %58 = arith.mulf %56, %10 : vector<8x4xf32>
    %59 = arith.subf %57, %58 : vector<8x4xf32>
    %60 = arith.mulf %56, %9 : vector<8x4xf32>
    %61 = arith.mulf %55, %10 : vector<8x4xf32>
    %62 = arith.addf %60, %61 : vector<8x4xf32>
    %63 = tpu.concatenate %59, %62 in 1 : vector<8x4xf32>, vector<8x4xf32> -> vector<8x8xf32>
    %64 = tpu.concatenate %53, %63 in 0 : vector<8x8xf32>, vector<8x8xf32> -> vector<16x8xf32>
    %65 = arith.truncf %64 : vector<16x8xf32> to vector<16x8xbf16>
    %cst_21 = arith.constant dense<0.000000e+00> : vector<16x8xf32>
    %66 = tpu.matmul %65, %41, %cst_21 {dimension_numbers = #tpu.dot_dimension_numbers<[1], [1], [0], [0], [0, 0, 1, 0], [], []>} : vector<16x8xbf16>, vector<8x8xbf16>, vector<16x8xf32> -> vector<16x8xf32>
    %67 = arith.addf %66, %8 : vector<16x8xf32>
    %cst_22 = arith.constant dense<0xFF800000> : vector<16xf32>
    %68 = vector.multi_reduction <maximumf>, %67, %cst_22 [1] : vector<16x8xf32> to vector<16xf32>
    %69 = vector.shape_cast %68 : vector<16xf32> to vector<16x1xf32>
    %70 = vector.broadcast %69 : vector<16x1xf32> to vector<16x8xf32>
    %71 = arith.subf %67, %70 : vector<16x8xf32>
    %72 = math.exp %71 : vector<16x8xf32>
    %cst_23 = arith.constant dense<0.000000e+00> : vector<16xf32>
    %73 = vector.multi_reduction <add>, %72, %cst_23 [1] : vector<16x8xf32> to vector<16xf32>
    %74 = vector.shape_cast %73 : vector<16xf32> to vector<16x1xf32>
    %75 = tpu.reciprocal %74 {approx = true} : vector<16x1xf32> -> vector<16x1xf32>
    %76 = vector.broadcast %75 : vector<16x1xf32> to vector<16x8xf32>
    %77 = arith.mulf %72, %76 : vector<16x8xf32>
    %78 = arith.truncf %77 : vector<16x8xf32> to vector<16x8xbf16>
    %cst_24 = arith.constant dense<0.000000e+00> : vector<16x8xf32>
    %79 = tpu.matmul %78, %43, %cst_24 {dimension_numbers = #tpu.dot_dimension_numbers<[1], [0], [0], [1], [0, 0, 1, 1], [], []>} : vector<16x8xbf16>, vector<8x8xbf16>, vector<16x8xf32> -> vector<16x8xf32>
    %80 = vector.extract_strided_slice %79 {offsets = [0, 0], sizes = [8, 8], strides = [1, 1]} : vector<16x8xf32> to vector<8x8xf32>
    %81 = arith.truncf %80 : vector<8x8xf32> to vector<8x8xbf16>
    %c0_25 = arith.constant 0 : index
    %c0_26 = arith.constant 0 : index
    %82 = vector.load %arg14[%c0_25, %c0_26] : memref<8x32xbf16, #tpu.memory_space<vmem>>, vector<8x8xbf16>
    tpu.vector_store %arg14[%c0_25, %c0_26], %81 {strides = array<i32>} : memref<8x32xbf16, #tpu.memory_space<vmem>>, vector<8x8xbf16>,
    %83 = vector.extract_strided_slice %79 {offsets = [8, 0], sizes = [8, 8], strides = [1, 1]} : vector<16x8xf32> to vector<8x8xf32>
    %84 = arith.truncf %83 : vector<8x8xf32> to vector<8x8xbf16>
    %c0_27 = arith.constant 0 : index
    %c8 = arith.constant 8 : index
    %85 = vector.load %arg14[%c0_27, %c8] : memref<8x32xbf16, #tpu.memory_space<vmem>>, vector<8x8xbf16>
    tpu.vector_store %arg14[%c0_27, %c8], %84 {strides = array<i32>} : memref<8x32xbf16, #tpu.memory_space<vmem>>, vector<8x8xbf16>,
    %86 = vector.extract_strided_slice %28 {offsets = [0, 8], sizes = [8, 8], strides = [1, 1]} : vector<8x16xf32> to vector<8x8xf32>
    %87 = vector.extract_strided_slice %86 {offsets = [0, 0], sizes = [8, 4], strides = [1, 1]} : vector<8x8xf32> to vector<8x4xf32>
    %88 = vector.extract_strided_slice %86 {offsets = [0, 4], sizes = [8, 4], strides = [1, 1]} : vector<8x8xf32> to vector<8x4xf32>
    %89 = arith.mulf %87, %9 : vector<8x4xf32>
    %90 = arith.mulf %88, %10 : vector<8x4xf32>
    %91 = arith.subf %89, %90 : vector<8x4xf32>
    %92 = arith.mulf %88, %9 : vector<8x4xf32>
    %93 = arith.mulf %87, %10 : vector<8x4xf32>
    %94 = arith.addf %92, %93 : vector<8x4xf32>
    %95 = tpu.concatenate %91, %94 in 1 : vector<8x4xf32>, vector<8x4xf32> -> vector<8x8xf32>
    %96 = arith.truncf %95 : vector<8x8xf32> to vector<8x8xbf16>
    %97 = vector.extract_strided_slice %30 {offsets = [0, 8], sizes = [8, 8], strides = [1, 1]} : vector<8x16xf32> to vector<8x8xf32>
    %98 = arith.truncf %97 : vector<8x8xf32> to vector<8x8xbf16>
    %99 = vector.extract_strided_slice %26 {offsets = [0, 16], sizes = [8, 8], strides = [1, 1]} : vector<8x32xf32> to vector<8x8xf32>
    %100 = vector.extract_strided_slice %99 {offsets = [0, 0], sizes = [8, 4], strides = [1, 1]} : vector<8x8xf32> to vector<8x4xf32>
    %101 = vector.extract_strided_slice %99 {offsets = [0, 4], sizes = [8, 4], strides = [1, 1]} : vector<8x8xf32> to vector<8x4xf32>
    %102 = arith.mulf %100, %9 : vector<8x4xf32>
    %103 = arith.mulf %101, %10 : vector<8x4xf32>
    %104 = arith.subf %102, %103 : vector<8x4xf32>
    %105 = arith.mulf %101, %9 : vector<8x4xf32>
    %106 = arith.mulf %100, %10 : vector<8x4xf32>
    %107 = arith.addf %105, %106 : vector<8x4xf32>
    %108 = tpu.concatenate %104, %107 in 1 : vector<8x4xf32>, vector<8x4xf32> -> vector<8x8xf32>
    %109 = vector.extract_strided_slice %26 {offsets = [0, 24], sizes = [8, 8], strides = [1, 1]} : vector<8x32xf32> to vector<8x8xf32>
    %110 = vector.extract_strided_slice %109 {offsets = [0, 0], sizes = [8, 4], strides = [1, 1]} : vector<8x8xf32> to vector<8x4xf32>
    %111 = vector.extract_strided_slice %109 {offsets = [0, 4], sizes = [8, 4], strides = [1, 1]} : vector<8x8xf32> to vector<8x4xf32>
    %112 = arith.mulf %110, %9 : vector<8x4xf32>
    %113 = arith.mulf %111, %10 : vector<8x4xf32>
    %114 = arith.subf %112, %113 : vector<8x4xf32>
    %115 = arith.mulf %111, %9 : vector<8x4xf32>
    %116 = arith.mulf %110, %10 : vector<8x4xf32>
    %117 = arith.addf %115, %116 : vector<8x4xf32>
    %118 = tpu.concatenate %114, %117 in 1 : vector<8x4xf32>, vector<8x4xf32> -> vector<8x8xf32>
    %119 = tpu.concatenate %108, %118 in 0 : vector<8x8xf32>, vector<8x8xf32> -> vector<16x8xf32>
    %120 = arith.truncf %119 : vector<16x8xf32> to vector<16x8xbf16>
    %cst_28 = arith.constant dense<0.000000e+00> : vector<16x8xf32>
    %121 = tpu.matmul %120, %96, %cst_28 {dimension_numbers = #tpu.dot_dimension_numbers<[1], [1], [0], [0], [0, 0, 1, 0], [], []>} : vector<16x8xbf16>, vector<8x8xbf16>, vector<16x8xf32> -> vector<16x8xf32>
    %122 = arith.addf %121, %8 : vector<16x8xf32>
    %cst_29 = arith.constant dense<0xFF800000> : vector<16xf32>
    %123 = vector.multi_reduction <maximumf>, %122, %cst_29 [1] : vector<16x8xf32> to vector<16xf32>
    %124 = vector.shape_cast %123 : vector<16xf32> to vector<16x1xf32>
    %125 = vector.broadcast %124 : vector<16x1xf32> to vector<16x8xf32>
    %126 = arith.subf %122, %125 : vector<16x8xf32>
    %127 = math.exp %126 : vector<16x8xf32>
    %cst_30 = arith.constant dense<0.000000e+00> : vector<16xf32>
    %128 = vector.multi_reduction <add>, %127, %cst_30 [1] : vector<16x8xf32> to vector<16xf32>
    %129 = vector.shape_cast %128 : vector<16xf32> to vector<16x1xf32>
    %130 = tpu.reciprocal %129 {approx = true} : vector<16x1xf32> -> vector<16x1xf32>
    %131 = vector.broadcast %130 : vector<16x1xf32> to vector<16x8xf32>
    %132 = arith.mulf %127, %131 : vector<16x8xf32>
    %133 = arith.truncf %132 : vector<16x8xf32> to vector<16x8xbf16>
    %cst_31 = arith.constant dense<0.000000e+00> : vector<16x8xf32>
    %134 = tpu.matmul %133, %98, %cst_31 {dimension_numbers = #tpu.dot_dimension_numbers<[1], [0], [0], [1], [0, 0, 1, 1], [], []>} : vector<16x8xbf16>, vector<8x8xbf16>, vector<16x8xf32> -> vector<16x8xf32>
    %135 = vector.extract_strided_slice %134 {offsets = [0, 0], sizes = [8, 8], strides = [1, 1]} : vector<16x8xf32> to vector<8x8xf32>
    %136 = arith.truncf %135 : vector<8x8xf32> to vector<8x8xbf16>
    %c0_32 = arith.constant 0 : index
    %c16 = arith.constant 16 : index
    %137 = vector.load %arg14[%c0_32, %c16] : memref<8x32xbf16, #tpu.memory_space<vmem>>, vector<8x8xbf16>
    tpu.vector_store %arg14[%c0_32, %c16], %136 {strides = array<i32>} : memref<8x32xbf16, #tpu.memory_space<vmem>>, vector<8x8xbf16>,
    %138 = vector.extract_strided_slice %134 {offsets = [8, 0], sizes = [8, 8], strides = [1, 1]} : vector<16x8xf32> to vector<8x8xf32>
    %139 = arith.truncf %138 : vector<8x8xf32> to vector<8x8xbf16>
    %c0_33 = arith.constant 0 : index
    %c24 = arith.constant 24 : index
    %140 = vector.load %arg14[%c0_33, %c24] : memref<8x32xbf16, #tpu.memory_space<vmem>>, vector<8x8xbf16>
    tpu.vector_store %arg14[%c0_33, %c24], %139 {strides = array<i32>} : memref<8x32xbf16, #tpu.memory_space<vmem>>, vector<8x8xbf16>,
    %c0_34 = arith.constant 0 : index
    %c0_35 = arith.constant 0 : index
    %141 = vector.load %arg14[%c0_34, %c0_35] : memref<8x32xbf16, #tpu.memory_space<vmem>>, vector<8x32xbf16>
    %c0_36 = arith.constant 0 : index
    %c0_37 = arith.constant 0 : index
    %142 = vector.load %arg9[%c0_36, %c0_37] : memref<32x32xbf16, #tpu.memory_space<vmem>>, vector<32x32xbf16>
    %cst_38 = arith.constant dense<0.000000e+00> : vector<8x32xf32>
    %143 = tpu.matmul %141, %142, %cst_38 {dimension_numbers = #tpu.dot_dimension_numbers<[1], [0], [0], [1], [0, 0, 1, 1], [], []>} : vector<8x32xbf16>, vector<32x32xbf16>, vector<8x32xf32> -> vector<8x32xf32>
    %144 = arith.addf %1, %143 : vector<8x32xf32>
    %c0_39 = arith.constant 0 : index
    %c0_40 = arith.constant 0 : index
    %145 = vector.load %arg5[%c0_39, %c0_40] : memref<1x32xf32, #tpu.memory_space<vmem>>, vector<1x32xf32>
    %146 = arith.mulf %144, %144 : vector<8x32xf32>
    %cst_41 = arith.constant dense<0.000000e+00> : vector<8xf32>
    %147 = vector.multi_reduction <add>, %146, %cst_41 [1] : vector<8x32xf32> to vector<8xf32>
    %148 = vector.shape_cast %147 : vector<8xf32> to vector<8x1xf32>
    %cst_42 = arith.constant 3.200000e+01 : f32
    %149 = vector.broadcast %cst_42 : f32 to vector<8x1xf32>
    %150 = arith.divf %148, %149 : vector<8x1xf32>
    %cst_43 = arith.constant 9.99999974E-6 : f32
    %151 = vector.broadcast %cst_43 : f32 to vector<8x1xf32>
    %152 = arith.addf %150, %151 : vector<8x1xf32>
    %153 = math.rsqrt %152 : vector<8x1xf32>
    %154 = vector.broadcast %153 : vector<8x1xf32> to vector<8x32xf32>
    %155 = arith.mulf %144, %154 : vector<8x32xf32>
    %156 = vector.broadcast %145 : vector<1x32xf32> to vector<8x32xf32>
    %157 = arith.mulf %155, %156 : vector<8x32xf32>
    %158 = arith.truncf %157 : vector<8x32xf32> to vector<8x32xbf16>
    %c0_44 = arith.constant 0 : index
    %c0_45 = arith.constant 0 : index
    %159 = vector.load %arg10[%c0_44, %c0_45] : memref<32x64xbf16, #tpu.memory_space<vmem>>, vector<32x64xbf16>
    %cst_46 = arith.constant dense<0.000000e+00> : vector<8x64xf32>
    %160 = tpu.matmul %158, %159, %cst_46 {dimension_numbers = #tpu.dot_dimension_numbers<[1], [0], [0], [1], [0, 0, 1, 1], [], []>} : vector<8x32xbf16>, vector<32x64xbf16>, vector<8x64xf32> -> vector<8x64xf32>
    %161 = arith.negf %160 : vector<8x64xf32>
    %162 = math.exp %161 : vector<8x64xf32>
    %cst_47 = arith.constant 1.000000e+00 : f32
    %163 = vector.broadcast %cst_47 : f32 to vector<8x64xf32>
    %164 = arith.addf %163, %162 : vector<8x64xf32>
    %165 = arith.divf %163, %164 : vector<8x64xf32>
    %166 = arith.mulf %160, %165 : vector<8x64xf32>
    %c0_48 = arith.constant 0 : index
    %c0_49 = arith.constant 0 : index
    %167 = vector.load %arg12[%c0_48, %c0_49] : memref<32x64xbf16, #tpu.memory_space<vmem>>, vector<32x64xbf16>
    %cst_50 = arith.constant dense<0.000000e+00> : vector<8x64xf32>
    %168 = tpu.matmul %158, %167, %cst_50 {dimension_numbers = #tpu.dot_dimension_numbers<[1], [0], [0], [1], [0, 0, 1, 1], [], []>} : vector<8x32xbf16>, vector<32x64xbf16>, vector<8x64xf32> -> vector<8x64xf32>
    %169 = arith.mulf %166, %168 : vector<8x64xf32>
    %170 = arith.truncf %169 : vector<8x64xf32> to vector<8x64xbf16>
    %c0_51 = arith.constant 0 : index
    %c0_52 = arith.constant 0 : index
    %171 = vector.load %arg11[%c0_51, %c0_52] : memref<64x32xbf16, #tpu.memory_space<vmem>>, vector<64x32xbf16>
    %cst_53 = arith.constant dense<0.000000e+00> : vector<8x32xf32>
    %172 = tpu.matmul %170, %171, %cst_53 {dimension_numbers = #tpu.dot_dimension_numbers<[1], [0], [0], [1], [0, 0, 1, 1], [], []>} : vector<8x64xbf16>, vector<64x32xbf16>, vector<8x32xf32> -> vector<8x32xf32>
    %173 = arith.addf %144, %172 : vector<8x32xf32>
    %c0_54 = arith.constant 0 : index
    %c0_55 = arith.constant 0 : index
    %c0_56 = arith.constant 0 : index
    %174 = vector.load %arg13[%c0_54, %c0_55, %c0_56] : memref<1x8x32xf32, #tpu.memory_space<vmem>>, vector<1x8x32xf32>
    %175 = vector.shape_cast %174 : vector<1x8x32xf32> to vector<8x32xf32>
    %176 = vector.shape_cast %173 : vector<8x32xf32> to vector<1x8x32xf32>
    tpu.vector_store %arg13[%c0_54, %c0_55, %c0_56], %176 {strides = array<i32>} : memref<1x8x32xf32, #tpu.memory_space<vmem>>, vector<1x8x32xf32>,
    return
  }
  func.func @transform_0(%arg0: i32) -> (i32, i32, i32) {
    %c0_i32 = arith.constant 0 : i32
    %c0_i32_0 = arith.constant 0 : i32
    %c0_i32_1 = arith.constant 0 : i32
    return %arg0, %c0_i32, %c0_i32_0 : i32, i32, i32
  }
  func.func @transform_1(%arg0: i32) -> (i32, i32) {
    %c0_i32 = arith.constant 0 : i32
    %c0_i32_0 = arith.constant 0 : i32
    %c0_i32_1 = arith.constant 0 : i32
    return %c0_i32, %c0_i32_0 : i32, i32
  }
  func.func @transform_2(%arg0: i32) -> (i32, i32) {
    %c0_i32 = arith.constant 0 : i32
    %c0_i32_0 = arith.constant 0 : i32
    %c0_i32_1 = arith.constant 0 : i32
    return %c0_i32, %c0_i32_0 : i32, i32
  }
  func.func @transform_3(%arg0: i32) -> (i32, i32) {
    %c0_i32 = arith.constant 0 : i32
    %c0_i32_0 = arith.constant 0 : i32
    %c0_i32_1 = arith.constant 0 : i32
    return %c0_i32, %c0_i32_0 : i32, i32
  }
  func.func @transform_4(%arg0: i32) -> (i32, i32) {
    %c0_i32 = arith.constant 0 : i32
    %c0_i32_0 = arith.constant 0 : i32
    %c0_i32_1 = arith.constant 0 : i32
    return %c0_i32, %c0_i32_0 : i32, i32
  }
  func.func @transform_5(%arg0: i32) -> (i32, i32) {
    %c0_i32 = arith.constant 0 : i32
    %c0_i32_0 = arith.constant 0 : i32
    %c0_i32_1 = arith.constant 0 : i32
    return %c0_i32, %c0_i32_0 : i32, i32
  }
  func.func @transform_6(%arg0: i32) -> (i32, i32) {
    %c0_i32 = arith.constant 0 : i32
    %c0_i32_0 = arith.constant 0 : i32
    %c0_i32_1 = arith.constant 0 : i32
    return %c0_i32, %c0_i32_0 : i32, i32
  }
  func.func @transform_7(%arg0: i32) -> (i32, i32) {
    %c0_i32 = arith.constant 0 : i32
    %c0_i32_0 = arith.constant 0 : i32
    %c0_i32_1 = arith.constant 0 : i32
    return %c0_i32, %c0_i32_0 : i32, i32
  }
  func.func @transform_8(%arg0: i32) -> (i32, i32) {
    %c0_i32 = arith.constant 0 : i32
    %c0_i32_0 = arith.constant 0 : i32
    %c0_i32_1 = arith.constant 0 : i32
    return %c0_i32, %c0_i32_0 : i32, i32
  }
  func.func @transform_9(%arg0: i32) -> (i32, i32) {
    %c0_i32 = arith.constant 0 : i32
    %c0_i32_0 = arith.constant 0 : i32
    %c0_i32_1 = arith.constant 0 : i32
    return %c0_i32, %c0_i32_0 : i32, i32
  }
  func.func @transform_10(%arg0: i32) -> (i32, i32) {
    %c0_i32 = arith.constant 0 : i32
    %c0_i32_0 = arith.constant 0 : i32
    %c0_i32_1 = arith.constant 0 : i32
    return %c0_i32, %c0_i32_0 : i32, i32
  }
  func.func @transform_11(%arg0: i32) -> (i32, i32) {
    %c0_i32 = arith.constant 0 : i32
    %c0_i32_0 = arith.constant 0 : i32
    %c0_i32_1 = arith.constant 0 : i32
    return %c0_i32, %c0_i32_0 : i32, i32
  }
  func.func @transform_12(%arg0: i32) -> (i32, i32, i32) {
    %c0_i32 = arith.constant 0 : i32
    %c0_i32_0 = arith.constant 0 : i32
    %c0_i32_1 = arith.constant 0 : i32
    return %arg0, %c0_i32, %c0_i32_0 : i32, i32, i32
  }
}

</mosaic_0001>

<llo_original>
// kernel: tpu_custom_call.1
$region0: #{tpu_custom_call.1}
  #allocation0 [shape = 'u32[]', space=smem, size = 0x4, offset = 0x4, fixed_abs, tag = 'smem constant byte address 0x4 - core index']
  #allocation1 [shape = 'u32[144,128]{1,0:T(1,128)}', space=vmem, size = 0x12000, scoped, tag = 'internal scratch']
  #allocation2 [shape = 'bf16[8,32]{1,0:T(8,128)(2,1)}', space=vmem, size = 0x800, scoped, tag = 'scratch operand']
  %s0 = inlined_call_operand.vmem [shape: f32[2,8,32], index: 0, kind: input, shape index: {}]
  %s1 = inlined_call_operand.vmem [shape: f32[8,4], index: 1, kind: input, shape index: {}]
  %s2 = inlined_call_operand.vmem [shape: f32[8,4], index: 2, kind: input, shape index: {}]
  %s3 = inlined_call_operand.vmem [shape: f32[1,32], index: 3, kind: input, shape index: {}]
  %s4 = inlined_call_operand.vmem [shape: f32[1,32], index: 4, kind: input, shape index: {}]
  %s5 = inlined_call_operand.vmem [shape: bf16[32,32], index: 5, kind: input, shape index: {}]
  %s6 = inlined_call_operand.vmem [shape: bf16[32,16], index: 6, kind: input, shape index: {}]
  %s7 = inlined_call_operand.vmem [shape: bf16[32,16], index: 7, kind: input, shape index: {}]
  %s8 = inlined_call_operand.vmem [shape: bf16[32,32], index: 8, kind: input, shape index: {}]
  %s9 = inlined_call_operand.vmem [shape: bf16[32,64], index: 9, kind: input, shape index: {}]
  %s10 = inlined_call_operand.vmem [shape: bf16[64,32], index: 10, kind: input, shape index: {}]
  %s11 = inlined_call_operand.vmem [shape: bf16[32,64], index: 11, kind: input, shape index: {}]
  %s12 = inlined_call_operand.hbm [shape: f32[2,8,32], index: 12, kind: output, shape index: {}]
  %s13 = sld [smem:[#allocation0]]
  $region81: #{tpu_custom_call.1} parent=0
    _
  %s15 = ssub.s32 1, %s13
  %s16 = scalar_select 0, %s15, %s13
  $region1: #{tpu_custom_call.1} parent=0
    #allocation3 [shape = 'u8[8192]{0}', space=vmem, size = 0x2000, scoped, tag = 'output window, operand 0']
    #allocation4 [shape = 's32[2]{0}', space=sflag, size = 0x8, scoped, tag = 'scoped memory for tpu_custom_call.1']
    %17 = vsyncpa [#allocation4], 0
    %s18 = scalar_lea.sflag [#allocation4], 1
    %19 = vsyncpa %s18, 0
    loop: start=0, step=1, limit=4
    $region2: #{tpu_custom_call.1} parent=1 // loop_pre_header
      _
    $region3: #{tpu_custom_call.1} parent=1 // loop_header
      %s21 = sphi 0, %s25
      %p22 = scmp.ge.s32.totalorder %s21, 4
      %s31 = sphi 0, %s33
      %s34 = sphi 0, %s31
      %s35 = sphi 0, %s34
      %s51 = sphi 0, %s35
      %s55 = sphi 0, %s55
      %s57 = sphi 0, %s55
      %s58 = sphi 0, %s57
      %s72 = sphi 0, %s58
      %s76 = sphi 0, %s76
      %s78 = sphi 0, %s76
      %s79 = sphi 0, %s78
      %s93 = sphi 0, %s79
      %s97 = sphi 0, %s97
      %s99 = sphi 0, %s97
      %s100 = sphi 0, %s99
      %s114 = sphi 0, %s100
      %s118 = sphi 0, %s118
      %s120 = sphi 0, %s118
      %s121 = sphi 0, %s120
      %s135 = sphi 0, %s121
      %s139 = sphi 0, %s139
      %s141 = sphi 0, %s139
      %s142 = sphi 0, %s141
      %s156 = sphi 0, %s142
      %s160 = sphi 0, %s160
      %s162 = sphi 0, %s160
      %s163 = sphi 0, %s162
      %s177 = sphi 0, %s163
      %s181 = sphi 0, %s181
      %s183 = sphi 0, %s181
      %s184 = sphi 0, %s183
      %s198 = sphi 0, %s184
      %s202 = sphi 0, %s202
      %s204 = sphi 0, %s202
      %s205 = sphi 0, %s204
      %s219 = sphi 0, %s205
      %s223 = sphi 0, %s223
      %s225 = sphi 0, %s223
      %s226 = sphi 0, %s225
      %s240 = sphi 0, %s226
      %s244 = sphi 0, %s244
      %s246 = sphi 0, %s244
      %s247 = sphi 0, %s246
      %s261 = sphi 0, %s247
      %s265 = sphi 0, %s265
      %s267 = sphi 0, %s265
      %s268 = sphi 0, %s267
      %s282 = sphi 0, %s268
      %s288 = sphi 0, %s290
      %s291 = sphi 0, %s288
      %s292 = sphi 0, %s291
      %s308 = sphi 0, %s292
    $region4: #{tpu_custom_call.1} parent=1 // loop_header_branch
      %24 = sbr.rel (%p22) target = $region8
    $region5: #{tpu_custom_call.1} parent=1 // loop_body
      %s26 = ssub.s32 %s21, 1
      %s27 = ssub.s32 %s21, 2
      %s28 = sadd.s32 %s21, 1
      %s29 = ssub.s32 %s21, %s28
      %p30 = scmp.eq.s32.totalorder %s29, 0
      %s32 = sadd.s32 %s31, 1
      %s33 = scalar_select %p30, %s31, %s32
      %p36 = pneg %p30
      %p37 = scmp.eq.s32.totalorder %s21, 1
      %p38 = por %p36, %p37
      %p39 = scmp.ne.s32.totalorder %s31, %s34
      %p40 = scmp.eq.s32.totalorder %s21, 0
      %p41 = por %p39, %p40
      %p42 = scmp.ne.s32.totalorder %s31, %s34
      %p43 = scmp.eq.s32.totalorder %s26, 1
      %p44 = por %p42, %p43
      %p45 = scmp.ne.s32.totalorder %s34, %s35
      %p46 = scmp.eq.s32.totalorder %s26, 0
      %p47 = por %p45, %p46
      %p48 = scmp.ne.s32.totalorder %s34, %s35
      %p49 = scmp.eq.s32.totalorder %s27, 1
      %p50 = por %p48, %p49
      %p52 = scmp.ne.s32.totalorder %s35, %s51
      %p53 = scmp.eq.s32.totalorder %s27, 0
      %p54 = por %p52, %p53
      %s56 = sadd.s32 %s55, 1
      %p59 = scmp.eq.s32.totalorder %s21, 1
      %p60 = scmp.ne.s32.totalorder %s55, %s57
      %p61 = scmp.eq.s32.totalorder %s21, 0
      %p62 = por %p60, %p61
      %p63 = scmp.ne.s32.totalorder %s55, %s57
      %p64 = scmp.eq.s32.totalorder %s26, 1
      %p65 = por %p63, %p64
      %p66 = scmp.ne.s32.totalorder %s57, %s58
      %p67 = scmp.eq.s32.totalorder %s26, 0
      %p68 = por %p66, %p67
      %p69 = scmp.ne.s32.totalorder %s57, %s58
      %p70 = scmp.eq.s32.totalorder %s27, 1
      %p71 = por %p69, %p70
      %p73 = scmp.ne.s32.totalorder %s58, %s72
      %p74 = scmp.eq.s32.totalorder %s27, 0
      %p75 = por %p73, %p74
      %s77 = sadd.s32 %s76, 1
      %p80 = scmp.eq.s32.totalorder %s21, 1
      %p81 = scmp.ne.s32.totalorder %s76, %s78
      %p82 = scmp.eq.s32.totalorder %s21, 0
      %p83 = por %p81, %p82
      %p84 = scmp.ne.s32.totalorder %s76, %s78
      %p85 = scmp.eq.s32.totalorder %s26, 1
      %p86 = por %p84, %p85
      %p87 = scmp.ne.s32.totalorder %s78, %s79
      %p88 = scmp.eq.s32.totalorder %s26, 0
      %p89 = por %p87, %p88
      %p90 = scmp.ne.s32.totalorder %s78, %s79
      %p91 = scmp.eq.s32.totalorder %s27, 1
      %p92 = por %p90, %p91
      %p94 = scmp.ne.s32.totalorder %s79, %s93
      %p95 = scmp.eq.s32.totalorder %s27, 0
      %p96 = por %p94, %p95
      %s98 = sadd.s32 %s97, 1
      %p101 = scmp.eq.s32.totalorder %s21, 1
      %p102 = scmp.ne.s32.totalorder %s97, %s99
      %p103 = scmp.eq.s32.totalorder %s21, 0
      %p104 = por %p102, %p103
      %p105 = scmp.ne.s32.totalorder %s97, %s99
      %p106 = scmp.eq.s32.totalorder %s26, 1
      %p107 = por %p105, %p106
      %p108 = scmp.ne.s32.totalorder %s99, %s100
      %p109 = scmp.eq.s32.totalorder %s26, 0
      %p110 = por %p108, %p109
      %p111 = scmp.ne.s32.totalorder %s99, %s100
      %p112 = scmp.eq.s32.totalorder %s27, 1
      %p113 = por %p111, %p112
      %p115 = scmp.ne.s32.totalorder %s100, %s114
      %p116 = scmp.eq.s32.totalorder %s27, 0
      %p117 = por %p115, %p116
      %s119 = sadd.s32 %s118, 1
      %p122 = scmp.eq.s32.totalorder %s21, 1
      %p123 = scmp.ne.s32.totalorder %s118, %s120
      %p124 = scmp.eq.s32.totalorder %s21, 0
      %p125 = por %p123, %p124
      %p126 = scmp.ne.s32.totalorder %s118, %s120
      %p127 = scmp.eq.s32.totalorder %s26, 1
      %p128 = por %p126, %p127
      %p129 = scmp.ne.s32.totalorder %s120, %s121
      %p130 = scmp.eq.s32.totalorder %s26, 0
      %p131 = por %p129, %p130
      %p132 = scmp.ne.s32.totalorder %s120, %s121
      %p133 = scmp.eq.s32.totalorder %s27, 1
      %p134 = por %p132, %p133
      %p136 = scmp.ne.s32.totalorder %s121, %s135
      %p137 = scmp.eq.s32.totalorder %s27, 0
      %p138 = por %p136, %p137
      %s140 = sadd.s32 %s139, 1
      %p143 = scmp.eq.s32.totalorder %s21, 1
      %p144 = scmp.ne.s32.totalorder %s139, %s141
      %p145 = scmp.eq.s32.totalorder %s21, 0
      %p146 = por %p144, %p145
      %p147 = scmp.ne.s32.totalorder %s139, %s141
      %p148 = scmp.eq.s32.totalorder %s26, 1
      %p149 = por %p147, %p148
      %p150 = scmp.ne.s32.totalorder %s141, %s142
      %p151 = scmp.eq.s32.totalorder %s26, 0
      %p152 = por %p150, %p151
      %p153 = scmp.ne.s32.totalorder %s141, %s142
      %p154 = scmp.eq.s32.totalorder %s27, 1
      %p155 = por %p153, %p154
      %p157 = scmp.ne.s32.totalorder %s142, %s156
      %p158 = scmp.eq.s32.totalorder %s27, 0
      %p159 = por %p157, %p158
      %s161 = sadd.s32 %s160, 1
      %p164 = scmp.eq.s32.totalorder %s21, 1
      %p165 = scmp.ne.s32.totalorder %s160, %s162
      %p166 = scmp.eq.s32.totalorder %s21, 0
      %p167 = por %p165, %p166
      %p168 = scmp.ne.s32.totalorder %s160, %s162
      %p169 = scmp.eq.s32.totalorder %s26, 1
      %p170 = por %p168, %p169
      %p171 = scmp.ne.s32.totalorder %s162, %s163
      %p172 = scmp.eq.s32.totalorder %s26, 0
      %p173 = por %p171, %p172
      %p174 = scmp.ne.s32.totalorder %s162, %s163
      %p175 = scmp.eq.s32.totalorder %s27, 1
      %p176 = por %p174, %p175
      %p178 = scmp.ne.s32.totalorder %s163, %s177
      %p179 = scmp.eq.s32.totalorder %s27, 0
      %p180 = por %p178, %p179
      %s182 = sadd.s32 %s181, 1
      %p185 = scmp.eq.s32.totalorder %s21, 1
      %p186 = scmp.ne.s32.totalorder %s181, %s183
      %p187 = scmp.eq.s32.totalorder %s21, 0
      %p188 = por %p186, %p187
      %p189 = scmp.ne.s32.totalorder %s181, %s183
      %p190 = scmp.eq.s32.totalorder %s26, 1
      %p191 = por %p189, %p190
      %p192 = scmp.ne.s32.totalorder %s183, %s184
      %p193 = scmp.eq.s32.totalorder %s26, 0
      %p194 = por %p192, %p193
      %p195 = scmp.ne.s32.totalorder %s183, %s184
      %p196 = scmp.eq.s32.totalorder %s27, 1
      %p197 = por %p195, %p196
      %p199 = scmp.ne.s32.totalorder %s184, %s198
      %p200 = scmp.eq.s32.totalorder %s27, 0
      %p201 = por %p199, %p200
      %s203 = sadd.s32 %s202, 1
      %p206 = scmp.eq.s32.totalorder %s21, 1
      %p207 = scmp.ne.s32.totalorder %s202, %s204
      %p208 = scmp.eq.s32.totalorder %s21, 0
      %p209 = por %p207, %p208
      %p210 = scmp.ne.s32.totalorder %s202, %s204
      %p211 = scmp.eq.s32.totalorder %s26, 1
      %p212 = por %p210, %p211
      %p213 = scmp.ne.s32.totalorder %s204, %s205
      %p214 = scmp.eq.s32.totalorder %s26, 0
      %p215 = por %p213, %p214
      %p216 = scmp.ne.s32.totalorder %s204, %s205
      %p217 = scmp.eq.s32.totalorder %s27, 1
      %p218 = por %p216, %p217
      %p220 = scmp.ne.s32.totalorder %s205, %s219
      %p221 = scmp.eq.s32.totalorder %s27, 0
      %p222 = por %p220, %p221
      %s224 = sadd.s32 %s223, 1
      %p227 = scmp.eq.s32.totalorder %s21, 1
      %p228 = scmp.ne.s32.totalorder %s223, %s225
      %p229 = scmp.eq.s32.totalorder %s21, 0
      %p230 = por %p228, %p229
      %p231 = scmp.ne.s32.totalorder %s223, %s225
      %p232 = scmp.eq.s32.totalorder %s26, 1
      %p233 = por %p231, %p232
      %p234 = scmp.ne.s32.totalorder %s225, %s226
      %p235 = scmp.eq.s32.totalorder %s26, 0
      %p236 = por %p234, %p235
      %p237 = scmp.ne.s32.totalorder %s225, %s226
      %p238 = scmp.eq.s32.totalorder %s27, 1
      %p239 = por %p237, %p238
      %p241 = scmp.ne.s32.totalorder %s226, %s240
      %p242 = scmp.eq.s32.totalorder %s27, 0
      %p243 = por %p241, %p242
      %s245 = sadd.s32 %s244, 1
      %p248 = scmp.eq.s32.totalorder %s21, 1
      %p249 = scmp.ne.s32.totalorder %s244, %s246
      %p250 = scmp.eq.s32.totalorder %s21, 0
      %p251 = por %p249, %p250
      %p252 = scmp.ne.s32.totalorder %s244, %s246
      %p253 = scmp.eq.s32.totalorder %s26, 1
      %p254 = por %p252, %p253
      %p255 = scmp.ne.s32.totalorder %s246, %s247
      %p256 = scmp.eq.s32.totalorder %s26, 0
      %p257 = por %p255, %p256
      %p258 = scmp.ne.s32.totalorder %s246, %s247
      %p259 = scmp.eq.s32.totalorder %s27, 1
      %p260 = por %p258, %p259
      %p262 = scmp.ne.s32.totalorder %s247, %s261
      %p263 = scmp.eq.s32.totalorder %s27, 0
      %p264 = por %p262, %p263
      %s266 = sadd.s32 %s265, 1
      %p269 = scmp.eq.s32.totalorder %s21, 1
      %p270 = scmp.ne.s32.totalorder %s265, %s267
      %p271 = scmp.eq.s32.totalorder %s21, 0
      %p272 = por %p270, %p271
      %p273 = scmp.ne.s32.totalorder %s265, %s267
      %p274 = scmp.eq.s32.totalorder %s26, 1
      %p275 = por %p273, %p274
      %p276 = scmp.ne.s32.totalorder %s267, %s268
      %p277 = scmp.eq.s32.totalorder %s26, 0
      %p278 = por %p276, %p277
      %p279 = scmp.ne.s32.totalorder %s267, %s268
      %p280 = scmp.eq.s32.totalorder %s27, 1
      %p281 = por %p279, %p280
      %p283 = scmp.ne.s32.totalorder %s268, %s282
      %p284 = scmp.eq.s32.totalorder %s27, 0
      %p285 = por %p283, %p284
      %s286 = ssub.s32 %s21, %s28
      %p287 = scmp.eq.s32.totalorder %s286, 0
      %s289 = sadd.s32 %s288, 1
      %s290 = scalar_select %p287, %s288, %s289
      %p293 = pneg %p287
      %p294 = scmp.eq.s32.totalorder %s21, 1
      %p295 = por %p293, %p294
      %p296 = scmp.ne.s32.totalorder %s288, %s291
      %p297 = scmp.eq.s32.totalorder %s21, 0
      %p298 = por %p296, %p297
      %p299 = scmp.ne.s32.totalorder %s288, %s291
      %p300 = scmp.eq.s32.totalorder %s26, 1
      %p301 = por %p299, %p300
      %p302 = scmp.ne.s32.totalorder %s291, %s292
      %p303 = scmp.eq.s32.totalorder %s26, 0
      %p304 = por %p302, %p303
      %p305 = scmp.ne.s32.totalorder %s291, %s292
      %p306 = scmp.eq.s32.totalorder %s27, 1
      %p307 = por %p305, %p306
      %p309 = scmp.ne.s32.totalorder %s292, %s308
      %p310 = scmp.eq.s32.totalorder %s27, 0
      %p311 = por %p309, %p310
      %p312 = scmp.le.s32.totalorder 1, %s21
      %p313 = scmp.lt.s32.totalorder %s21, 3
      %p314 = pnand %p312, %p313
      %p315 = pneg %p314
      // Predicated region
      $region9: #{tpu_custom_call.1} parent=5 // pred_check
        _
      $region10: #{tpu_custom_call.1} parent=5 // pred_check_branch
        %317 = sbr.rel (%p314) target = $region12
      $region11: #{tpu_custom_call.1} parent=5 // pred_region
        %s318 = ssub.s32 %s21, 1
        // Predicated region
        $region13: #{tpu_custom_call.1} parent=11 // pred_check
          %p319 = pneg %p68
        $region14: #{tpu_custom_call.1} parent=11 // pred_check_branch
          %321 = sbr.rel (%p319) target = $region16
        $region15: #{tpu_custom_call.1} parent=11 // pred_region
          _
        $region16: #{tpu_custom_call.1} parent=11 // pred_fallthru
          _
        // Predicated region
        $region17: #{tpu_custom_call.1} parent=11 // pred_check
          %p322 = pneg %p89
        $region18: #{tpu_custom_call.1} parent=11 // pred_check_branch
          %324 = sbr.rel (%p322) target = $region20
        $region19: #{tpu_custom_call.1} parent=11 // pred_region
          _
        $region20: #{tpu_custom_call.1} parent=11 // pred_fallthru
          _
        // Predicated region
        $region21: #{tpu_custom_call.1} parent=11 // pred_check
          %p325 = pneg %p110
        $region22: #{tpu_custom_call.1} parent=11 // pred_check_branch
          %327 = sbr.rel (%p325) target = $region24
        $region23: #{tpu_custom_call.1} parent=11 // pred_region
          _
        $region24: #{tpu_custom_call.1} parent=11 // pred_fallthru
          _
        // Predicated region
        $region25: #{tpu_custom_call.1} parent=11 // pred_check
          %p328 = pneg %p131
        $region26: #{tpu_custom_call.1} parent=11 // pred_check_branch
          %330 = sbr.rel (%p328) target = $region28
        $region27: #{tpu_custom_call.1} parent=11 // pred_region
          _
        $region28: #{tpu_custom_call.1} parent=11 // pred_fallthru
          _
        // Predicated region
        $region29: #{tpu_custom_call.1} parent=11 // pred_check
          %p331 = pneg %p152
        $region30: #{tpu_custom_call.1} parent=11 // pred_check_branch
          %333 = sbr.rel (%p331) target = $region32
        $region31: #{tpu_custom_call.1} parent=11 // pred_region
          _
        $region32: #{tpu_custom_call.1} parent=11 // pred_fallthru
          _
        // Predicated region
        $region33: #{tpu_custom_call.1} parent=11 // pred_check
          %p334 = pneg %p173
        $region34: #{tpu_custom_call.1} parent=11 // pred_check_branch
          %336 = sbr.rel (%p334) target = $region36
        $region35: #{tpu_custom_call.1} parent=11 // pred_region
          _
        $region36: #{tpu_custom_call.1} parent=11 // pred_fallthru
          _
        // Predicated region
        $region37: #{tpu_custom_call.1} parent=11 // pred_check
          %p337 = pneg %p194
        $region38: #{tpu_custom_call.1} parent=11 // pred_check_branch
          %339 = sbr.rel (%p337) target = $region40
        $region39: #{tpu_custom_call.1} parent=11 // pred_region
          _
        $region40: #{tpu_custom_call.1} parent=11 // pred_fallthru
          _
        // Predicated region
        $region41: #{tpu_custom_call.1} parent=11 // pred_check
          %p340 = pneg %p215
        $region42: #{tpu_custom_call.1} parent=11 // pred_check_branch
          %342 = sbr.rel (%p340) target = $region44
        $region43: #{tpu_custom_call.1} parent=11 // pred_region
          _
        $region44: #{tpu_custom_call.1} parent=11 // pred_fallthru
          _
        // Predicated region
        $region45: #{tpu_custom_call.1} parent=11 // pred_check
          %p343 = pneg %p236
        $region46: #{tpu_custom_call.1} parent=11 // pred_check_branch
          %345 = sbr.rel (%p343) target = $region48
        $region47: #{tpu_custom_call.1} parent=11 // pred_region
          _
        $region48: #{tpu_custom_call.1} parent=11 // pred_fallthru
          _
        // Predicated region
        $region49: #{tpu_custom_call.1} parent=11 // pred_check
          %p346 = pneg %p257
        $region50: #{tpu_custom_call.1} parent=11 // pred_check_branch
          %348 = sbr.rel (%p346) target = $region52
        $region51: #{tpu_custom_call.1} parent=11 // pred_region
          _
        $region52: #{tpu_custom_call.1} parent=11 // pred_fallthru
          _
        // Predicated region
        $region53: #{tpu_custom_call.1} parent=11 // pred_check
          %p349 = pneg %p278
        $region54: #{tpu_custom_call.1} parent=11 // pred_check_branch
          %351 = sbr.rel (%p349) target = $region56
        $region55: #{tpu_custom_call.1} parent=11 // pred_region
          _
        $region56: #{tpu_custom_call.1} parent=11 // pred_fallthru
          _
      $region12: #{tpu_custom_call.1} parent=5 // pred_fallthru
        _
      %p352 = scmp.lt.s32.totalorder %s21, 2
      // Predicated region
      $region57: #{tpu_custom_call.1} parent=5 // pred_check
        %p353 = pneg %p352
      $region58: #{tpu_custom_call.1} parent=5 // pred_check_branch
        %355 = sbr.rel (%p353) target = $region60
      $region59: #{tpu_custom_call.1} parent=5 // pred_region
        // Predicated region
        $region61: #{tpu_custom_call.1} parent=59 // pred_check
          %p356 = pneg %p41
        $region62: #{tpu_custom_call.1} parent=59 // pred_check_branch
          %358 = sbr.rel (%p356) target = $region64
        $region63: #{tpu_custom_call.1} parent=59 // pred_region
          %p359 = scmp.lt.s32.totalorder %s21, 1
          %s360 = scalar_select %p359, %s21, 1
          %s361 = smul.addr %s360, 8
          %s362 = scalar_lea.vmem %s0, %s361
        $region64: #{tpu_custom_call.1} parent=59 // pred_fallthru
          _
      $region60: #{tpu_custom_call.1} parent=5 // pred_fallthru
        _
      %p363 = scmp.le.s32.totalorder 1, %s21
      %p364 = scmp.lt.s32.totalorder %s21, 3
      %p365 = pnand %p363, %p364
      %p366 = pneg %p365
      // Predicated region
      $region65: #{tpu_custom_call.1} parent=5 // pred_check
        _
      $region66: #{tpu_custom_call.1} parent=5 // pred_check_branch
        %368 = sbr.rel (%p365) target = $region68
      $region67: #{tpu_custom_call.1} parent=5 // pred_region
        %s369 = ssub.s32 %s21, 1
        %p370 = scmp.lt.s32.totalorder %s26, 1
        %s371 = scalar_select %p370, %s26, 1
        %s372 = smul.addr %s371, 8
        %s373 = scalar_lea.vmem %s0, %s372
        %p374 = pneg %p47
        %p375 = pneg %p44
        %p376 = pneg %p68
        %p377 = pneg %p65
        %p378 = pneg %p89
        %p379 = pneg %p86
        %p380 = pneg %p110
        %p381 = pneg %p107
        %p382 = pneg %p131
        %p383 = pneg %p128
        %p384 = pneg %p152
        %p385 = pneg %p149
        %p386 = pneg %p173
        %p387 = pneg %p170
        %p388 = pneg %p194
        %p389 = pneg %p191
        %p390 = pneg %p215
        %p391 = pneg %p212
        %p392 = pneg %p236
        %p393 = pneg %p233
        %p394 = pneg %p257
        %p395 = pneg %p254
        %p396 = pneg %p278
        %p397 = pneg %p275
        %p398 = pneg %p304
        %p399 = pneg %p301
        %s400 = sand.u32 %s291, 1
        %s401 = scalar_lea.sflag [#allocation4], %s400
        %s402 = sand.u32 %s291, 1
        %s403 = smul.addr %s402, 8
        %s404 = scalar_lea.vmem [#allocation3], %s403
        %p405 = scmp.lt.s32.totalorder %s26, 1
        %s406 = scalar_select %p405, %s26, 1
        %s407 = smul.addr %s406, 8
        %s408 = scalar_lea.vmem %s0, %s407
        %v410 = vld [vmem:[%s408] sm:$0xff]
        %v411 = vlaneseq
        %v412 = vshrl.u32 %v411, 7
        %v413 = vlaneseq
        %v414 = vand.u32 %v413, 127
        %vm415 = vcmp.ge.s32.totalorder %v412, %v414
        %v416 = vsel %vm415, 0.0, -1e+30
        %v417 = vld [vmem:[%s1] sm:$0xff]
        %v418 = vld [vmem:[%s2] sm:$0xff]
        %v419 = vld [vmem:[%s3] sm:$0x1]
        %v420 = vmul.f32 %v410, %v410
        %vm421 = vcmask 261120
        %v422 = vsel %vm421, %v420, 0.0
        %423 = vadd.xlane.f32.xlu0 %v422
        %v424 = vpop.xlane.xlu0 %423
        %v425 = vrcp.pop 32.0
        %v426 = vmul.f32 %v424, %v425
        %v427 = vadd.f32 %v426, 1e-05
        %v428 = vrsqrt.pop %v427
        %v429 = vmul.f32 %v410, %v428
        %v431 = vlaneseq
        %v432 = vshrl.u32 %v431, 7
        %v433 = vsub.s32 0, %v432
        %v434 = vrot.slane %v419, %v433
        %v436 = vmul.f32 %v429, %v434
        %v437 = vpack.c.bf16 %v436, %v436
        %v438 = vld [vmem:[%s5] sm:$0xf]
        %v439 = vld [vmem:[%s5 + $0x4] sm:$0xf]
        %v440 = vld [vmem:[%s5 + $0x8] sm:$0xf]
        %v441 = vld [vmem:[%s5 + $0xc] sm:$0xf]
        %v446 = vunpack.c.l.b16 %v438
        %v447 = vunpack.c.l.b16 %v439
        %v448 = vunpack.c.l.b16 %v440
        %v449 = vunpack.c.l.b16 %v441
        %v450 = vpack.c.b16 %v447, %v446
        %v451 = vpack.c.b16 %v449, %v448
        %v455 = vsel %vm421, %v437, 0
        %457 = vmatprep.subr.bf16.mxu0 0
        %458 = vmatpush1.bf16.msra.mxu0 %v450
        %459 = vmatprep.subr.bf16.mxu0 0
        %460 = vmatpush1.bf16.msra.mxu0 %v451
        %461 = vmatprep.subr.bf16.mxu0 0
        %462 = vmatpush1.bf16.msra.mxu0 0
        %463 = vmatprep.subr.bf16.mxu0 0
        %464 = vmatpush1.bf16.msra.mxu0 0
        %465 = vmatprep.subr.bf16.mxu0 0
        %466 = vmatpush1.bf16.msra.mxu0 0
        %467 = vmatprep.subr.bf16.mxu0 0
        %468 = vmatpush1.bf16.msra.mxu0 0
        %469 = vmatprep.subr.bf16.mxu0 0
        %470 = vmatpush1.bf16.msra.mxu0 0
        %471 = vmatprep.subr.bf16.mxu0 0
        %472 = vmatpush1.bf16.msra.mxu0 0
        %473 = vmatprep.subr.bf16.mxu0 0
        %474 = vmatpush1.bf16.msra.mxu0 0
        %475 = vmatprep.subr.bf16.mxu0 0
        %476 = vmatpush1.bf16.msra.mxu0 0
        %477 = vmatprep.subr.bf16.mxu0 0
        %478 = vmatpush1.bf16.msra.mxu0 0
        %479 = vmatprep.subr.bf16.mxu0 0
        %480 = vmatpush1.bf16.msra.mxu0 0
        %481 = vmatprep.subr.bf16.mxu0 0
        %482 = vmatpush1.bf16.msra.mxu0 0
        %483 = vmatprep.subr.bf16.mxu0 0
        %484 = vmatpush1.bf16.msra.mxu0 0
        %485 = vmatprep.subr.bf16.mxu0 0
        %486 = vmatpush1.bf16.msra.mxu0 0
        %487 = vmatprep.subr.bf16.mxu0 0
        %488 = vmatpush1.bf16.msra.mxu0 0
        %489 = vmatprep.mubr.bf16.mxu0 0
        %490 = vmatmul.mubr.bf16.gmra.mrb[0].mxu0 %v455
        %v491 = vpop.f32.mrb[0].mxu0
        %v492 = vadd.f32 0.0, %v491
        %v493 = vpop.f32.mrb[0].mxu0
        %v494 = vpop.f32.mrb[0].mxu0
        %v495 = vpop.f32.mrb[0].mxu0
        %496 = vdwg.mxu0
        %v497 = vld [vmem:[%s6] sm:$0xf]
        %v498 = vld [vmem:[%s6 + $0x4] sm:$0xf]
        %v499 = vld [vmem:[%s6 + $0x8] sm:$0xf]
        %v500 = vld [vmem:[%s6 + $0xc] sm:$0xf]
        %v505 = vunpack.c.l.b16 %v497
        %v506 = vunpack.c.l.b16 %v498
        %v507 = vunpack.c.l.b16 %v499
        %v508 = vunpack.c.l.b16 %v500
        %v509 = vpack.c.b16 %v506, %v505
        %v510 = vpack.c.b16 %v508, %v507
        %513 = vmatprep.subr.bf16.mxu0 0
        %514 = vmatpush1.bf16.msra.mxu0 %v509
        %515 = vmatprep.subr.bf16.mxu0 0
        %516 = vmatpush1.bf16.msra.mxu0 %v510
        %517 = vmatprep.subr.bf16.mxu0 0
        %518 = vmatpush1.bf16.msra.mxu0 0
        %519 = vmatprep.subr.bf16.mxu0 0
        %520 = vmatpush1.bf16.msra.mxu0 0
        %521 = vmatprep.subr.bf16.mxu0 0
        %522 = vmatpush1.bf16.msra.mxu0 0
        %523 = vmatprep.subr.bf16.mxu0 0
        %524 = vmatpush1.bf16.msra.mxu0 0
        %525 = vmatprep.subr.bf16.mxu0 0
        %526 = vmatpush1.bf16.msra.mxu0 0
        %527 = vmatprep.subr.bf16.mxu0 0
        %528 = vmatpush1.bf16.msra.mxu0 0
        %529 = vmatprep.subr.bf16.mxu0 0
        %530 = vmatpush1.bf16.msra.mxu0 0
        %531 = vmatprep.subr.bf16.mxu0 0
        %532 = vmatpush1.bf16.msra.mxu0 0
        %533 = vmatprep.subr.bf16.mxu0 0
        %534 = vmatpush1.bf16.msra.mxu0 0
        %535 = vmatprep.subr.bf16.mxu0 0
        %536 = vmatpush1.bf16.msra.mxu0 0
        %537 = vmatprep.subr.bf16.mxu0 0
        %538 = vmatpush1.bf16.msra.mxu0 0
        %539 = vmatprep.subr.bf16.mxu0 0
        %540 = vmatpush1.bf16.msra.mxu0 0
        %541 = vmatprep.subr.bf16.mxu0 0
        %542 = vmatpush1.bf16.msra.mxu0 0
        %543 = vmatprep.subr.bf16.mxu0 0
        %544 = vmatpush1.bf16.msra.mxu0 0
        %545 = vmatprep.mubr.bf16.mxu0 0
        %546 = vmatmul.mubr.bf16.gmra.mrb[0].mxu0 %v455
        %v547 = vpop.f32.mrb[0].mxu0
        %v548 = vadd.f32 0.0, %v547
        %v549 = vpop.f32.mrb[0].mxu0
        %v550 = vpop.f32.mrb[0].mxu0
        %v551 = vpop.f32.mrb[0].mxu0
        %552 = vdwg.mxu0
        %v553 = vld [vmem:[%s7] sm:$0xf]
        %v554 = vld [vmem:[%s7 + $0x4] sm:$0xf]
        %v555 = vld [vmem:[%s7 + $0x8] sm:$0xf]
        %v556 = vld [vmem:[%s7 + $0xc] sm:$0xf]
        %v561 = vunpack.c.l.b16 %v553
        %v562 = vunpack.c.l.b16 %v554
        %v563 = vunpack.c.l.b16 %v555
        %v564 = vunpack.c.l.b16 %v556
        %v565 = vpack.c.b16 %v562, %v561
        %v566 = vpack.c.b16 %v564, %v563
        %569 = vmatprep.subr.bf16.mxu0 0
        %570 = vmatpush1.bf16.msra.mxu0 %v565
        %571 = vmatprep.subr.bf16.mxu0 0
        %572 = vmatpush1.bf16.msra.mxu0 %v566
        %573 = vmatprep.subr.bf16.mxu0 0
        %574 = vmatpush1.bf16.msra.mxu0 0
        %575 = vmatprep.subr.bf16.mxu0 0
        %576 = vmatpush1.bf16.msra.mxu0 0
        %577 = vmatprep.subr.bf16.mxu0 0
        %578 = vmatpush1.bf16.msra.mxu0 0
        %579 = vmatprep.subr.bf16.mxu0 0
        %580 = vmatpush1.bf16.msra.mxu0 0
        %581 = vmatprep.subr.bf16.mxu0 0
        %582 = vmatpush1.bf16.msra.mxu0 0
        %583 = vmatprep.subr.bf16.mxu0 0
        %584 = vmatpush1.bf16.msra.mxu0 0
        %585 = vmatprep.subr.bf16.mxu0 0
        %586 = vmatpush1.bf16.msra.mxu0 0
        %587 = vmatprep.subr.bf16.mxu0 0
        %588 = vmatpush1.bf16.msra.mxu0 0
        %589 = vmatprep.subr.bf16.mxu0 0
        %590 = vmatpush1.bf16.msra.mxu0 0
        %591 = vmatprep.subr.bf16.mxu0 0
        %592 = vmatpush1.bf16.msra.mxu0 0
        %593 = vmatprep.subr.bf16.mxu0 0
        %594 = vmatpush1.bf16.msra.mxu0 0
        %595 = vmatprep.subr.bf16.mxu0 0
        %596 = vmatpush1.bf16.msra.mxu0 0
        %597 = vmatprep.subr.bf16.mxu0 0
        %598 = vmatpush1.bf16.msra.mxu0 0
        %599 = vmatprep.subr.bf16.mxu0 0
        %600 = vmatpush1.bf16.msra.mxu0 0
        %601 = vmatprep.mubr.bf16.mxu0 0
        %602 = vmatmul.mubr.bf16.gmra.mrb[0].mxu0 %v455
        %v603 = vpop.f32.mrb[0].mxu0
        %v604 = vadd.f32 0.0, %v603
        %v605 = vpop.f32.mrb[0].mxu0
        %v606 = vpop.f32.mrb[0].mxu0
        %v607 = vpop.f32.mrb[0].mxu0
        %608 = vdwg.mxu0
        %v609 = vmul.f32 %v548, %v417
        %611 = vrot.lane.b32.xlu0 %v418, 4
        %v612 = vpop.permute.xlu0 %611
        %v614 = vmul.f32 %v548, %v612
        %616 = vrot.lane.b32.xlu0 %v614, 124
        %v617 = vpop.permute.xlu0 %616
        %v619 = vsub.f32 %v609, %v617
        %621 = vrot.lane.b32.xlu0 %v417, 4
        %v622 = vpop.permute.xlu0 %621
        %v624 = vmul.f32 %v548, %v622
        %v625 = vmul.f32 %v548, %v418
        %627 = vrot.lane.b32.xlu0 %v625, 4
        %v628 = vpop.permute.xlu0 %627
        %v630 = vadd.f32 %v624, %v628
        %vm631 = vcmask 31744
        %v632 = vsel %vm631, %v619, %v630
        %v633 = vpack.c.bf16 %v632, %v632
        %v634 = vpack.c.bf16 %v604, %v604
        %v635 = vmul.f32 %v492, %v417
        %v636 = vmul.f32 %v492, %v612
        %638 = vrot.lane.b32.xlu0 %v636, 124
        %v639 = vpop.permute.xlu0 %638
        %v641 = vsub.f32 %v635, %v639
        %v642 = vmul.f32 %v492, %v622
        %v643 = vmul.f32 %v492, %v418
        %645 = vrot.lane.b32.xlu0 %v643, 4
        %v646 = vpop.permute.xlu0 %645
        %v648 = vadd.f32 %v642, %v646
        %v649 = vsel %vm631, %v641, %v648
        %650 = vrot.lane.b32.xlu0 %v417, 8
        %v651 = vpop.permute.xlu0 %650
        %v653 = vmul.f32 %v492, %v651
        %654 = vrot.lane.b32.xlu0 %v418, 12
        %v655 = vpop.permute.xlu0 %654
        %v657 = vmul.f32 %v492, %v655
        %659 = vrot.lane.b32.xlu0 %v657, 124
        %v660 = vpop.permute.xlu0 %659
        %v662 = vsub.f32 %v653, %v660
        %663 = vrot.lane.b32.xlu0 %v417, 12
        %v664 = vpop.permute.xlu0 %663
        %v666 = vmul.f32 %v492, %v664
        %667 = vrot.lane.b32.xlu0 %v418, 8
        %v668 = vpop.permute.xlu0 %667
        %v670 = vmul.f32 %v492, %v668
        %672 = vrot.lane.b32.xlu0 %v670, 4
        %v673 = vpop.permute.xlu0 %672
        %v675 = vadd.f32 %v666, %v673
        %677 = vrot.lane.b32.xlu0 %v662, 120
        %v678 = vpop.permute.xlu0 %677
        %681 = vrot.lane.b32.xlu0 %v675, 120
        %v682 = vpop.permute.xlu0 %681
        %v684 = vsel %vm631, %v678, %v682
        %v685 = vpack.c.bf16 %v684, %v649
        %vm686 = vcmask 64512
        %v688 = vsel %vm686, %v685, 0
        %v691 = vsel %vm686, %v633, 0
        %693 = vmatprep.subr.bf16.mxu0 0
        %694 = vmatpush1.bf16.xpose.msra.mxu0 %v691
        %695 = vmatprep.subr.bf16.mxu0 0
        %696 = vmatpush1.bf16.xpose.msra.mxu0 0
        %697 = vmatprep.subr.bf16.mxu0 0
        %698 = vmatpush1.bf16.xpose.msra.mxu0 0
        %699 = vmatprep.subr.bf16.mxu0 0
        %700 = vmatpush1.bf16.xpose.msra.mxu0 0
        %701 = vmatprep.subr.bf16.mxu0 0
        %702 = vmatpush1.bf16.xpose.msra.mxu0 0
        %703 = vmatprep.subr.bf16.mxu0 0
        %704 = vmatpush1.bf16.xpose.msra.mxu0 0
        %705 = vmatprep.subr.bf16.mxu0 0
        %706 = vmatpush1.bf16.xpose.msra.mxu0 0
        %707 = vmatprep.subr.bf16.mxu0 0
        %708 = vmatpush1.bf16.xpose.msra.mxu0 0
        %709 = vmatprep.subr.bf16.mxu0 0
        %710 = vmatpush1.bf16.xpose.msra.mxu0 0
        %711 = vmatprep.subr.bf16.mxu0 0
        %712 = vmatpush1.bf16.xpose.msra.mxu0 0
        %713 = vmatprep.subr.bf16.mxu0 0
        %714 = vmatpush1.bf16.xpose.msra.mxu0 0
        %715 = vmatprep.subr.bf16.mxu0 0
        %716 = vmatpush1.bf16.xpose.msra.mxu0 0
        %717 = vmatprep.subr.bf16.mxu0 0
        %718 = vmatpush1.bf16.xpose.msra.mxu0 0
        %719 = vmatprep.subr.bf16.mxu0 0
        %720 = vmatpush1.bf16.xpose.msra.mxu0 0
        %721 = vmatprep.subr.bf16.mxu0 0
        %722 = vmatpush1.bf16.xpose.msra.mxu0 0
        %723 = vmatprep.subr.bf16.mxu0 0
        %724 = vmatpush1.bf16.xpose.msra.mxu0 0
        %725 = vmatprep.mubr.bf16.mxu0 0
        %726 = vmatmul.mubr.bf16.gmra.mrb[0].mxu0 %v688
        %v727 = vpop.f32.mrb[0].mxu0
        %v728 = vadd.f32 %v416, %v727
        %v729 = vpop.f32.mrb[0].mxu0
        %v730 = vpop.f32.mrb[0].mxu0
        %v731 = vadd.f32 %v416, %v730
        %v732 = vpop.f32.mrb[0].mxu0
        %733 = vdwg.mxu0
        %v734 = vsel %vm686, %v728, -inf
        %735 = vmax.xlane.f32.xlu0 %v734
        %v736 = vpop.xlane.xlu0 %735
        %v737 = vsel %vm686, %v731, -inf
        %738 = vmax.xlane.f32.xlu0 %v737
        %v739 = vpop.xlane.xlu0 %738
        %v740 = vsub.f32 %v728, %v736
        %v741 = vsub.f32 %v731, %v739
        %v742 = vmul.f32 %v740, 1.442695
        %v743 = vpow.pop %v742
        %v744 = vmul.f32 %v741, 1.442695
        %v745 = vpow.pop %v744
        %v746 = vsel %vm686, %v743, 0.0
        %747 = vadd.xlane.f32.xlu0 %v746
        %v748 = vpop.xlane.xlu0 %747
        %v749 = vsel %vm686, %v745, 0.0
        %750 = vadd.xlane.f32.xlu0 %v749
        %v751 = vpop.xlane.xlu0 %750
        %v752 = vrcp.pop %v748
        %v753 = vrcp.pop %v751
        %v754 = vmul.f32 %v743, %v752
        %v755 = vmul.f32 %v745, %v753
        %v756 = vpack.c.bf16 %v755, %v754
        %v758 = vsel %vm686, %v756, 0
        %vm760 = vcmask 1043456
        %v762 = vsel %vm760, %v634, 0
        %764 = vmatprep.subr.bf16.mxu0 0
        %765 = vmatpush1.bf16.msra.mxu0 %v762
        %766 = vmatprep.subr.bf16.mxu0 0
        %767 = vmatpush1.bf16.msra.mxu0 0
        %768 = vmatprep.subr.bf16.mxu0 0
        %769 = vmatpush1.bf16.msra.mxu0 0
        %770 = vmatprep.subr.bf16.mxu0 0
        %771 = vmatpush1.bf16.msra.mxu0 0
        %772 = vmatprep.subr.bf16.mxu0 0
        %773 = vmatpush1.bf16.msra.mxu0 0
        %774 = vmatprep.subr.bf16.mxu0 0
        %775 = vmatpush1.bf16.msra.mxu0 0
        %776 = vmatprep.subr.bf16.mxu0 0
        %777 = vmatpush1.bf16.msra.mxu0 0
        %778 = vmatprep.subr.bf16.mxu0 0
        %779 = vmatpush1.bf16.msra.mxu0 0
        %780 = vmatprep.subr.bf16.mxu0 0
        %781 = vmatpush1.bf16.msra.mxu0 0
        %782 = vmatprep.subr.bf16.mxu0 0
        %783 = vmatpush1.bf16.msra.mxu0 0
        %784 = vmatprep.subr.bf16.mxu0 0
        %785 = vmatpush1.bf16.msra.mxu0 0
        %786 = vmatprep.subr.bf16.mxu0 0
        %787 = vmatpush1.bf16.msra.mxu0 0
        %788 = vmatprep.subr.bf16.mxu0 0
        %789 = vmatpush1.bf16.msra.mxu0 0
        %790 = vmatprep.subr.bf16.mxu0 0
        %791 = vmatpush1.bf16.msra.mxu0 0
        %792 = vmatprep.subr.bf16.mxu0 0
        %793 = vmatpush1.bf16.msra.mxu0 0
        %794 = vmatprep.subr.bf16.mxu0 0
        %795 = vmatpush1.bf16.msra.mxu0 0
        %796 = vmatprep.mubr.bf16.mxu0 0
        %797 = vmatmul.mubr.bf16.gmra.mrb[0].mxu0 %v758
        %v798 = vpop.f32.mrb[0].mxu0
        %v799 = vadd.f32 0.0, %v798
        %v800 = vpop.f32.mrb[0].mxu0
        %v801 = vpop.f32.mrb[0].mxu0
        %v802 = vadd.f32 0.0, %v801
        %v803 = vpop.f32.mrb[0].mxu0
        %804 = vdwg.mxu0
        %v805 = vpack.c.bf16 %v799, %v799
        %vm806 = vcmask 60416
        %807 = vst.msk [vmem:[#allocation2] sm:$0xf] %vm806, %v805
        %v808 = vpack.c.bf16 %v802, %v802
        %v810 = vunpack.c.l.b16 %v808
        %v811 = vpack.c.b16 %v810, %v810
        %812 = vrot.lane.b32.xlu0 %v811, 8
        %v813 = vpop.permute.xlu0 %812
        %vm815 = vcmask 126016
        %816 = vst.msk [vmem:[#allocation2] sm:$0xf] %vm815, %v813
        %v817 = vmul.f32 %v548, %v651
        %v818 = vmul.f32 %v548, %v655
        %820 = vrot.lane.b32.xlu0 %v818, 124
        %v821 = vpop.permute.xlu0 %820
        %v823 = vsub.f32 %v817, %v821
        %v824 = vmul.f32 %v548, %v664
        %v825 = vmul.f32 %v548, %v668
        %827 = vrot.lane.b32.xlu0 %v825, 4
        %v828 = vpop.permute.xlu0 %827
        %v830 = vadd.f32 %v824, %v828
        %832 = vrot.lane.b32.xlu0 %v823, 120
        %v833 = vpop.permute.xlu0 %832
        %836 = vrot.lane.b32.xlu0 %v830, 120
        %v837 = vpop.permute.xlu0 %836
        %v839 = vsel %vm631, %v833, %v837
        %v840 = vpack.c.bf16 %v839, %v839
        %841 = vrot.lane.b32.xlu0 %v417, 16
        %v842 = vpop.permute.xlu0 %841
        %v844 = vmul.f32 %v492, %v842
        %845 = vrot.lane.b32.xlu0 %v418, 20
        %v846 = vpop.permute.xlu0 %845
        %v848 = vmul.f32 %v492, %v846
        %850 = vrot.lane.b32.xlu0 %v848, 124
        %v851 = vpop.permute.xlu0 %850
        %v853 = vsub.f32 %v844, %v851
        %854 = vrot.lane.b32.xlu0 %v417, 20
        %v855 = vpop.permute.xlu0 %854
        %v857 = vmul.f32 %v492, %v855
        %858 = vrot.lane.b32.xlu0 %v418, 16
        %v859 = vpop.permute.xlu0 %858
        %v861 = vmul.f32 %v492, %v859
        %863 = vrot.lane.b32.xlu0 %v861, 4
        %v864 = vpop.permute.xlu0 %863
        %v866 = vadd.f32 %v857, %v864
        %868 = vrot.lane.b32.xlu0 %v853, 112
        %v869 = vpop.permute.xlu0 %868
        %872 = vrot.lane.b32.xlu0 %v866, 112
        %v873 = vpop.permute.xlu0 %872
        %v875 = vsel %vm631, %v869, %v873
        %876 = vrot.lane.b32.xlu0 %v417, 24
        %v877 = vpop.permute.xlu0 %876
        %v879 = vmul.f32 %v492, %v877
        %880 = vrot.lane.b32.xlu0 %v418, 28
        %v881 = vpop.permute.xlu0 %880
        %v883 = vmul.f32 %v492, %v881
        %885 = vrot.lane.b32.xlu0 %v883, 124
        %v886 = vpop.permute.xlu0 %885
        %v888 = vsub.f32 %v879, %v886
        %889 = vrot.lane.b32.xlu0 %v417, 28
        %v890 = vpop.permute.xlu0 %889
        %v892 = vmul.f32 %v492, %v890
        %893 = vrot.lane.b32.xlu0 %v418, 24
        %v894 = vpop.permute.xlu0 %893
        %v896 = vmul.f32 %v492, %v894
        %898 = vrot.lane.b32.xlu0 %v896, 4
        %v899 = vpop.permute.xlu0 %898
        %v901 = vadd.f32 %v892, %v899
        %903 = vrot.lane.b32.xlu0 %v888, 104
        %v904 = vpop.permute.xlu0 %903
        %907 = vrot.lane.b32.xlu0 %v901, 104
        %v908 = vpop.permute.xlu0 %907
        %v910 = vsel %vm631, %v904, %v908
        %v911 = vpack.c.bf16 %v910, %v875
        %v913 = vsel %vm686, %v911, 0
        %v916 = vsel %vm686, %v840, 0
        %918 = vmatprep.subr.bf16.mxu0 0
        %919 = vmatpush1.bf16.xpose.msra.mxu0 %v916
        %920 = vmatprep.subr.bf16.mxu0 0
        %921 = vmatpush1.bf16.xpose.msra.mxu0 0
        %922 = vmatprep.subr.bf16.mxu0 0
        %923 = vmatpush1.bf16.xpose.msra.mxu0 0
        %924 = vmatprep.subr.bf16.mxu0 0
        %925 = vmatpush1.bf16.xpose.msra.mxu0 0
        %926 = vmatprep.subr.bf16.mxu0 0
        %927 = vmatpush1.bf16.xpose.msra.mxu0 0
        %928 = vmatprep.subr.bf16.mxu0 0
        %929 = vmatpush1.bf16.xpose.msra.mxu0 0
        %930 = vmatprep.subr.bf16.mxu0 0
        %931 = vmatpush1.bf16.xpose.msra.mxu0 0
        %932 = vmatprep.subr.bf16.mxu0 0
        %933 = vmatpush1.bf16.xpose.msra.mxu0 0
        %934 = vmatprep.subr.bf16.mxu0 0
        %935 = vmatpush1.bf16.xpose.msra.mxu0 0
        %936 = vmatprep.subr.bf16.mxu0 0
        %937 = vmatpush1.bf16.xpose.msra.mxu0 0
        %938 = vmatprep.subr.bf16.mxu0 0
        %939 = vmatpush1.bf16.xpose.msra.mxu0 0
        %940 = vmatprep.subr.bf16.mxu0 0
        %941 = vmatpush1.bf16.xpose.msra.mxu0 0
        %942 = vmatprep.subr.bf16.mxu0 0
        %943 = vmatpush1.bf16.xpose.msra.mxu0 0
        %944 = vmatprep.subr.bf16.mxu0 0
        %945 = vmatpush1.bf16.xpose.msra.mxu0 0
        %946 = vmatprep.subr.bf16.mxu0 0
        %947 = vmatpush1.bf16.xpose.msra.mxu0 0
        %948 = vmatprep.subr.bf16.mxu0 0
        %949 = vmatpush1.bf16.xpose.msra.mxu0 0
        %950 = vmatprep.mubr.bf16.mxu0 0
        %951 = vmatmul.mubr.bf16.gmra.mrb[0].mxu0 %v913
        %v952 = vpop.f32.mrb[0].mxu0
        %v953 = vadd.f32 %v416, %v952
        %v954 = vpop.f32.mrb[0].mxu0
        %v955 = vpop.f32.mrb[0].mxu0
        %v956 = vadd.f32 %v416, %v955
        %v957 = vpop.f32.mrb[0].mxu0
        %958 = vdwg.mxu0
        %v959 = vsel %vm686, %v953, -inf
        %960 = vmax.xlane.f32.xlu0 %v959
        %v961 = vpop.xlane.xlu0 %960
        %v962 = vsel %vm686, %v956, -inf
        %963 = vmax.xlane.f32.xlu0 %v962
        %v964 = vpop.xlane.xlu0 %963
        %v965 = vsub.f32 %v953, %v961
        %v966 = vsub.f32 %v956, %v964
        %v967 = vmul.f32 %v965, 1.442695
        %v968 = vpow.pop %v967
        %v969 = vmul.f32 %v966, 1.442695
        %v970 = vpow.pop %v969
        %v971 = vsel %vm686, %v968, 0.0
        %972 = vadd.xlane.f32.xlu0 %v971
        %v973 = vpop.xlane.xlu0 %972
        %v974 = vsel %vm686, %v970, 0.0
        %975 = vadd.xlane.f32.xlu0 %v974
        %v976 = vpop.xlane.xlu0 %975
        %v977 = vrcp.pop %v973
        %v978 = vrcp.pop %v976
        %v979 = vmul.f32 %v968, %v977
        %v980 = vmul.f32 %v970, %v978
        %v981 = vpack.c.bf16 %v980, %v979
        %983 = vrot.lane.b32.xlu0 %v634, 120
        %v984 = vpop.permute.xlu0 %983
        %v986 = vsel %vm686, %v981, 0
        %v989 = vsel %vm760, %v984, 0
        %991 = vmatprep.subr.bf16.mxu0 0
        %992 = vmatpush1.bf16.msra.mxu0 %v989
        %993 = vmatprep.subr.bf16.mxu0 0
        %994 = vmatpush1.bf16.msra.mxu0 0
        %995 = vmatprep.subr.bf16.mxu0 0
        %996 = vmatpush1.bf16.msra.mxu0 0
        %997 = vmatprep.subr.bf16.mxu0 0
        %998 = vmatpush1.bf16.msra.mxu0 0
        %999 = vmatprep.subr.bf16.mxu0 0
        %1000 = vmatpush1.bf16.msra.mxu0 0
        %1001 = vmatprep.subr.bf16.mxu0 0
        %1002 = vmatpush1.bf16.msra.mxu0 0
        %1003 = vmatprep.subr.bf16.mxu0 0
        %1004 = vmatpush1.bf16.msra.mxu0 0
        %1005 = vmatprep.subr.bf16.mxu0 0
        %1006 = vmatpush1.bf16.msra.mxu0 0
        %1007 = vmatprep.subr.bf16.mxu0 0
        %1008 = vmatpush1.bf16.msra.mxu0 0
        %1009 = vmatprep.subr.bf16.mxu0 0
        %1010 = vmatpush1.bf16.msra.mxu0 0
        %1011 = vmatprep.subr.bf16.mxu0 0
        %1012 = vmatpush1.bf16.msra.mxu0 0
        %1013 = vmatprep.subr.bf16.mxu0 0
        %1014 = vmatpush1.bf16.msra.mxu0 0
        %1015 = vmatprep.subr.bf16.mxu0 0
        %1016 = vmatpush1.bf16.msra.mxu0 0
        %1017 = vmatprep.subr.bf16.mxu0 0
        %1018 = vmatpush1.bf16.msra.mxu0 0
        %1019 = vmatprep.subr.bf16.mxu0 0
        %1020 = vmatpush1.bf16.msra.mxu0 0
        %1021 = vmatprep.subr.bf16.mxu0 0
        %1022 = vmatpush1.bf16.msra.mxu0 0
        %1023 = vmatprep.mubr.bf16.mxu0 0
        %1024 = vmatmul.mubr.bf16.gmra.mrb[0].mxu0 %v986
        %v1025 = vpop.f32.mrb[0].mxu0
        %v1026 = vadd.f32 0.0, %v1025
        %v1027 = vpop.f32.mrb[0].mxu0
        %v1028 = vpop.f32.mrb[0].mxu0
        %v1029 = vadd.f32 0.0, %v1028
        %v1030 = vpop.f32.mrb[0].mxu0
        %1031 = vdwg.mxu0
        %v1032 = vpack.c.bf16 %v1026, %v1026
        %v1034 = vunpack.c.l.b16 %v1032
        %v1035 = vpack.c.b16 %v1034, %v1034
        %1036 = vrot.lane.b32.xlu0 %v1035, 16
        %v1037 = vpop.permute.xlu0 %1036
        %vm1039 = vcmask 191616
        %1040 = vst.msk [vmem:[#allocation2] sm:$0xf] %vm1039, %v1037
        %v1041 = vpack.c.bf16 %v1029, %v1029
        %v1043 = vunpack.c.l.b16 %v1041
        %v1044 = vpack.c.b16 %v1043, %v1043
        %1045 = vrot.lane.b32.xlu0 %v1044, 24
        %v1046 = vpop.permute.xlu0 %1045
        %vm1048 = vcmask 257216
        %1049 = vst.msk [vmem:[#allocation2] sm:$0xf] %vm1048, %v1046
        %v1050 = vld [vmem:[#allocation2] sm:$0xf]
        %v1051 = vld [vmem:[%s8] sm:$0xf]
        %v1052 = vld [vmem:[%s8 + $0x4] sm:$0xf]
        %v1053 = vld [vmem:[%s8 + $0x8] sm:$0xf]
        %v1054 = vld [vmem:[%s8 + $0xc] sm:$0xf]
        %v1059 = vunpack.c.l.b16 %v1051
        %v1060 = vunpack.c.l.b16 %v1052
        %v1061 = vunpack.c.l.b16 %v1053
        %v1062 = vunpack.c.l.b16 %v1054
        %v1063 = vpack.c.b16 %v1060, %v1059
        %v1064 = vpack.c.b16 %v1062, %v1061
        %v1068 = vsel %vm421, %v1050, 0
        %1070 = vmatprep.subr.bf16.mxu0 0
        %1071 = vmatpush1.bf16.msra.mxu0 %v1063
        %1072 = vmatprep.subr.bf16.mxu0 0
        %1073 = vmatpush1.bf16.msra.mxu0 %v1064
        %1074 = vmatprep.subr.bf16.mxu0 0
        %1075 = vmatpush1.bf16.msra.mxu0 0
        %1076 = vmatprep.subr.bf16.mxu0 0
        %1077 = vmatpush1.bf16.msra.mxu0 0
        %1078 = vmatprep.subr.bf16.mxu0 0
        %1079 = vmatpush1.bf16.msra.mxu0 0
        %1080 = vmatprep.subr.bf16.mxu0 0
        %1081 = vmatpush1.bf16.msra.mxu0 0
        %1082 = vmatprep.subr.bf16.mxu0 0
        %1083 = vmatpush1.bf16.msra.mxu0 0
        %1084 = vmatprep.subr.bf16.mxu0 0
        %1085 = vmatpush1.bf16.msra.mxu0 0
        %1086 = vmatprep.subr.bf16.mxu0 0
        %1087 = vmatpush1.bf16.msra.mxu0 0
        %1088 = vmatprep.subr.bf16.mxu0 0
        %1089 = vmatpush1.bf16.msra.mxu0 0
        %1090 = vmatprep.subr.bf16.mxu0 0
        %1091 = vmatpush1.bf16.msra.mxu0 0
        %1092 = vmatprep.subr.bf16.mxu0 0
        %1093 = vmatpush1.bf16.msra.mxu0 0
        %1094 = vmatprep.subr.bf16.mxu0 0
        %1095 = vmatpush1.bf16.msra.mxu0 0
        %1096 = vmatprep.subr.bf16.mxu0 0
        %1097 = vmatpush1.bf16.msra.mxu0 0
        %1098 = vmatprep.subr.bf16.mxu0 0
        %1099 = vmatpush1.bf16.msra.mxu0 0
        %1100 = vmatprep.subr.bf16.mxu0 0
        %1101 = vmatpush1.bf16.msra.mxu0 0
        %1102 = vmatprep.mubr.bf16.mxu0 0
        %1103 = vmatmul.mubr.bf16.gmra.mrb[0].mxu0 %v1068
        %v1104 = vpop.f32.mrb[0].mxu0
        %v1105 = vadd.f32 0.0, %v1104
        %v1106 = vpop.f32.mrb[0].mxu0
        %v1107 = vpop.f32.mrb[0].mxu0
        %v1108 = vpop.f32.mrb[0].mxu0
        %1109 = vdwg.mxu0
        %v1110 = vadd.f32 %v410, %v1105
        %v1111 = vld [vmem:[%s4] sm:$0x1]
        %v1112 = vmul.f32 %v1110, %v1110
        %v1113 = vsel %vm421, %v1112, 0.0
        %1114 = vadd.xlane.f32.xlu0 %v1113
        %v1115 = vpop.xlane.xlu0 %1114
        %v1116 = vmul.f32 %v1115, %v425
        %v1117 = vadd.f32 %v1116, 1e-05
        %v1118 = vrsqrt.pop %v1117
        %v1119 = vmul.f32 %v1110, %v1118
        %v1121 = vlaneseq
        %v1122 = vshrl.u32 %v1121, 7
        %v1123 = vsub.s32 0, %v1122
        %v1124 = vrot.slane %v1111, %v1123
        %v1126 = vmul.f32 %v1119, %v1124
        %v1127 = vpack.c.bf16 %v1126, %v1126
        %v1128 = vld [vmem:[%s9] sm:$0xf]
        %v1129 = vld [vmem:[%s9 + $0x4] sm:$0xf]
        %v1130 = vld [vmem:[%s9 + $0x8] sm:$0xf]
        %v1131 = vld [vmem:[%s9 + $0xc] sm:$0xf]
        %v1136 = vunpack.c.l.b16 %v1128
        %v1137 = vunpack.c.l.b16 %v1129
        %v1138 = vunpack.c.l.b16 %v1130
        %v1139 = vunpack.c.l.b16 %v1131
        %v1140 = vpack.c.b16 %v1137, %v1136
        %v1141 = vpack.c.b16 %v1139, %v1138
        %v1145 = vsel %vm421, %v1127, 0
        %1147 = vmatprep.subr.bf16.mxu0 0
        %1148 = vmatpush1.bf16.msra.mxu0 %v1140
        %1149 = vmatprep.subr.bf16.mxu0 0
        %1150 = vmatpush1.bf16.msra.mxu0 %v1141
        %1151 = vmatprep.subr.bf16.mxu0 0
        %1152 = vmatpush1.bf16.msra.mxu0 0
        %1153 = vmatprep.subr.bf16.mxu0 0
        %1154 = vmatpush1.bf16.msra.mxu0 0
        %1155 = vmatprep.subr.bf16.mxu0 0
        %1156 = vmatpush1.bf16.msra.mxu0 0
        %1157 = vmatprep.subr.bf16.mxu0 0
        %1158 = vmatpush1.bf16.msra.mxu0 0
        %1159 = vmatprep.subr.bf16.mxu0 0
        %1160 = vmatpush1.bf16.msra.mxu0 0
        %1161 = vmatprep.subr.bf16.mxu0 0
        %1162 = vmatpush1.bf16.msra.mxu0 0
        %1163 = vmatprep.subr.bf16.mxu0 0
        %1164 = vmatpush1.bf16.msra.mxu0 0
        %1165 = vmatprep.subr.bf16.mxu0 0
        %1166 = vmatpush1.bf16.msra.mxu0 0
        %1167 = vmatprep.subr.bf16.mxu0 0
        %1168 = vmatpush1.bf16.msra.mxu0 0
        %1169 = vmatprep.subr.bf16.mxu0 0
        %1170 = vmatpush1.bf16.msra.mxu0 0
        %1171 = vmatprep.subr.bf16.mxu0 0
        %1172 = vmatpush1.bf16.msra.mxu0 0
        %1173 = vmatprep.subr.bf16.mxu0 0
        %1174 = vmatpush1.bf16.msra.mxu0 0
        %1175 = vmatprep.subr.bf16.mxu0 0
        %1176 = vmatpush1.bf16.msra.mxu0 0
        %1177 = vmatprep.subr.bf16.mxu0 0
        %1178 = vmatpush1.bf16.msra.mxu0 0
        %1179 = vmatprep.mubr.bf16.mxu0 0
        %1180 = vmatmul.mubr.bf16.gmra.mrb[0].mxu0 %v1145
        %v1181 = vpop.f32.mrb[0].mxu0
        %v1182 = vadd.f32 0.0, %v1181
        %v1183 = vpop.f32.mrb[0].mxu0
        %v1184 = vpop.f32.mrb[0].mxu0
        %v1185 = vpop.f32.mrb[0].mxu0
        %1186 = vdwg.mxu0
        %v1187 = vxor.u32 %v1182, 2147483648
        %v1188 = vmul.f32 %v1187, 1.442695
        %v1189 = vpow.pop %v1188
        %v1190 = vadd.f32 %v1189, 1.0
        %v1191 = vrcp.pop %v1190
        %v1192 = vmul.f32 1.0, %v1191
        %v1193 = vmul.f32 %v1182, %v1192
        %v1194 = vld [vmem:[%s11] sm:$0xf]
        %v1195 = vld [vmem:[%s11 + $0x4] sm:$0xf]
        %v1196 = vld [vmem:[%s11 + $0x8] sm:$0xf]
        %v1197 = vld [vmem:[%s11 + $0xc] sm:$0xf]
        %v1202 = vunpack.c.l.b16 %v1194
        %v1203 = vunpack.c.l.b16 %v1195
        %v1204 = vunpack.c.l.b16 %v1196
        %v1205 = vunpack.c.l.b16 %v1197
        %v1206 = vpack.c.b16 %v1203, %v1202
        %v1207 = vpack.c.b16 %v1205, %v1204
        %1210 = vmatprep.subr.bf16.mxu0 0
        %1211 = vmatpush1.bf16.msra.mxu0 %v1206
        %1212 = vmatprep.subr.bf16.mxu0 0
        %1213 = vmatpush1.bf16.msra.mxu0 %v1207
        %1214 = vmatprep.subr.bf16.mxu0 0
        %1215 = vmatpush1.bf16.msra.mxu0 0
        %1216 = vmatprep.subr.bf16.mxu0 0
        %1217 = vmatpush1.bf16.msra.mxu0 0
        %1218 = vmatprep.subr.bf16.mxu0 0
        %1219 = vmatpush1.bf16.msra.mxu0 0
        %1220 = vmatprep.subr.bf16.mxu0 0
        %1221 = vmatpush1.bf16.msra.mxu0 0
        %1222 = vmatprep.subr.bf16.mxu0 0
        %1223 = vmatpush1.bf16.msra.mxu0 0
        %1224 = vmatprep.subr.bf16.mxu0 0
        %1225 = vmatpush1.bf16.msra.mxu0 0
        %1226 = vmatprep.subr.bf16.mxu0 0
        %1227 = vmatpush1.bf16.msra.mxu0 0
        %1228 = vmatprep.subr.bf16.mxu0 0
        %1229 = vmatpush1.bf16.msra.mxu0 0
        %1230 = vmatprep.subr.bf16.mxu0 0
        %1231 = vmatpush1.bf16.msra.mxu0 0
        %1232 = vmatprep.subr.bf16.mxu0 0
        %1233 = vmatpush1.bf16.msra.mxu0 0
        %1234 = vmatprep.subr.bf16.mxu0 0
        %1235 = vmatpush1.bf16.msra.mxu0 0
        %1236 = vmatprep.subr.bf16.mxu0 0
        %1237 = vmatpush1.bf16.msra.mxu0 0
        %1238 = vmatprep.subr.bf16.mxu0 0
        %1239 = vmatpush1.bf16.msra.mxu0 0
        %1240 = vmatprep.subr.bf16.mxu0 0
        %1241 = vmatpush1.bf16.msra.mxu0 0
        %1242 = vmatprep.mubr.bf16.mxu0 0
        %1243 = vmatmul.mubr.bf16.gmra.mrb[0].mxu0 %v1145
        %v1244 = vpop.f32.mrb[0].mxu0
        %v1245 = vadd.f32 0.0, %v1244
        %v1246 = vpop.f32.mrb[0].mxu0
        %v1247 = vpop.f32.mrb[0].mxu0
        %v1248 = vpop.f32.mrb[0].mxu0
        %1249 = vdwg.mxu0
        %v1250 = vmul.f32 %v1193, %v1245
        %v1251 = vpack.c.bf16 %v1250, %v1250
        %v1252 = vld [vmem:[%s10] sm:$0xf]
        %v1253 = vld [vmem:[%s10 + $0x4] sm:$0xf]
        %v1254 = vld [vmem:[%s10 + $0x8] sm:$0xf]
        %v1255 = vld [vmem:[%s10 + $0xc] sm:$0xf]
        %v1256 = vld [vmem:[%s10 + $0x10] sm:$0xf]
        %v1257 = vld [vmem:[%s10 + $0x14] sm:$0xf]
        %v1258 = vld [vmem:[%s10 + $0x18] sm:$0xf]
        %v1259 = vld [vmem:[%s10 + $0x1c] sm:$0xf]
        %v1268 = vunpack.c.l.b16 %v1252
        %v1269 = vunpack.c.l.b16 %v1253
        %v1270 = vunpack.c.l.b16 %v1254
        %v1271 = vunpack.c.l.b16 %v1255
        %v1272 = vunpack.c.l.b16 %v1256
        %v1273 = vunpack.c.l.b16 %v1257
        %v1274 = vunpack.c.l.b16 %v1258
        %v1275 = vunpack.c.l.b16 %v1259
        %v1276 = vpack.c.b16 %v1269, %v1268
        %v1277 = vpack.c.b16 %v1271, %v1270
        %v1278 = vpack.c.b16 %v1273, %v1272
        %v1279 = vpack.c.b16 %v1275, %v1274
        %vm1284 = vcmask 523264
        %v1286 = vsel %vm1284, %v1251, 0
        %1288 = vmatprep.subr.bf16.mxu0 0
        %1289 = vmatpush1.bf16.msra.mxu0 %v1276
        %1290 = vmatprep.subr.bf16.mxu0 0
        %1291 = vmatpush1.bf16.msra.mxu0 %v1277
        %1292 = vmatprep.subr.bf16.mxu0 0
        %1293 = vmatpush1.bf16.msra.mxu0 %v1278
        %1294 = vmatprep.subr.bf16.mxu0 0
        %1295 = vmatpush1.bf16.msra.mxu0 %v1279
        %1296 = vmatprep.subr.bf16.mxu0 0
        %1297 = vmatpush1.bf16.msra.mxu0 0
        %1298 = vmatprep.subr.bf16.mxu0 0
        %1299 = vmatpush1.bf16.msra.mxu0 0
        %1300 = vmatprep.subr.bf16.mxu0 0
        %1301 = vmatpush1.bf16.msra.mxu0 0
        %1302 = vmatprep.subr.bf16.mxu0 0
        %1303 = vmatpush1.bf16.msra.mxu0 0
        %1304 = vmatprep.subr.bf16.mxu0 0
        %1305 = vmatpush1.bf16.msra.mxu0 0
        %1306 = vmatprep.subr.bf16.mxu0 0
        %1307 = vmatpush1.bf16.msra.mxu0 0
        %1308 = vmatprep.subr.bf16.mxu0 0
        %1309 = vmatpush1.bf16.msra.mxu0 0
        %1310 = vmatprep.subr.bf16.mxu0 0
        %1311 = vmatpush1.bf16.msra.mxu0 0
        %1312 = vmatprep.subr.bf16.mxu0 0
        %1313 = vmatpush1.bf16.msra.mxu0 0
        %1314 = vmatprep.subr.bf16.mxu0 0
        %1315 = vmatpush1.bf16.msra.mxu0 0
        %1316 = vmatprep.subr.bf16.mxu0 0
        %1317 = vmatpush1.bf16.msra.mxu0 0
        %1318 = vmatprep.subr.bf16.mxu0 0
        %1319 = vmatpush1.bf16.msra.mxu0 0
        %1320 = vmatprep.mubr.bf16.mxu0 0
        %1321 = vmatmul.mubr.bf16.gmra.mrb[0].mxu0 %v1286
        %v1322 = vpop.f32.mrb[0].mxu0
        %v1323 = vadd.f32 0.0, %v1322
        %v1324 = vpop.f32.mrb[0].mxu0
        %v1325 = vpop.f32.mrb[0].mxu0
        %v1326 = vpop.f32.mrb[0].mxu0
        %1327 = vdwg.mxu0
        %v1328 = vadd.f32 %v1110, %v1323
        %1329 = vst.msk [vmem:[%s404] sm:$0xff] %vm421, %v1328
        %s1330 = sand.u32 %s291, 1
        %s1331 = scalar_lea.sflag [#allocation4], %s1330
        %s1332 = sand.u32 %s291, 1
        %s1333 = smul.addr %s1332, 8
        %s1334 = scalar_lea.vmem [#allocation3], %s1333
        // Predicated region
        $region69: #{tpu_custom_call.1} parent=67 // pred_check
          %p1335 = pneg %p301
        $region70: #{tpu_custom_call.1} parent=67 // pred_check_branch
          %1337 = sbr.rel (%p1335) target = $region72
        $region71: #{tpu_custom_call.1} parent=67 // pred_region
          %s1339 = ssub.s32 128, 128
          %1340 = vsyncadd %s1331, %s1339
          %s1341 = smul.addr %s26, 128
          %s1342 = scalar_lea.hbm %s12, %s1341
          %s1344 = sshll.u32 %s1334, 4
          %s1345 = int_to_ptr.vmem [resolvable:$true] %s1344
          %1347 = dma.vmem_to_hbm [thread:$0]  %s1345, 128, %s1342, %s1331
        $region72: #{tpu_custom_call.1} parent=67 // pred_fallthru
          _
      $region68: #{tpu_custom_call.1} parent=5 // pred_fallthru
        _
      %p1348 = scmp.le.s32.totalorder 2, %s21
      // Predicated region
      $region73: #{tpu_custom_call.1} parent=5 // pred_check
        %p1349 = pneg %p1348
      $region74: #{tpu_custom_call.1} parent=5 // pred_check_branch
        %1351 = sbr.rel (%p1349) target = $region76
      $region75: #{tpu_custom_call.1} parent=5 // pred_region
        %s1352 = ssub.s32 %s21, 2
        // Predicated region
        $region77: #{tpu_custom_call.1} parent=75 // pred_check
          %p1353 = pneg %p307
        $region78: #{tpu_custom_call.1} parent=75 // pred_check_branch
          %1355 = sbr.rel (%p1353) target = $region80
        $region79: #{tpu_custom_call.1} parent=75 // pred_region
          %s1356 = sand.u32 %s292, 1
          %s1357 = scalar_lea.sflag [#allocation4], %s1356
          %s1358 = sand.u32 %s292, 1
          %s1359 = smul.addr %s1358, 8
          %s1360 = scalar_lea.vmem [#allocation3], %s1359
          %1361 = dma.done %s1357, 128
        $region80: #{tpu_custom_call.1} parent=75 // pred_fallthru
          _
      $region76: #{tpu_custom_call.1} parent=5 // pred_fallthru
        _
    $region6: #{tpu_custom_call.1} parent=1 // loop_footer
      %s25 = sadd.s32 1, %s21
    $region7: #{tpu_custom_call.1} parent=1 // loop_footer_branch
      %20 = sbr.rel target = $region3
    $region8: #{tpu_custom_call.1} parent=1 // loop_exit
      _
    %1362 = vsyncpa [#allocation4], 1
    %s1363 = scalar_lea.sflag [#allocation4], 1
    %1364 = vsyncpa %s1363, 1

// kernel: tpu_custom_call.1
$region0: #{tpu_custom_call.1}
  #allocation0 [shape = 'u32[]', space=smem, size = 0x4, offset = 0x4, fixed_abs, tag = 'smem constant byte address 0x4 - core index']
  #allocation1 [shape = 'u32[144,128]{1,0:T(1,128)}', space=vmem, size = 0x12000, scoped, tag = 'internal scratch']
  #allocation2 [shape = 'bf16[8,32]{1,0:T(8,128)(2,1)}', space=vmem, size = 0x800, scoped, tag = 'scratch operand']
  %s0 = inlined_call_operand.vmem [shape: f32[2,8,32], index: 0, kind: input, shape index: {}]
  %s1 = inlined_call_operand.vmem [shape: f32[8,4], index: 1, kind: input, shape index: {}]
  %s2 = inlined_call_operand.vmem [shape: f32[8,4], index: 2, kind: input, shape index: {}]
  %s3 = inlined_call_operand.vmem [shape: f32[1,32], index: 3, kind: input, shape index: {}]
  %s4 = inlined_call_operand.vmem [shape: f32[1,32], index: 4, kind: input, shape index: {}]
  %s5 = inlined_call_operand.vmem [shape: bf16[32,32], index: 5, kind: input, shape index: {}]
  %s6 = inlined_call_operand.vmem [shape: bf16[32,16], index: 6, kind: input, shape index: {}]
  %s7 = inlined_call_operand.vmem [shape: bf16[32,16], index: 7, kind: input, shape index: {}]
  %s8 = inlined_call_operand.vmem [shape: bf16[32,32], index: 8, kind: input, shape index: {}]
  %s9 = inlined_call_operand.vmem [shape: bf16[32,64], index: 9, kind: input, shape index: {}]
  %s10 = inlined_call_operand.vmem [shape: bf16[64,32], index: 10, kind: input, shape index: {}]
  %s11 = inlined_call_operand.vmem [shape: bf16[32,64], index: 11, kind: input, shape index: {}]
  %s12 = inlined_call_operand.hbm [shape: f32[2,8,32], index: 12, kind: output, shape index: {}]
  %s13 = sld [smem:[#allocation0]]
  $region81: #{tpu_custom_call.1} parent=0
    _
  %s15 = ssub.s32 1, %s13
  %s16 = scalar_select 0, %s15, %s13
  $region1: #{tpu_custom_call.1} parent=0
    #allocation3 [shape = 'u8[8192]{0}', space=vmem, size = 0x2000, scoped, tag = 'output window, operand 0']
    #allocation4 [shape = 's32[2]{0}', space=sflag, size = 0x8, scoped, tag = 'scoped memory for tpu_custom_call.1']
    %17 = vsyncpa [#allocation4], 0
    %s18 = scalar_lea.sflag [#allocation4], 1
    %19 = vsyncpa %s18, 0
    loop: start=0, step=1, limit=4
    $region2: #{tpu_custom_call.1} parent=1 // loop_pre_header
      _
    $region3: #{tpu_custom_call.1} parent=1 // loop_header
      %s21 = sphi 0, %s25
      %p22 = scmp.ge.s32.totalorder %s21, 4
      %s31 = sphi 0, %s33
      %s34 = sphi 0, %s31
      %s35 = sphi 0, %s34
      %s51 = sphi 0, %s35
      %s55 = sphi 0, %s55
      %s57 = sphi 0, %s55
      %s58 = sphi 0, %s57
      %s72 = sphi 0, %s58
      %s76 = sphi 0, %s76
      %s78 = sphi 0, %s76
      %s79 = sphi 0, %s78
      %s93 = sphi 0, %s79
      %s97 = sphi 0, %s97
      %s99 = sphi 0, %s97
      %s100 = sphi 0, %s99
      %s114 = sphi 0, %s100
      %s118 = sphi 0, %s118
      %s120 = sphi 0, %s118
      %s121 = sphi 0, %s120
      %s135 = sphi 0, %s121
      %s139 = sphi 0, %s139
      %s141 = sphi 0, %s139
      %s142 = sphi 0, %s141
      %s156 = sphi 0, %s142
      %s160 = sphi 0, %s160
      %s162 = sphi 0, %s160
      %s163 = sphi 0, %s162
      %s177 = sphi 0, %s163
      %s181 = sphi 0, %s181
      %s183 = sphi 0, %s181
      %s184 = sphi 0, %s183
      %s198 = sphi 0, %s184
      %s202 = sphi 0, %s202
      %s204 = sphi 0, %s202
      %s205 = sphi 0, %s204
      %s219 = sphi 0, %s205
      %s223 = sphi 0, %s223
      %s225 = sphi 0, %s223
      %s226 = sphi 0, %s225
      %s240 = sphi 0, %s226
      %s244 = sphi 0, %s244
      %s246 = sphi 0, %s244
      %s247 = sphi 0, %s246
      %s261 = sphi 0, %s247
      %s265 = sphi 0, %s265
      %s267 = sphi 0, %s265
      %s268 = sphi 0, %s267
      %s282 = sphi 0, %s268
      %s288 = sphi 0, %s290
      %s291 = sphi 0, %s288
      %s292 = sphi 0, %s291
      %s308 = sphi 0, %s292
    $region4: #{tpu_custom_call.1} parent=1 // loop_header_branch
      %24 = sbr.rel (%p22) target = $region8
    $region5: #{tpu_custom_call.1} parent=1 // loop_body
      %s26 = ssub.s32 %s21, 1
      %s27 = ssub.s32 %s21, 2
      %s28 = sadd.s32 %s21, 1
      %s29 = ssub.s32 %s21, %s28
      %p30 = scmp.eq.s32.totalorder %s29, 0
      %s32 = sadd.s32 %s31, 1
      %s33 = scalar_select %p30, %s31, %s32
      %p36 = pneg %p30
      %p37 = scmp.eq.s32.totalorder %s21, 1
      %p38 = por %p36, %p37
      %p39 = scmp.ne.s32.totalorder %s31, %s34
      %p40 = scmp.eq.s32.totalorder %s21, 0
      %p41 = por %p39, %p40
      %p42 = scmp.ne.s32.totalorder %s31, %s34
      %p43 = scmp.eq.s32.totalorder %s26, 1
      %p44 = por %p42, %p43
      %p45 = scmp.ne.s32.totalorder %s34, %s35
      %p46 = scmp.eq.s32.totalorder %s26, 0
      %p47 = por %p45, %p46
      %p48 = scmp.ne.s32.totalorder %s34, %s35
      %p49 = scmp.eq.s32.totalorder %s27, 1
      %p50 = por %p48, %p49
      %p52 = scmp.ne.s32.totalorder %s35, %s51
      %p53 = scmp.eq.s32.totalorder %s27, 0
      %p54 = por %p52, %p53
      %s56 = sadd.s32 %s55, 1
      %p59 = scmp.eq.s32.totalorder %s21, 1
      %p60 = scmp.ne.s32.totalorder %s55, %s57
      %p61 = scmp.eq.s32.totalorder %s21, 0
      %p62 = por %p60, %p61
      %p63 = scmp.ne.s32.totalorder %s55, %s57
      %p64 = scmp.eq.s32.totalorder %s26, 1
      %p65 = por %p63, %p64
      %p66 = scmp.ne.s32.totalorder %s57, %s58
      %p67 = scmp.eq.s32.totalorder %s26, 0
      %p68 = por %p66, %p67
      %p69 = scmp.ne.s32.totalorder %s57, %s58
      %p70 = scmp.eq.s32.totalorder %s27, 1
      %p71 = por %p69, %p70
      %p73 = scmp.ne.s32.totalorder %s58, %s72
      %p74 = scmp.eq.s32.totalorder %s27, 0
      %p75 = por %p73, %p74
      %s77 = sadd.s32 %s76, 1
      %p80 = scmp.eq.s32.totalorder %s21, 1
      %p81 = scmp.ne.s32.totalorder %s76, %s78
      %p82 = scmp.eq.s32.totalorder %s21, 0
      %p83 = por %p81, %p82
      %p84 = scmp.ne.s32.totalorder %s76, %s78
      %p85 = scmp.eq.s32.totalorder %s26, 1
      %p86 = por %p84, %p85
      %p87 = scmp.ne.s32.totalorder %s78, %s79
      %p88 = scmp.eq.s32.totalorder %s26, 0
      %p89 = por %p87, %p88
      %p90 = scmp.ne.s32.totalorder %s78, %s79
      %p91 = scmp.eq.s32.totalorder %s27, 1
      %p92 = por %p90, %p91
      %p94 = scmp.ne.s32.totalorder %s79, %s93
      %p95 = scmp.eq.s32.totalorder %s27, 0
      %p96 = por %p94, %p95
      %s98 = sadd.s32 %s97, 1
      %p101 = scmp.eq.s32.totalorder %s21, 1
      %p102 = scmp.ne.s32.totalorder %s97, %s99
      %p103 = scmp.eq.s32.totalorder %s21, 0
      %p104 = por %p102, %p103
      %p105 = scmp.ne.s32.totalorder %s97, %s99
      %p106 = scmp.eq.s32.totalorder %s26, 1
      %p107 = por %p105, %p106
      %p108 = scmp.ne.s32.totalorder %s99, %s100
      %p109 = scmp.eq.s32.totalorder %s26, 0
      %p110 = por %p108, %p109
      %p111 = scmp.ne.s32.totalorder %s99, %s100
      %p112 = scmp.eq.s32.totalorder %s27, 1
      %p113 = por %p111, %p112
      %p115 = scmp.ne.s32.totalorder %s100, %s114
      %p116 = scmp.eq.s32.totalorder %s27, 0
      %p117 = por %p115, %p116
      %s119 = sadd.s32 %s118, 1
      %p122 = scmp.eq.s32.totalorder %s21, 1
      %p123 = scmp.ne.s32.totalorder %s118, %s120
      %p124 = scmp.eq.s32.totalorder %s21, 0
      %p125 = por %p123, %p124
      %p126 = scmp.ne.s32.totalorder %s118, %s120
      %p127 = scmp.eq.s32.totalorder %s26, 1
      %p128 = por %p126, %p127
      %p129 = scmp.ne.s32.totalorder %s120, %s121
      %p130 = scmp.eq.s32.totalorder %s26, 0
      %p131 = por %p129, %p130
      %p132 = scmp.ne.s32.totalorder %s120, %s121
      %p133 = scmp.eq.s32.totalorder %s27, 1
      %p134 = por %p132, %p133
      %p136 = scmp.ne.s32.totalorder %s121, %s135
      %p137 = scmp.eq.s32.totalorder %s27, 0
      %p138 = por %p136, %p137
      %s140 = sadd.s32 %s139, 1
      %p143 = scmp.eq.s32.totalorder %s21, 1
      %p144 = scmp.ne.s32.totalorder %s139, %s141
      %p145 = scmp.eq.s32.totalorder %s21, 0
      %p146 = por %p144, %p145
      %p147 = scmp.ne.s32.totalorder %s139, %s141
      %p148 = scmp.eq.s32.totalorder %s26, 1
      %p149 = por %p147, %p148
      %p150 = scmp.ne.s32.totalorder %s141, %s142
      %p151 = scmp.eq.s32.totalorder %s26, 0
      %p152 = por %p150, %p151
      %p153 = scmp.ne.s32.totalorder %s141, %s142
      %p154 = scmp.eq.s32.totalorder %s27, 1
      %p155 = por %p153, %p154
      %p157 = scmp.ne.s32.totalorder %s142, %s156
      %p158 = scmp.eq.s32.totalorder %s27, 0
      %p159 = por %p157, %p158
      %s161 = sadd.s32 %s160, 1
      %p164 = scmp.eq.s32.totalorder %s21, 1
      %p165 = scmp.ne.s32.totalorder %s160, %s162
      %p166 = scmp.eq.s32.totalorder %s21, 0
      %p167 = por %p165, %p166
      %p168 = scmp.ne.s32.totalorder %s160, %s162
      %p169 = scmp.eq.s32.totalorder %s26, 1
      %p170 = por %p168, %p169
      %p171 = scmp.ne.s32.totalorder %s162, %s163
      %p172 = scmp.eq.s32.totalorder %s26, 0
      %p173 = por %p171, %p172
      %p174 = scmp.ne.s32.totalorder %s162, %s163
      %p175 = scmp.eq.s32.totalorder %s27, 1
      %p176 = por %p174, %p175
      %p178 = scmp.ne.s32.totalorder %s163, %s177
      %p179 = scmp.eq.s32.totalorder %s27, 0
      %p180 = por %p178, %p179
      %s182 = sadd.s32 %s181, 1
      %p185 = scmp.eq.s32.totalorder %s21, 1
      %p186 = scmp.ne.s32.totalorder %s181, %s183
      %p187 = scmp.eq.s32.totalorder %s21, 0
      %p188 = por %p186, %p187
      %p189 = scmp.ne.s32.totalorder %s181, %s183
      %p190 = scmp.eq.s32.totalorder %s26, 1
      %p191 = por %p189, %p190
      %p192 = scmp.ne.s32.totalorder %s183, %s184
      %p193 = scmp.eq.s32.totalorder %s26, 0
      %p194 = por %p192, %p193
      %p195 = scmp.ne.s32.totalorder %s183, %s184
      %p196 = scmp.eq.s32.totalorder %s27, 1
      %p197 = por %p195, %p196
      %p199 = scmp.ne.s32.totalorder %s184, %s198
      %p200 = scmp.eq.s32.totalorder %s27, 0
      %p201 = por %p199, %p200
      %s203 = sadd.s32 %s202, 1
      %p206 = scmp.eq.s32.totalorder %s21, 1
      %p207 = scmp.ne.s32.totalorder %s202, %s204
      %p208 = scmp.eq.s32.totalorder %s21, 0
      %p209 = por %p207, %p208
      %p210 = scmp.ne.s32.totalorder %s202, %s204
      %p211 = scmp.eq.s32.totalorder %s26, 1
      %p212 = por %p210, %p211
      %p213 = scmp.ne.s32.totalorder %s204, %s205
      %p214 = scmp.eq.s32.totalorder %s26, 0
      %p215 = por %p213, %p214
      %p216 = scmp.ne.s32.totalorder %s204, %s205
      %p217 = scmp.eq.s32.totalorder %s27, 1
      %p218 = por %p216, %p217
      %p220 = scmp.ne.s32.totalorder %s205, %s219
      %p221 = scmp.eq.s32.totalorder %s27, 0
      %p222 = por %p220, %p221
      %s224 = sadd.s32 %s223, 1
      %p227 = scmp.eq.s32.totalorder %s21, 1
      %p228 = scmp.ne.s32.totalorder %s223, %s225
      %p229 = scmp.eq.s32.totalorder %s21, 0
      %p230 = por %p228, %p229
      %p231 = scmp.ne.s32.totalorder %s223, %s225
      %p232 = scmp.eq.s32.totalorder %s26, 1
      %p233 = por %p231, %p232
      %p234 = scmp.ne.s32.totalorder %s225, %s226
      %p235 = scmp.eq.s32.totalorder %s26, 0
      %p236 = por %p234, %p235
      %p237 = scmp.ne.s32.totalorder %s225, %s226
      %p238 = scmp.eq.s32.totalorder %s27, 1
      %p239 = por %p237, %p238
      %p241 = scmp.ne.s32.totalorder %s226, %s240
      %p242 = scmp.eq.s32.totalorder %s27, 0
      %p243 = por %p241, %p242
      %s245 = sadd.s32 %s244, 1
      %p248 = scmp.eq.s32.totalorder %s21, 1
      %p249 = scmp.ne.s32.totalorder %s244, %s246
      %p250 = scmp.eq.s32.totalorder %s21, 0
      %p251 = por %p249, %p250
      %p252 = scmp.ne.s32.totalorder %s244, %s246
      %p253 = scmp.eq.s32.totalorder %s26, 1
      %p254 = por %p252, %p253
      %p255 = scmp.ne.s32.totalorder %s246, %s247
      %p256 = scmp.eq.s32.totalorder %s26, 0
      %p257 = por %p255, %p256
      %p258 = scmp.ne.s32.totalorder %s246, %s247
      %p259 = scmp.eq.s32.totalorder %s27, 1
      %p260 = por %p258, %p259
      %p262 = scmp.ne.s32.totalorder %s247, %s261
      %p263 = scmp.eq.s32.totalorder %s27, 0
      %p264 = por %p262, %p263
      %s266 = sadd.s32 %s265, 1
      %p269 = scmp.eq.s32.totalorder %s21, 1
      %p270 = scmp.ne.s32.totalorder %s265, %s267
      %p271 = scmp.eq.s32.totalorder %s21, 0
      %p272 = por %p270, %p271
      %p273 = scmp.ne.s32.totalorder %s265, %s267
      %p274 = scmp.eq.s32.totalorder %s26, 1
      %p275 = por %p273, %p274
      %p276 = scmp.ne.s32.totalorder %s267, %s268
      %p277 = scmp.eq.s32.totalorder %s26, 0
      %p278 = por %p276, %p277
      %p279 = scmp.ne.s32.totalorder %s267, %s268
      %p280 = scmp.eq.s32.totalorder %s27, 1
      %p281 = por %p279, %p280
      %p283 = scmp.ne.s32.totalorder %s268, %s282
      %p284 = scmp.eq.s32.totalorder %s27, 0
      %p285 = por %p283, %p284
      %s286 = ssub.s32 %s21, %s28
      %p287 = scmp.eq.s32.totalorder %s286, 0
      %s289 = sadd.s32 %s288, 1
      %s290 = scalar_select %p287, %s288, %s289
      %p293 = pneg %p287
      %p294 = scmp.eq.s32.totalorder %s21, 1
      %p295 = por %p293, %p294
      %p296 = scmp.ne.s32.totalorder %s288, %s291
      %p297 = scmp.eq.s32.totalorder %s21, 0
      %p298 = por %p296, %p297
      %p299 = scmp.ne.s32.totalorder %s288, %s291
      %p300 = scmp.eq.s32.totalorder %s26, 1
      %p301 = por %p299, %p300
      %p302 = scmp.ne.s32.totalorder %s291, %s292
      %p303 = scmp.eq.s32.totalorder %s26, 0
      %p304 = por %p302, %p303
      %p305 = scmp.ne.s32.totalorder %s291, %s292
      %p306 = scmp.eq.s32.totalorder %s27, 1
      %p307 = por %p305, %p306
      %p309 = scmp.ne.s32.totalorder %s292, %s308
      %p310 = scmp.eq.s32.totalorder %s27, 0
      %p311 = por %p309, %p310
      %p312 = scmp.le.s32.totalorder 1, %s21
      %p313 = scmp.lt.s32.totalorder %s21, 3
      %p314 = pnand %p312, %p313
      %p315 = pneg %p314
      // Predicated region
      $region9: #{tpu_custom_call.1} parent=5 // pred_check
        _
      $region10: #{tpu_custom_call.1} parent=5 // pred_check_branch
        %317 = sbr.rel (%p314) target = $region12
      $region11: #{tpu_custom_call.1} parent=5 // pred_region
        %s318 = ssub.s32 %s21, 1
        // Predicated region
        $region13: #{tpu_custom_call.1} parent=11 // pred_check
          %p319 = pneg %p68
        $region14: #{tpu_custom_call.1} parent=11 // pred_check_branch
          %321 = sbr.rel (%p319) target = $region16
        $region15: #{tpu_custom_call.1} parent=11 // pred_region
          _
        $region16: #{tpu_custom_call.1} parent=11 // pred_fallthru
          _
        // Predicated region
        $region17: #{tpu_custom_call.1} parent=11 // pred_check
          %p322 = pneg %p89
        $region18: #{tpu_custom_call.1} parent=11 // pred_check_branch
          %324 = sbr.rel (%p322) target = $region20
        $region19: #{tpu_custom_call.1} parent=11 // pred_region
          _
        $region20: #{tpu_custom_call.1} parent=11 // pred_fallthru
          _
        // Predicated region
        $region21: #{tpu_custom_call.1} parent=11 // pred_check
          %p325 = pneg %p110
        $region22: #{tpu_custom_call.1} parent=11 // pred_check_branch
          %327 = sbr.rel (%p325) target = $region24
        $region23: #{tpu_custom_call.1} parent=11 // pred_region
          _
        $region24: #{tpu_custom_call.1} parent=11 // pred_fallthru
          _
        // Predicated region
        $region25: #{tpu_custom_call.1} parent=11 // pred_check
          %p328 = pneg %p131
        $region26: #{tpu_custom_call.1} parent=11 // pred_check_branch
          %330 = sbr.rel (%p328) target = $region28
        $region27: #{tpu_custom_call.1} parent=11 // pred_region
          _
        $region28: #{tpu_custom_call.1} parent=11 // pred_fallthru
          _
        // Predicated region
        $region29: #{tpu_custom_call.1} parent=11 // pred_check
          %p331 = pneg %p152
        $region30: #{tpu_custom_call.1} parent=11 // pred_check_branch
          %333 = sbr.rel (%p331) target = $region32
        $region31: #{tpu_custom_call.1} parent=11 // pred_region
          _
        $region32: #{tpu_custom_call.1} parent=11 // pred_fallthru
          _
        // Predicated region
        $region33: #{tpu_custom_call.1} parent=11 // pred_check
          %p334 = pneg %p173
        $region34: #{tpu_custom_call.1} parent=11 // pred_check_branch
          %336 = sbr.rel (%p334) target = $region36
        $region35: #{tpu_custom_call.1} parent=11 // pred_region
          _
        $region36: #{tpu_custom_call.1} parent=11 // pred_fallthru
          _
        // Predicated region
        $region37: #{tpu_custom_call.1} parent=11 // pred_check
          %p337 = pneg %p194
        $region38: #{tpu_custom_call.1} parent=11 // pred_check_branch
          %339 = sbr.rel (%p337) target = $region40
        $region39: #{tpu_custom_call.1} parent=11 // pred_region
          _
        $region40: #{tpu_custom_call.1} parent=11 // pred_fallthru
          _
        // Predicated region
        $region41: #{tpu_custom_call.1} parent=11 // pred_check
          %p340 = pneg %p215
        $region42: #{tpu_custom_call.1} parent=11 // pred_check_branch
          %342 = sbr.rel (%p340) target = $region44
        $region43: #{tpu_custom_call.1} parent=11 // pred_region
          _
        $region44: #{tpu_custom_call.1} parent=11 // pred_fallthru
          _
        // Predicated region
        $region45: #{tpu_custom_call.1} parent=11 // pred_check
          %p343 = pneg %p236
        $region46: #{tpu_custom_call.1} parent=11 // pred_check_branch
          %345 = sbr.rel (%p343) target = $region48
        $region47: #{tpu_custom_call.1} parent=11 // pred_region
          _
        $region48: #{tpu_custom_call.1} parent=11 // pred_fallthru
          _
        // Predicated region
        $region49: #{tpu_custom_call.1} parent=11 // pred_check
          %p346 = pneg %p257
        $region50: #{tpu_custom_call.1} parent=11 // pred_check_branch
          %348 = sbr.rel (%p346) target = $region52
        $region51: #{tpu_custom_call.1} parent=11 // pred_region
          _
        $region52: #{tpu_custom_call.1} parent=11 // pred_fallthru
          _
        // Predicated region
        $region53: #{tpu_custom_call.1} parent=11 // pred_check
          %p349 = pneg %p278
        $region54: #{tpu_custom_call.1} parent=11 // pred_check_branch
          %351 = sbr.rel (%p349) target = $region56
        $region55: #{tpu_custom_call.1} parent=11 // pred_region
          _
        $region56: #{tpu_custom_call.1} parent=11 // pred_fallthru
          _
      $region12: #{tpu_custom_call.1} parent=5 // pred_fallthru
        _
      %p352 = scmp.lt.s32.totalorder %s21, 2
      // Predicated region
      $region57: #{tpu_custom_call.1} parent=5 // pred_check
        %p353 = pneg %p352
      $region58: #{tpu_custom_call.1} parent=5 // pred_check_branch
        %355 = sbr.rel (%p353) target = $region60
      $region59: #{tpu_custom_call.1} parent=5 // pred_region
        // Predicated region
        $region61: #{tpu_custom_call.1} parent=59 // pred_check
          %p356 = pneg %p41
        $region62: #{tpu_custom_call.1} parent=59 // pred_check_branch
          %358 = sbr.rel (%p356) target = $region64
        $region63: #{tpu_custom_call.1} parent=59 // pred_region
          %p359 = scmp.lt.s32.totalorder %s21, 1
          %s360 = scalar_select %p359, %s21, 1
          %s361 = smul.addr %s360, 8
          %s362 = scalar_lea.vmem %s0, %s361
        $region64: #{tpu_custom_call.1} parent=59 // pred_fallthru
          _
      $region60: #{tpu_custom_call.1} parent=5 // pred_fallthru
        _
      %p363 = scmp.le.s32.totalorder 1, %s21
      %p364 = scmp.lt.s32.totalorder %s21, 3
      %p365 = pnand %p363, %p364
      %p366 = pneg %p365
      // Predicated region
      $region65: #{tpu_custom_call.1} parent=5 // pred_check
        _
      $region66: #{tpu_custom_call.1} parent=5 // pred_check_branch
        %368 = sbr.rel (%p365) target = $region68
      $region67: #{tpu_custom_call.1} parent=5 // pred_region
        %s369 = ssub.s32 %s21, 1
        %p370 = scmp.lt.s32.totalorder %s26, 1
        %s371 = scalar_select %p370, %s26, 1
        %s372 = smul.addr %s371, 8
        %s373 = scalar_lea.vmem %s0, %s372
        %p374 = pneg %p47
        %p375 = pneg %p44
        %p376 = pneg %p68
        %p377 = pneg %p65
        %p378 = pneg %p89
        %p379 = pneg %p86
        %p380 = pneg %p110
        %p381 = pneg %p107
        %p382 = pneg %p131
        %p383 = pneg %p128
        %p384 = pneg %p152
        %p385 = pneg %p149
        %p386 = pneg %p173
        %p387 = pneg %p170
        %p388 = pneg %p194
        %p389 = pneg %p191
        %p390 = pneg %p215
        %p391 = pneg %p212
        %p392 = pneg %p236
        %p393 = pneg %p233
        %p394 = pneg %p257
        %p395 = pneg %p254
        %p396 = pneg %p278
        %p397 = pneg %p275
        %p398 = pneg %p304
        %p399 = pneg %p301
        %s400 = sand.u32 %s291, 1
        %s401 = scalar_lea.sflag [#allocation4], %s400
        %s402 = sand.u32 %s291, 1
        %s403 = smul.addr %s402, 8
        %s404 = scalar_lea.vmem [#allocation3], %s403
        %p405 = scmp.lt.s32.totalorder %s26, 1
        %s406 = scalar_select %p405, %s26, 1
        %s407 = smul.addr %s406, 8
        %s408 = scalar_lea.vmem %s0, %s407
        %v410 = vld [vmem:[%s408] sm:$0xff]
        %v411 = vlaneseq
        %v412 = vshrl.u32 %v411, 7
        %v413 = vlaneseq
        %v414 = vand.u32 %v413, 127
        %vm415 = vcmp.ge.s32.totalorder %v412, %v414
        %v416 = vsel %vm415, 0.0, -1e+30
        %v417 = vld [vmem:[%s1] sm:$0xff]
        %v418 = vld [vmem:[%s2] sm:$0xff]
        %v419 = vld [vmem:[%s3] sm:$0x1]
        %v420 = vmul.f32 %v410, %v410
        %vm421 = vcmask 261120
        %v422 = vsel %vm421, %v420, 0.0
        %423 = vadd.xlane.f32.xlu0 %v422
        %v424 = vpop.xlane.xlu0 %423
        %v425 = vrcp.pop 32.0
        %v426 = vmul.f32 %v424, %v425
        %v427 = vadd.f32 %v426, 1e-05
        %v428 = vrsqrt.pop %v427
        %v429 = vmul.f32 %v410, %v428
        %v431 = vlaneseq
        %v432 = vshrl.u32 %v431, 7
        %v433 = vsub.s32 0, %v432
        %v434 = vrot.slane %v419, %v433
        %v436 = vmul.f32 %v429, %v434
        %v437 = vpack.c.bf16 %v436, %v436
        %v438 = vld [vmem:[%s5] sm:$0xf]
        %v439 = vld [vmem:[%s5 + $0x4] sm:$0xf]
        %v440 = vld [vmem:[%s5 + $0x8] sm:$0xf]
        %v441 = vld [vmem:[%s5 + $0xc] sm:$0xf]
        %v446 = vunpack.c.l.b16 %v438
        %v447 = vunpack.c.l.b16 %v439
        %v448 = vunpack.c.l.b16 %v440
        %v449 = vunpack.c.l.b16 %v441
        %v450 = vpack.c.b16 %v447, %v446
        %v451 = vpack.c.b16 %v449, %v448
        %v455 = vsel %vm421, %v437, 0
        %457 = vmatprep.subr.bf16.mxu0 0
        %458 = vmatpush1.bf16.msra.mxu0 %v450
        %459 = vmatprep.subr.bf16.mxu0 0
        %460 = vmatpush1.bf16.msra.mxu0 %v451
        %461 = vmatprep.subr.bf16.mxu0 0
        %462 = vmatpush1.bf16.msra.mxu0 0
        %463 = vmatprep.subr.bf16.mxu0 0
        %464 = vmatpush1.bf16.msra.mxu0 0
        %465 = vmatprep.subr.bf16.mxu0 0
        %466 = vmatpush1.bf16.msra.mxu0 0
        %467 = vmatprep.subr.bf16.mxu0 0
        %468 = vmatpush1.bf16.msra.mxu0 0
        %469 = vmatprep.subr.bf16.mxu0 0
        %470 = vmatpush1.bf16.msra.mxu0 0
        %471 = vmatprep.subr.bf16.mxu0 0
        %472 = vmatpush1.bf16.msra.mxu0 0
        %473 = vmatprep.subr.bf16.mxu0 0
        %474 = vmatpush1.bf16.msra.mxu0 0
        %475 = vmatprep.subr.bf16.mxu0 0
        %476 = vmatpush1.bf16.msra.mxu0 0
        %477 = vmatprep.subr.bf16.mxu0 0
        %478 = vmatpush1.bf16.msra.mxu0 0
        %479 = vmatprep.subr.bf16.mxu0 0
        %480 = vmatpush1.bf16.msra.mxu0 0
        %481 = vmatprep.subr.bf16.mxu0 0
        %482 = vmatpush1.bf16.msra.mxu0 0
        %483 = vmatprep.subr.bf16.mxu0 0
        %484 = vmatpush1.bf16.msra.mxu0 0
        %485 = vmatprep.subr.bf16.mxu0 0
        %486 = vmatpush1.bf16.msra.mxu0 0
        %487 = vmatprep.subr.bf16.mxu0 0
        %488 = vmatpush1.bf16.msra.mxu0 0
        %489 = vmatprep.mubr.bf16.mxu0 0
        %490 = vmatmul.mubr.bf16.gmra.mrb[0].mxu0 %v455
        %v491 = vpop.f32.mrb[0].mxu0
        %v492 = vadd.f32 0.0, %v491
        %v493 = vpop.f32.mrb[0].mxu0
        %v494 = vpop.f32.mrb[0].mxu0
        %v495 = vpop.f32.mrb[0].mxu0
        %496 = vdwg.mxu0
        %v497 = vld [vmem:[%s6] sm:$0xf]
        %v498 = vld [vmem:[%s6 + $0x4] sm:$0xf]
        %v499 = vld [vmem:[%s6 + $0x8] sm:$0xf]
        %v500 = vld [vmem:[%s6 + $0xc] sm:$0xf]
        %v505 = vunpack.c.l.b16 %v497
        %v506 = vunpack.c.l.b16 %v498
        %v507 = vunpack.c.l.b16 %v499
        %v508 = vunpack.c.l.b16 %v500
        %v509 = vpack.c.b16 %v506, %v505
        %v510 = vpack.c.b16 %v508, %v507
        %513 = vmatprep.subr.bf16.mxu0 0
        %514 = vmatpush1.bf16.msra.mxu0 %v509
        %515 = vmatprep.subr.bf16.mxu0 0
        %516 = vmatpush1.bf16.msra.mxu0 %v510
        %517 = vmatprep.subr.bf16.mxu0 0
        %518 = vmatpush1.bf16.msra.mxu0 0
        %519 = vmatprep.subr.bf16.mxu0 0
        %520 = vmatpush1.bf16.msra.mxu0 0
        %521 = vmatprep.subr.bf16.mxu0 0
        %522 = vmatpush1.bf16.msra.mxu0 0
        %523 = vmatprep.subr.bf16.mxu0 0
        %524 = vmatpush1.bf16.msra.mxu0 0
        %525 = vmatprep.subr.bf16.mxu0 0
        %526 = vmatpush1.bf16.msra.mxu0 0
        %527 = vmatprep.subr.bf16.mxu0 0
        %528 = vmatpush1.bf16.msra.mxu0 0
        %529 = vmatprep.subr.bf16.mxu0 0
        %530 = vmatpush1.bf16.msra.mxu0 0
        %531 = vmatprep.subr.bf16.mxu0 0
        %532 = vmatpush1.bf16.msra.mxu0 0
        %533 = vmatprep.subr.bf16.mxu0 0
        %534 = vmatpush1.bf16.msra.mxu0 0
        %535 = vmatprep.subr.bf16.mxu0 0
        %536 = vmatpush1.bf16.msra.mxu0 0
        %537 = vmatprep.subr.bf16.mxu0 0
        %538 = vmatpush1.bf16.msra.mxu0 0
        %539 = vmatprep.subr.bf16.mxu0 0
        %540 = vmatpush1.bf16.msra.mxu0 0
        %541 = vmatprep.subr.bf16.mxu0 0
        %542 = vmatpush1.bf16.msra.mxu0 0
        %543 = vmatprep.subr.bf16.mxu0 0
        %544 = vmatpush1.bf16.msra.mxu0 0
        %545 = vmatprep.mubr.bf16.mxu0 0
        %546 = vmatmul.mubr.bf16.gmra.mrb[0].mxu0 %v455
        %v547 = vpop.f32.mrb[0].mxu0
        %v548 = vadd.f32 0.0, %v547
        %v549 = vpop.f32.mrb[0].mxu0
        %v550 = vpop.f32.mrb[0].mxu0
        %v551 = vpop.f32.mrb[0].mxu0
        %552 = vdwg.mxu0
        %v553 = vld [vmem:[%s7] sm:$0xf]
        %v554 = vld [vmem:[%s7 + $0x4] sm:$0xf]
        %v555 = vld [vmem:[%s7 + $0x8] sm:$0xf]
        %v556 = vld [vmem:[%s7 + $0xc] sm:$0xf]
        %v561 = vunpack.c.l.b16 %v553
        %v562 = vunpack.c.l.b16 %v554
        %v563 = vunpack.c.l.b16 %v555
        %v564 = vunpack.c.l.b16 %v556
        %v565 = vpack.c.b16 %v562, %v561
        %v566 = vpack.c.b16 %v564, %v563
        %569 = vmatprep.subr.bf16.mxu0 0
        %570 = vmatpush1.bf16.msra.mxu0 %v565
        %571 = vmatprep.subr.bf16.mxu0 0
        %572 = vmatpush1.bf16.msra.mxu0 %v566
        %573 = vmatprep.subr.bf16.mxu0 0
        %574 = vmatpush1.bf16.msra.mxu0 0
        %575 = vmatprep.subr.bf16.mxu0 0
        %576 = vmatpush1.bf16.msra.mxu0 0
        %577 = vmatprep.subr.bf16.mxu0 0
        %578 = vmatpush1.bf16.msra.mxu0 0
        %579 = vmatprep.subr.bf16.mxu0 0
        %580 = vmatpush1.bf16.msra.mxu0 0
        %581 = vmatprep.subr.bf16.mxu0 0
        %582 = vmatpush1.bf16.msra.mxu0 0
        %583 = vmatprep.subr.bf16.mxu0 0
        %584 = vmatpush1.bf16.msra.mxu0 0
        %585 = vmatprep.subr.bf16.mxu0 0
        %586 = vmatpush1.bf16.msra.mxu0 0
        %587 = vmatprep.subr.bf16.mxu0 0
        %588 = vmatpush1.bf16.msra.mxu0 0
        %589 = vmatprep.subr.bf16.mxu0 0
        %590 = vmatpush1.bf16.msra.mxu0 0
        %591 = vmatprep.subr.bf16.mxu0 0
        %592 = vmatpush1.bf16.msra.mxu0 0
        %593 = vmatprep.subr.bf16.mxu0 0
        %594 = vmatpush1.bf16.msra.mxu0 0
        %595 = vmatprep.subr.bf16.mxu0 0
        %596 = vmatpush1.bf16.msra.mxu0 0
        %597 = vmatprep.subr.bf16.mxu0 0
        %598 = vmatpush1.bf16.msra.mxu0 0
        %599 = vmatprep.subr.bf16.mxu0 0
        %600 = vmatpush1.bf16.msra.mxu0 0
        %601 = vmatprep.mubr.bf16.mxu0 0
        %602 = vmatmul.mubr.bf16.gmra.mrb[0].mxu0 %v455
        %v603 = vpop.f32.mrb[0].mxu0
        %v604 = vadd.f32 0.0, %v603
        %v605 = vpop.f32.mrb[0].mxu0
        %v606 = vpop.f32.mrb[0].mxu0
        %v607 = vpop.f32.mrb[0].mxu0
        %608 = vdwg.mxu0
        %v609 = vmul.f32 %v548, %v417
        %611 = vrot.lane.b32.xlu0 %v418, 4
        %v612 = vpop.permute.xlu0 %611
        %v614 = vmul.f32 %v548, %v612
        %616 = vrot.lane.b32.xlu0 %v614, 124
        %v617 = vpop.permute.xlu0 %616
        %v619 = vsub.f32 %v609, %v617
        %621 = vrot.lane.b32.xlu0 %v417, 4
        %v622 = vpop.permute.xlu0 %621
        %v624 = vmul.f32 %v548, %v622
        %v625 = vmul.f32 %v548, %v418
        %627 = vrot.lane.b32.xlu0 %v625, 4
        %v628 = vpop.permute.xlu0 %627
        %v630 = vadd.f32 %v624, %v628
        %vm631 = vcmask 31744
        %v632 = vsel %vm631, %v619, %v630
        %v633 = vpack.c.bf16 %v632, %v632
        %v634 = vpack.c.bf16 %v604, %v604
        %v635 = vmul.f32 %v492, %v417
        %v636 = vmul.f32 %v492, %v612
        %638 = vrot.lane.b32.xlu0 %v636, 124
        %v639 = vpop.permute.xlu0 %638
        %v641 = vsub.f32 %v635, %v639
        %v642 = vmul.f32 %v492, %v622
        %v643 = vmul.f32 %v492, %v418
        %645 = vrot.lane.b32.xlu0 %v643, 4
        %v646 = vpop.permute.xlu0 %645
        %v648 = vadd.f32 %v642, %v646
        %v649 = vsel %vm631, %v641, %v648
        %650 = vrot.lane.b32.xlu0 %v417, 8
        %v651 = vpop.permute.xlu0 %650
        %v653 = vmul.f32 %v492, %v651
        %654 = vrot.lane.b32.xlu0 %v418, 12
        %v655 = vpop.permute.xlu0 %654
        %v657 = vmul.f32 %v492, %v655
        %659 = vrot.lane.b32.xlu0 %v657, 124
        %v660 = vpop.permute.xlu0 %659
        %v662 = vsub.f32 %v653, %v660
        %663 = vrot.lane.b32.xlu0 %v417, 12
        %v664 = vpop.permute.xlu0 %663
        %v666 = vmul.f32 %v492, %v664
        %667 = vrot.lane.b32.xlu0 %v418, 8
        %v668 = vpop.permute.xlu0 %667
        %v670 = vmul.f32 %v492, %v668
        %672 = vrot.lane.b32.xlu0 %v670, 4
        %v673 = vpop.permute.xlu0 %672
        %v675 = vadd.f32 %v666, %v673
        %677 = vrot.lane.b32.xlu0 %v662, 120
        %v678 = vpop.permute.xlu0 %677
        %681 = vrot.lane.b32.xlu0 %v675, 120
        %v682 = vpop.permute.xlu0 %681
        %v684 = vsel %vm631, %v678, %v682
        %v685 = vpack.c.bf16 %v684, %v649
        %vm686 = vcmask 64512
        %v688 = vsel %vm686, %v685, 0
        %v691 = vsel %vm686, %v633, 0
        %693 = vmatprep.subr.bf16.mxu0 0
        %694 = vmatpush1.bf16.xpose.msra.mxu0 %v691
        %695 = vmatprep.subr.bf16.mxu0 0
        %696 = vmatpush1.bf16.xpose.msra.mxu0 0
        %697 = vmatprep.subr.bf16.mxu0 0
        %698 = vmatpush1.bf16.xpose.msra.mxu0 0
        %699 = vmatprep.subr.bf16.mxu0 0
        %700 = vmatpush1.bf16.xpose.msra.mxu0 0
        %701 = vmatprep.subr.bf16.mxu0 0
        %702 = vmatpush1.bf16.xpose.msra.mxu0 0
        %703 = vmatprep.subr.bf16.mxu0 0
        %704 = vmatpush1.bf16.xpose.msra.mxu0 0
        %705 = vmatprep.subr.bf16.mxu0 0
        %706 = vmatpush1.bf16.xpose.msra.mxu0 0
        %707 = vmatprep.subr.bf16.mxu0 0
        %708 = vmatpush1.bf16.xpose.msra.mxu0 0
        %709 = vmatprep.subr.bf16.mxu0 0
        %710 = vmatpush1.bf16.xpose.msra.mxu0 0
        %711 = vmatprep.subr.bf16.mxu0 0
        %712 = vmatpush1.bf16.xpose.msra.mxu0 0
        %713 = vmatprep.subr.bf16.mxu0 0
        %714 = vmatpush1.bf16.xpose.msra.mxu0 0
        %715 = vmatprep.subr.bf16.mxu0 0
        %716 = vmatpush1.bf16.xpose.msra.mxu0 0
        %717 = vmatprep.subr.bf16.mxu0 0
        %718 = vmatpush1.bf16.xpose.msra.mxu0 0
        %719 = vmatprep.subr.bf16.mxu0 0
        %720 = vmatpush1.bf16.xpose.msra.mxu0 0
        %721 = vmatprep.subr.bf16.mxu0 0
        %722 = vmatpush1.bf16.xpose.msra.mxu0 0
        %723 = vmatprep.subr.bf16.mxu0 0
        %724 = vmatpush1.bf16.xpose.msra.mxu0 0
        %725 = vmatprep.mubr.bf16.mxu0 0
        %726 = vmatmul.mubr.bf16.gmra.mrb[0].mxu0 %v688
        %v727 = vpop.f32.mrb[0].mxu0
        %v728 = vadd.f32 %v416, %v727
        %v729 = vpop.f32.mrb[0].mxu0
        %v730 = vpop.f32.mrb[0].mxu0
        %v731 = vadd.f32 %v416, %v730
        %v732 = vpop.f32.mrb[0].mxu0
        %733 = vdwg.mxu0
        %v734 = vsel %vm686, %v728, -inf
        %735 = vmax.xlane.f32.xlu0 %v734
        %v736 = vpop.xlane.xlu0 %735
        %v737 = vsel %vm686, %v731, -inf
        %738 = vmax.xlane.f32.xlu0 %v737
        %v739 = vpop.xlane.xlu0 %738
        %v740 = vsub.f32 %v728, %v736
        %v741 = vsub.f32 %v731, %v739
        %v742 = vmul.f32 %v740, 1.442695
        %v743 = vpow.pop %v742
        %v744 = vmul.f32 %v741, 1.442695
        %v745 = vpow.pop %v744
        %v746 = vsel %vm686, %v743, 0.0
        %747 = vadd.xlane.f32.xlu0 %v746
        %v748 = vpop.xlane.xlu0 %747
        %v749 = vsel %vm686, %v745, 0.0
        %750 = vadd.xlane.f32.xlu0 %v749
        %v751 = vpop.xlane.xlu0 %750
        %v752 = vrcp.pop %v748
        %v753 = vrcp.pop %v751
        %v754 = vmul.f32 %v743, %v752
        %v755 = vmul.f32 %v745, %v753
        %v756 = vpack.c.bf16 %v755, %v754
        %v758 = vsel %vm686, %v756, 0
        %vm760 = vcmask 1043456
        %v762 = vsel %vm760, %v634, 0
        %764 = vmatprep.subr.bf16.mxu0 0
        %765 = vmatpush1.bf16.msra.mxu0 %v762
        %766 = vmatprep.subr.bf16.mxu0 0
        %767 = vmatpush1.bf16.msra.mxu0 0
        %768 = vmatprep.subr.bf16.mxu0 0
        %769 = vmatpush1.bf16.msra.mxu0 0
        %770 = vmatprep.subr.bf16.mxu0 0
        %771 = vmatpush1.bf16.msra.mxu0 0
        %772 = vmatprep.subr.bf16.mxu0 0
        %773 = vmatpush1.bf16.msra.mxu0 0
        %774 = vmatprep.subr.bf16.mxu0 0
        %775 = vmatpush1.bf16.msra.mxu0 0
        %776 = vmatprep.subr.bf16.mxu0 0
        %777 = vmatpush1.bf16.msra.mxu0 0
        %778 = vmatprep.subr.bf16.mxu0 0
        %779 = vmatpush1.bf16.msra.mxu0 0
        %780 = vmatprep.subr.bf16.mxu0 0
        %781 = vmatpush1.bf16.msra.mxu0 0
        %782 = vmatprep.subr.bf16.mxu0 0
        %783 = vmatpush1.bf16.msra.mxu0 0
        %784 = vmatprep.subr.bf16.mxu0 0
        %785 = vmatpush1.bf16.msra.mxu0 0
        %786 = vmatprep.subr.bf16.mxu0 0
        %787 = vmatpush1.bf16.msra.mxu0 0
        %788 = vmatprep.subr.bf16.mxu0 0
        %789 = vmatpush1.bf16.msra.mxu0 0
        %790 = vmatprep.subr.bf16.mxu0 0
        %791 = vmatpush1.bf16.msra.mxu0 0
        %792 = vmatprep.subr.bf16.mxu0 0
        %793 = vmatpush1.bf16.msra.mxu0 0
        %794 = vmatprep.subr.bf16.mxu0 0
        %795 = vmatpush1.bf16.msra.mxu0 0
        %796 = vmatprep.mubr.bf16.mxu0 0
        %797 = vmatmul.mubr.bf16.gmra.mrb[0].mxu0 %v758
        %v798 = vpop.f32.mrb[0].mxu0
        %v799 = vadd.f32 0.0, %v798
        %v800 = vpop.f32.mrb[0].mxu0
        %v801 = vpop.f32.mrb[0].mxu0
        %v802 = vadd.f32 0.0, %v801
        %v803 = vpop.f32.mrb[0].mxu0
        %804 = vdwg.mxu0
        %v805 = vpack.c.bf16 %v799, %v799
        %vm806 = vcmask 60416
        %807 = vst.msk [vmem:[#allocation2] sm:$0xf] %vm806, %v805
        %v808 = vpack.c.bf16 %v802, %v802
        %v810 = vunpack.c.l.b16 %v808
        %v811 = vpack.c.b16 %v810, %v810
        %812 = vrot.lane.b32.xlu0 %v811, 8
        %v813 = vpop.permute.xlu0 %812
        %vm815 = vcmask 126016
        %816 = vst.msk [vmem:[#allocation2] sm:$0xf] %vm815, %v813
        %v817 = vmul.f32 %v548, %v651
        %v818 = vmul.f32 %v548, %v655
        %820 = vrot.lane.b32.xlu0 %v818, 124
        %v821 = vpop.permute.xlu0 %820
        %v823 = vsub.f32 %v817, %v821
        %v824 = vmul.f32 %v548, %v664
        %v825 = vmul.f32 %v548, %v668
        %827 = vrot.lane.b32.xlu0 %v825, 4
        %v828 = vpop.permute.xlu0 %827
        %v830 = vadd.f32 %v824, %v828
        %832 = vrot.lane.b32.xlu0 %v823, 120
        %v833 = vpop.permute.xlu0 %832
        %836 = vrot.lane.b32.xlu0 %v830, 120
        %v837 = vpop.permute.xlu0 %836
        %v839 = vsel %vm631, %v833, %v837
        %v840 = vpack.c.bf16 %v839, %v839
        %841 = vrot.lane.b32.xlu0 %v417, 16
        %v842 = vpop.permute.xlu0 %841
        %v844 = vmul.f32 %v492, %v842
        %845 = vrot.lane.b32.xlu0 %v418, 20
        %v846 = vpop.permute.xlu0 %845
        %v848 = vmul.f32 %v492, %v846
        %850 = vrot.lane.b32.xlu0 %v848, 124
        %v851 = vpop.permute.xlu0 %850
        %v853 = vsub.f32 %v844, %v851
        %854 = vrot.lane.b32.xlu0 %v417, 20
        %v855 = vpop.permute.xlu0 %854
        %v857 = vmul.f32 %v492, %v855
        %858 = vrot.lane.b32.xlu0 %v418, 16
        %v859 = vpop.permute.xlu0 %858
        %v861 = vmul.f32 %v492, %v859
        %863 = vrot.lane.b32.xlu0 %v861, 4
        %v864 = vpop.permute.xlu0 %863
        %v866 = vadd.f32 %v857, %v864
        %868 = vrot.lane.b32.xlu0 %v853, 112
        %v869 = vpop.permute.xlu0 %868
        %872 = vrot.lane.b32.xlu0 %v866, 112
        %v873 = vpop.permute.xlu0 %872
        %v875 = vsel %vm631, %v869, %v873
        %876 = vrot.lane.b32.xlu0 %v417, 24
        %v877 = vpop.permute.xlu0 %876
        %v879 = vmul.f32 %v492, %v877
        %880 = vrot.lane.b32.xlu0 %v418, 28
        %v881 = vpop.permute.xlu0 %880
        %v883 = vmul.f32 %v492, %v881
        %885 = vrot.lane.b32.xlu0 %v883, 124
        %v886 = vpop.permute.xlu0 %885
        %v888 = vsub.f32 %v879, %v886
        %889 = vrot.lane.b32.xlu0 %v417, 28
        %v890 = vpop.permute.xlu0 %889
        %v892 = vmul.f32 %v492, %v890
        %893 = vrot.lane.b32.xlu0 %v418, 24
        %v894 = vpop.permute.xlu0 %893
        %v896 = vmul.f32 %v492, %v894
        %898 = vrot.lane.b32.xlu0 %v896, 4
        %v899 = vpop.permute.xlu0 %898
        %v901 = vadd.f32 %v892, %v899
        %903 = vrot.lane.b32.xlu0 %v888, 104
        %v904 = vpop.permute.xlu0 %903
        %907 = vrot.lane.b32.xlu0 %v901, 104
        %v908 = vpop.permute.xlu0 %907
        %v910 = vsel %vm631, %v904, %v908
        %v911 = vpack.c.bf16 %v910, %v875
        %v913 = vsel %vm686, %v911, 0
        %v916 = vsel %vm686, %v840, 0
        %918 = vmatprep.subr.bf16.mxu0 0
        %919 = vmatpush1.bf16.xpose.msra.mxu0 %v916
        %920 = vmatprep.subr.bf16.mxu0 0
        %921 = vmatpush1.bf16.xpose.msra.mxu0 0
        %922 = vmatprep.subr.bf16.mxu0 0
        %923 = vmatpush1.bf16.xpose.msra.mxu0 0
        %924 = vmatprep.subr.bf16.mxu0 0
        %925 = vmatpush1.bf16.xpose.msra.mxu0 0
        %926 = vmatprep.subr.bf16.mxu0 0
        %927 = vmatpush1.bf16.xpose.msra.mxu0 0
        %928 = vmatprep.subr.bf16.mxu0 0
        %929 = vmatpush1.bf16.xpose.msra.mxu0 0
        %930 = vmatprep.subr.bf16.mxu0 0
        %931 = vmatpush1.bf16.xpose.msra.mxu0 0
        %932 = vmatprep.subr.bf16.mxu0 0
        %933 = vmatpush1.bf16.xpose.msra.mxu0 0
        %934 = vmatprep.subr.bf16.mxu0 0
        %935 = vmatpush1.bf16.xpose.msra.mxu0 0
        %936 = vmatprep.subr.bf16.mxu0 0
        %937 = vmatpush1.bf16.xpose.msra.mxu0 0
        %938 = vmatprep.subr.bf16.mxu0 0
        %939 = vmatpush1.bf16.xpose.msra.mxu0 0
        %940 = vmatprep.subr.bf16.mxu0 0
        %941 = vmatpush1.bf16.xpose.msra.mxu0 0
        %942 = vmatprep.subr.bf16.mxu0 0
        %943 = vmatpush1.bf16.xpose.msra.mxu0 0
        %944 = vmatprep.subr.bf16.mxu0 0
        %945 = vmatpush1.bf16.xpose.msra.mxu0 0
        %946 = vmatprep.subr.bf16.mxu0 0
        %947 = vmatpush1.bf16.xpose.msra.mxu0 0
        %948 = vmatprep.subr.bf16.mxu0 0
        %949 = vmatpush1.bf16.xpose.msra.mxu0 0
        %950 = vmatprep.mubr.bf16.mxu0 0
        %951 = vmatmul.mubr.bf16.gmra.mrb[0].mxu0 %v913
        %v952 = vpop.f32.mrb[0].mxu0
        %v953 = vadd.f32 %v416, %v952
        %v954 = vpop.f32.mrb[0].mxu0
        %v955 = vpop.f32.mrb[0].mxu0
        %v956 = vadd.f32 %v416, %v955
        %v957 = vpop.f32.mrb[0].mxu0
        %958 = vdwg.mxu0
        %v959 = vsel %vm686, %v953, -inf
        %960 = vmax.xlane.f32.xlu0 %v959
        %v961 = vpop.xlane.xlu0 %960
        %v962 = vsel %vm686, %v956, -inf
        %963 = vmax.xlane.f32.xlu0 %v962
        %v964 = vpop.xlane.xlu0 %963
        %v965 = vsub.f32 %v953, %v961
        %v966 = vsub.f32 %v956, %v964
        %v967 = vmul.f32 %v965, 1.442695
        %v968 = vpow.pop %v967
        %v969 = vmul.f32 %v966, 1.442695
        %v970 = vpow.pop %v969
        %v971 = vsel %vm686, %v968, 0.0
        %972 = vadd.xlane.f32.xlu0 %v971
        %v973 = vpop.xlane.xlu0 %972
        %v974 = vsel %vm686, %v970, 0.0
        %975 = vadd.xlane.f32.xlu0 %v974
        %v976 = vpop.xlane.xlu0 %975
        %v977 = vrcp.pop %v973
        %v978 = vrcp.pop %v976
        %v979 = vmul.f32 %v968, %v977
        %v980 = vmul.f32 %v970, %v978
        %v981 = vpack.c.bf16 %v980, %v979
        %983 = vrot.lane.b32.xlu0 %v634, 120
        %v984 = vpop.permute.xlu0 %983
        %v986 = vsel %vm686, %v981, 0
        %v989 = vsel %vm760, %v984, 0
        %991 = vmatprep.subr.bf16.mxu0 0
        %992 = vmatpush1.bf16.msra.mxu0 %v989
        %993 = vmatprep.subr.bf16.mxu0 0
        %994 = vmatpush1.bf16.msra.mxu0 0
        %995 = vmatprep.subr.bf16.mxu0 0
        %996 = vmatpush1.bf16.msra.mxu0 0
        %997 = vmatprep.subr.bf16.mxu0 0
        %998 = vmatpush1.bf16.msra.mxu0 0
        %999 = vmatprep.subr.bf16.mxu0 0
        %1000 = vmatpush1.bf16.msra.mxu0 0
        %1001 = vmatprep.subr.bf16.mxu0 0
        %1002 = vmatpush1.bf16.msra.mxu0 0
        %1003 = vmatprep.subr.bf16.mxu0 0
        %1004 = vmatpush1.bf16.msra.mxu0 0
        %1005 = vmatprep.subr.bf16.mxu0 0
        %1006 = vmatpush1.bf16.msra.mxu0 0
        %1007 = vmatprep.subr.bf16.mxu0 0
        %1008 = vmatpush1.bf16.msra.mxu0 0
        %1009 = vmatprep.subr.bf16.mxu0 0
        %1010 = vmatpush1.bf16.msra.mxu0 0
        %1011 = vmatprep.subr.bf16.mxu0 0
        %1012 = vmatpush1.bf16.msra.mxu0 0
        %1013 = vmatprep.subr.bf16.mxu0 0
        %1014 = vmatpush1.bf16.msra.mxu0 0
        %1015 = vmatprep.subr.bf16.mxu0 0
        %1016 = vmatpush1.bf16.msra.mxu0 0
        %1017 = vmatprep.subr.bf16.mxu0 0
        %1018 = vmatpush1.bf16.msra.mxu0 0
        %1019 = vmatprep.subr.bf16.mxu0 0
        %1020 = vmatpush1.bf16.msra.mxu0 0
        %1021 = vmatprep.subr.bf16.mxu0 0
        %1022 = vmatpush1.bf16.msra.mxu0 0
        %1023 = vmatprep.mubr.bf16.mxu0 0
        %1024 = vmatmul.mubr.bf16.gmra.mrb[0].mxu0 %v986
        %v1025 = vpop.f32.mrb[0].mxu0
        %v1026 = vadd.f32 0.0, %v1025
        %v1027 = vpop.f32.mrb[0].mxu0
        %v1028 = vpop.f32.mrb[0].mxu0
        %v1029 = vadd.f32 0.0, %v1028
        %v1030 = vpop.f32.mrb[0].mxu0
        %1031 = vdwg.mxu0
        %v1032 = vpack.c.bf16 %v1026, %v1026
        %v1034 = vunpack.c.l.b16 %v1032
        %v1035 = vpack.c.b16 %v1034, %v1034
        %1036 = vrot.lane.b32.xlu0 %v1035, 16
        %v1037 = vpop.permute.xlu0 %1036
        %vm1039 = vcmask 191616
        %1040 = vst.msk [vmem:[#allocation2] sm:$0xf] %vm1039, %v1037
        %v1041 = vpack.c.bf16 %v1029, %v1029
        %v1043 = vunpack.c.l.b16 %v1041
        %v1044 = vpack.c.b16 %v1043, %v1043
        %1045 = vrot.lane.b32.xlu0 %v1044, 24
        %v1046 = vpop.permute.xlu0 %1045
        %vm1048 = vcmask 257216
        %1049 = vst.msk [vmem:[#allocation2] sm:$0xf] %vm1048, %v1046
        %v1050 = vld [vmem:[#allocation2] sm:$0xf]
        %v1051 = vld [vmem:[%s8] sm:$0xf]
        %v1052 = vld [vmem:[%s8 + $0x4] sm:$0xf]
        %v1053 = vld [vmem:[%s8 + $0x8] sm:$0xf]
        %v1054 = vld [vmem:[%s8 + $0xc] sm:$0xf]
        %v1059 = vunpack.c.l.b16 %v1051
        %v1060 = vunpack.c.l.b16 %v1052
        %v1061 = vunpack.c.l.b16 %v1053
        %v1062 = vunpack.c.l.b16 %v1054
        %v1063 = vpack.c.b16 %v1060, %v1059
        %v1064 = vpack.c.b16 %v1062, %v1061
        %v1068 = vsel %vm421, %v1050, 0
        %1070 = vmatprep.subr.bf16.mxu0 0
        %1071 = vmatpush1.bf16.msra.mxu0 %v1063
        %1072 = vmatprep.subr.bf16.mxu0 0
        %1073 = vmatpush1.bf16.msra.mxu0 %v1064
        %1074 = vmatprep.subr.bf16.mxu0 0
        %1075 = vmatpush1.bf16.msra.mxu0 0
        %1076 = vmatprep.subr.bf16.mxu0 0
        %1077 = vmatpush1.bf16.msra.mxu0 0
        %1078 = vmatprep.subr.bf16.mxu0 0
        %1079 = vmatpush1.bf16.msra.mxu0 0
        %1080 = vmatprep.subr.bf16.mxu0 0
        %1081 = vmatpush1.bf16.msra.mxu0 0
        %1082 = vmatprep.subr.bf16.mxu0 0
        %1083 = vmatpush1.bf16.msra.mxu0 0
        %1084 = vmatprep.subr.bf16.mxu0 0
        %1085 = vmatpush1.bf16.msra.mxu0 0
        %1086 = vmatprep.subr.bf16.mxu0 0
        %1087 = vmatpush1.bf16.msra.mxu0 0
        %1088 = vmatprep.subr.bf16.mxu0 0
        %1089 = vmatpush1.bf16.msra.mxu0 0
        %1090 = vmatprep.subr.bf16.mxu0 0
        %1091 = vmatpush1.bf16.msra.mxu0 0
        %1092 = vmatprep.subr.bf16.mxu0 0
        %1093 = vmatpush1.bf16.msra.mxu0 0
        %1094 = vmatprep.subr.bf16.mxu0 0
        %1095 = vmatpush1.bf16.msra.mxu0 0
        %1096 = vmatprep.subr.bf16.mxu0 0
        %1097 = vmatpush1.bf16.msra.mxu0 0
        %1098 = vmatprep.subr.bf16.mxu0 0
        %1099 = vmatpush1.bf16.msra.mxu0 0
        %1100 = vmatprep.subr.bf16.mxu0 0
        %1101 = vmatpush1.bf16.msra.mxu0 0
        %1102 = vmatprep.mubr.bf16.mxu0 0
        %1103 = vmatmul.mubr.bf16.gmra.mrb[0].mxu0 %v1068
        %v1104 = vpop.f32.mrb[0].mxu0
        %v1105 = vadd.f32 0.0, %v1104
        %v1106 = vpop.f32.mrb[0].mxu0
        %v1107 = vpop.f32.mrb[0].mxu0
        %v1108 = vpop.f32.mrb[0].mxu0
        %1109 = vdwg.mxu0
        %v1110 = vadd.f32 %v410, %v1105
        %v1111 = vld [vmem:[%s4] sm:$0x1]
        %v1112 = vmul.f32 %v1110, %v1110
        %v1113 = vsel %vm421, %v1112, 0.0
        %1114 = vadd.xlane.f32.xlu0 %v1113
        %v1115 = vpop.xlane.xlu0 %1114
        %v1116 = vmul.f32 %v1115, %v425
        %v1117 = vadd.f32 %v1116, 1e-05
        %v1118 = vrsqrt.pop %v1117
        %v1119 = vmul.f32 %v1110, %v1118
        %v1121 = vlaneseq
        %v1122 = vshrl.u32 %v1121, 7
        %v1123 = vsub.s32 0, %v1122
        %v1124 = vrot.slane %v1111, %v1123
        %v1126 = vmul.f32 %v1119, %v1124
        %v1127 = vpack.c.bf16 %v1126, %v1126
        %v1128 = vld [vmem:[%s9] sm:$0xf]
        %v1129 = vld [vmem:[%s9 + $0x4] sm:$0xf]
        %v1130 = vld [vmem:[%s9 + $0x8] sm:$0xf]
        %v1131 = vld [vmem:[%s9 + $0xc] sm:$0xf]
        %v1136 = vunpack.c.l.b16 %v1128
        %v1137 = vunpack.c.l.b16 %v1129
        %v1138 = vunpack.c.l.b16 %v1130
        %v1139 = vunpack.c.l.b16 %v1131
        %v1140 = vpack.c.b16 %v1137, %v1136
        %v1141 = vpack.c.b16 %v1139, %v1138
        %v1145 = vsel %vm421, %v1127, 0
        %1147 = vmatprep.subr.bf16.mxu0 0
        %1148 = vmatpush1.bf16.msra.mxu0 %v1140
        %1149 = vmatprep.subr.bf16.mxu0 0
        %1150 = vmatpush1.bf16.msra.mxu0 %v1141
        %1151 = vmatprep.subr.bf16.mxu0 0
        %1152 = vmatpush1.bf16.msra.mxu0 0
        %1153 = vmatprep.subr.bf16.mxu0 0
        %1154 = vmatpush1.bf16.msra.mxu0 0
        %1155 = vmatprep.subr.bf16.mxu0 0
        %1156 = vmatpush1.bf16.msra.mxu0 0
        %1157 = vmatprep.subr.bf16.mxu0 0
        %1158 = vmatpush1.bf16.msra.mxu0 0
        %1159 = vmatprep.subr.bf16.mxu0 0
        %1160 = vmatpush1.bf16.msra.mxu0 0
        %1161 = vmatprep.subr.bf16.mxu0 0
        %1162 = vmatpush1.bf16.msra.mxu0 0
        %1163 = vmatprep.subr.bf16.mxu0 0
        %1164 = vmatpush1.bf16.msra.mxu0 0
        %1165 = vmatprep.subr.bf16.mxu0 0
        %1166 = vmatpush1.bf16.msra.mxu0 0
        %1167 = vmatprep.subr.bf16.mxu0 0
        %1168 = vmatpush1.bf16.msra.mxu0 0
        %1169 = vmatprep.subr.bf16.mxu0 0
        %1170 = vmatpush1.bf16.msra.mxu0 0
        %1171 = vmatprep.subr.bf16.mxu0 0
        %1172 = vmatpush1.bf16.msra.mxu0 0
        %1173 = vmatprep.subr.bf16.mxu0 0
        %1174 = vmatpush1.bf16.msra.mxu0 0
        %1175 = vmatprep.subr.bf16.mxu0 0
        %1176 = vmatpush1.bf16.msra.mxu0 0
        %1177 = vmatprep.subr.bf16.mxu0 0
        %1178 = vmatpush1.bf16.msra.mxu0 0
        %1179 = vmatprep.mubr.bf16.mxu0 0
        %1180 = vmatmul.mubr.bf16.gmra.mrb[0].mxu0 %v1145
        %v1181 = vpop.f32.mrb[0].mxu0
        %v1182 = vadd.f32 0.0, %v1181
        %v1183 = vpop.f32.mrb[0].mxu0
        %v1184 = vpop.f32.mrb[0].mxu0
        %v1185 = vpop.f32.mrb[0].mxu0
        %1186 = vdwg.mxu0
        %v1187 = vxor.u32 %v1182, 2147483648
        %v1188 = vmul.f32 %v1187, 1.442695
        %v1189 = vpow.pop %v1188
        %v1190 = vadd.f32 %v1189, 1.0
        %v1191 = vrcp.pop %v1190
        %v1192 = vmul.f32 1.0, %v1191
        %v1193 = vmul.f32 %v1182, %v1192
        %v1194 = vld [vmem:[%s11] sm:$0xf]
        %v1195 = vld [vmem:[%s11 + $0x4] sm:$0xf]
        %v1196 = vld [vmem:[%s11 + $0x8] sm:$0xf]
        %v1197 = vld [vmem:[%s11 + $0xc] sm:$0xf]
        %v1202 = vunpack.c.l.b16 %v1194
        %v1203 = vunpack.c.l.b16 %v1195
        %v1204 = vunpack.c.l.b16 %v1196
        %v1205 = vunpack.c.l.b16 %v1197
        %v1206 = vpack.c.b16 %v1203, %v1202
        %v1207 = vpack.c.b16 %v1205, %v1204
        %1210 = vmatprep.subr.bf16.mxu0 0
        %1211 = vmatpush1.bf16.msra.mxu0 %v1206
        %1212 = vmatprep.subr.bf16.mxu0 0
        %1213 = vmatpush1.bf16.msra.mxu0 %v1207
        %1214 = vmatprep.subr.bf16.mxu0 0
        %1215 = vmatpush1.bf16.msra.mxu0 0
        %1216 = vmatprep.subr.bf16.mxu0 0
        %1217 = vmatpush1.bf16.msra.mxu0 0
        %1218 = vmatprep.subr.bf16.mxu0 0
        %1219 = vmatpush1.bf16.msra.mxu0 0
        %1220 = vmatprep.subr.bf16.mxu0 0
        %1221 = vmatpush1.bf16.msra.mxu0 0
        %1222 = vmatprep.subr.bf16.mxu0 0
        %1223 = vmatpush1.bf16.msra.mxu0 0
        %1224 = vmatprep.subr.bf16.mxu0 0
        %1225 = vmatpush1.bf16.msra.mxu0 0
        %1226 = vmatprep.subr.bf16.mxu0 0
        %1227 = vmatpush1.bf16.msra.mxu0 0
        %1228 = vmatprep.subr.bf16.mxu0 0
        %1229 = vmatpush1.bf16.msra.mxu0 0
        %1230 = vmatprep.subr.bf16.mxu0 0
        %1231 = vmatpush1.bf16.msra.mxu0 0
        %1232 = vmatprep.subr.bf16.mxu0 0
        %1233 = vmatpush1.bf16.msra.mxu0 0
        %1234 = vmatprep.subr.bf16.mxu0 0
        %1235 = vmatpush1.bf16.msra.mxu0 0
        %1236 = vmatprep.subr.bf16.mxu0 0
        %1237 = vmatpush1.bf16.msra.mxu0 0
        %1238 = vmatprep.subr.bf16.mxu0 0
        %1239 = vmatpush1.bf16.msra.mxu0 0
        %1240 = vmatprep.subr.bf16.mxu0 0
        %1241 = vmatpush1.bf16.msra.mxu0 0
        %1242 = vmatprep.mubr.bf16.mxu0 0
        %1243 = vmatmul.mubr.bf16.gmra.mrb[0].mxu0 %v1145
        %v1244 = vpop.f32.mrb[0].mxu0
        %v1245 = vadd.f32 0.0, %v1244
        %v1246 = vpop.f32.mrb[0].mxu0
        %v1247 = vpop.f32.mrb[0].mxu0
        %v1248 = vpop.f32.mrb[0].mxu0
        %1249 = vdwg.mxu0
        %v1250 = vmul.f32 %v1193, %v1245
        %v1251 = vpack.c.bf16 %v1250, %v1250
        %v1252 = vld [vmem:[%s10] sm:$0xf]
        %v1253 = vld [vmem:[%s10 + $0x4] sm:$0xf]
        %v1254 = vld [vmem:[%s10 + $0x8] sm:$0xf]
        %v1255 = vld [vmem:[%s10 + $0xc] sm:$0xf]
        %v1256 = vld [vmem:[%s10 + $0x10] sm:$0xf]
        %v1257 = vld [vmem:[%s10 + $0x14] sm:$0xf]
        %v1258 = vld [vmem:[%s10 + $0x18] sm:$0xf]
        %v1259 = vld [vmem:[%s10 + $0x1c] sm:$0xf]
        %v1268 = vunpack.c.l.b16 %v1252
        %v1269 = vunpack.c.l.b16 %v1253
        %v1270 = vunpack.c.l.b16 %v1254
        %v1271 = vunpack.c.l.b16 %v1255
        %v1272 = vunpack.c.l.b16 %v1256
        %v1273 = vunpack.c.l.b16 %v1257
        %v1274 = vunpack.c.l.b16 %v1258
        %v1275 = vunpack.c.l.b16 %v1259
        %v1276 = vpack.c.b16 %v1269, %v1268
        %v1277 = vpack.c.b16 %v1271, %v1270
        %v1278 = vpack.c.b16 %v1273, %v1272
        %v1279 = vpack.c.b16 %v1275, %v1274
        %vm1284 = vcmask 523264
        %v1286 = vsel %vm1284, %v1251, 0
        %1288 = vmatprep.subr.bf16.mxu0 0
        %1289 = vmatpush1.bf16.msra.mxu0 %v1276
        %1290 = vmatprep.subr.bf16.mxu0 0
        %1291 = vmatpush1.bf16.msra.mxu0 %v1277
        %1292 = vmatprep.subr.bf16.mxu0 0
        %1293 = vmatpush1.bf16.msra.mxu0 %v1278
        %1294 = vmatprep.subr.bf16.mxu0 0
        %1295 = vmatpush1.bf16.msra.mxu0 %v1279
        %1296 = vmatprep.subr.bf16.mxu0 0
        %1297 = vmatpush1.bf16.msra.mxu0 0
        %1298 = vmatprep.subr.bf16.mxu0 0
        %1299 = vmatpush1.bf16.msra.mxu0 0
        %1300 = vmatprep.subr.bf16.mxu0 0
        %1301 = vmatpush1.bf16.msra.mxu0 0
        %1302 = vmatprep.subr.bf16.mxu0 0
        %1303 = vmatpush1.bf16.msra.mxu0 0
        %1304 = vmatprep.subr.bf16.mxu0 0
        %1305 = vmatpush1.bf16.msra.mxu0 0
        %1306 = vmatprep.subr.bf16.mxu0 0
        %1307 = vmatpush1.bf16.msra.mxu0 0
        %1308 = vmatprep.subr.bf16.mxu0 0
        %1309 = vmatpush1.bf16.msra.mxu0 0
        %1310 = vmatprep.subr.bf16.mxu0 0
        %1311 = vmatpush1.bf16.msra.mxu0 0
        %1312 = vmatprep.subr.bf16.mxu0 0
        %1313 = vmatpush1.bf16.msra.mxu0 0
        %1314 = vmatprep.subr.bf16.mxu0 0
        %1315 = vmatpush1.bf16.msra.mxu0 0
        %1316 = vmatprep.subr.bf16.mxu0 0
        %1317 = vmatpush1.bf16.msra.mxu0 0
        %1318 = vmatprep.subr.bf16.mxu0 0
        %1319 = vmatpush1.bf16.msra.mxu0 0
        %1320 = vmatprep.mubr.bf16.mxu0 0
        %1321 = vmatmul.mubr.bf16.gmra.mrb[0].mxu0 %v1286
        %v1322 = vpop.f32.mrb[0].mxu0
        %v1323 = vadd.f32 0.0, %v1322
        %v1324 = vpop.f32.mrb[0].mxu0
        %v1325 = vpop.f32.mrb[0].mxu0
        %v1326 = vpop.f32.mrb[0].mxu0
        %1327 = vdwg.mxu0
        %v1328 = vadd.f32 %v1110, %v1323
        %1329 = vst.msk [vmem:[%s404] sm:$0xff] %vm421, %v1328
        %s1330 = sand.u32 %s291, 1
        %s1331 = scalar_lea.sflag [#allocation4], %s1330
        %s1332 = sand.u32 %s291, 1
        %s1333 = smul.addr %s1332, 8
        %s1334 = scalar_lea.vmem [#allocation3], %s1333
        // Predicated region
        $region69: #{tpu_custom_call.1} parent=67 // pred_check
          %p1335 = pneg %p301
        $region70: #{tpu_custom_call.1} parent=67 // pred_check_branch
          %1337 = sbr.rel (%p1335) target = $region72
        $region71: #{tpu_custom_call.1} parent=67 // pred_region
          %s1339 = ssub.s32 128, 128
          %1340 = vsyncadd %s1331, %s1339
          %s1341 = smul.addr %s26, 128
          %s1342 = scalar_lea.hbm %s12, %s1341
          %s1344 = sshll.u32 %s1334, 4
          %s1345 = int_to_ptr.vmem [resolvable:$true] %s1344
          %1347 = dma.vmem_to_hbm [thread:$0]  %s1345, 128, %s1342, %s1331
        $region72: #{tpu_custom_call.1} parent=67 // pred_fallthru
          _
      $region68: #{tpu_custom_call.1} parent=5 // pred_fallthru
        _
      %p1348 = scmp.le.s32.totalorder 2, %s21
      // Predicated region
      $region73: #{tpu_custom_call.1} parent=5 // pred_check
        %p1349 = pneg %p1348
      $region74: #{tpu_custom_call.1} parent=5 // pred_check_branch
        %1351 = sbr.rel (%p1349) target = $region76
      $region75: #{tpu_custom_call.1} parent=5 // pred_region
        %s1352 = ssub.s32 %s21, 2
        // Predicated region
        $region77: #{tpu_custom_call.1} parent=75 // pred_check
          %p1353 = pneg %p307
        $region78: #{tpu_custom_call.1} parent=75 // pred_check_branch
          %1355 = sbr.rel (%p1353) target = $region80
        $region79: #{tpu_custom_call.1} parent=75 // pred_region
          %s1356 = sand.u32 %s292, 1
          %s1357 = scalar_lea.sflag [#allocation4], %s1356
          %s1358 = sand.u32 %s292, 1
          %s1359 = smul.addr %s1358, 8
          %s1360 = scalar_lea.vmem [#allocation3], %s1359
          %1361 = dma.done %s1357, 128
        $region80: #{tpu_custom_call.1} parent=75 // pred_fallthru
          _
      $region76: #{tpu_custom_call.1} parent=5 // pred_fallthru
        _
    $region6: #{tpu_custom_call.1} parent=1 // loop_footer
      %s25 = sadd.s32 1, %s21
    $region7: #{tpu_custom_call.1} parent=1 // loop_footer_branch
      %20 = sbr.rel target = $region3
    $region8: #{tpu_custom_call.1} parent=1 // loop_exit
      _
    %1362 = vsyncpa [#allocation4], 1
    %s1363 = scalar_lea.sflag [#allocation4], 1
    %1364 = vsyncpa %s1363, 1

</llo_original>
